<compile_context>
chip_gen: v7x
topology: tpu7x:2x2x1
jax: 0.10.0
libtpu: 0.0.40
codegen_flags: <defaults>
</compile_context>

<pallas_src>
import math

import numpy as np
import jax
import jax.numpy as jnp
from jax.experimental import pallas as pl
from jax.experimental.pallas import tpu as pltpu

H_BAR = 1.054571817e-34
C_LIGHT = 299792458.0
PI = math.pi
LN_EPS = 1e-5
_INV_SQRT2 = 0.7071067811865476
_HIGHEST = jax.lax.Precision.HIGHEST


def _gelu_exact(v):
    # PyTorch nn.GELU() default (exact, erf-based)
    return 0.5 * v * (1.0 + jax.lax.erf(v * _INV_SQRT2))


def spacetime_kernel(x_ref, w1_ref, w2_ref, l1wt_ref, l2wt_ref,
                     colh_ref, rowh_ref, row2h_ref, ln1_ref, out_ref):
    Bt = x_ref.shape[0]
    L = x_ref.shape[2]

    # --- unpack packed parameters (resident, few DMAs) ------------------------
    colh = colh_ref[...]                               # (H, 3): per-H columns
    conv1_b = colh[:, 0:1]
    conv2_b = colh[:, 1:2]
    field_strength = colh[:, 2:3]
    rowh = rowh_ref[...]                               # (2, H): per-H rows (lane-oriented)
    length_scale = rowh[0:1, :]
    lin2_b = rowh[1:2, :]
    row2h = row2h_ref[...]                             # (3, 2H): per-2H rows
    lin1_b = row2h[0:1, :]
    ln2_w = row2h[1:2, :]
    ln2_b = row2h[2:3, :]
    ln1 = ln1_ref[...]                                 # (2, L): LN1 params live on the L axis
    ln1_w = ln1[0:1, :]
    ln1_b = ln1[1:2, :]

    w1 = w1_ref[...]                                   # (H, 3*Cin_pad) fused conv1 taps
    w2 = w2_ref[...]                                   # (H, 3*H)       fused conv2 taps

    # --- boundary masks: built once per step, reused by all 2*Bt shift pairs ---
    lane = jax.lax.broadcasted_iota(jnp.int32, (1, L), 1)
    keep_left = (lane != 0).astype(jnp.float32)        # kills wrapped lane 0 of a[:, l-1]
    keep_right = (lane != L - 1).astype(jnp.float32)   # kills wrapped lane L-1 of a[:, l+1]

    def tap_stack(a):
        """(C, L) -> (3C, L) rows [a[:, l-1], a[:, l], a[:, l+1]] (zero boundaries).
        Shifts run on the XLU (pltpu.roll); slabs land at sublane-aligned offsets."""
        left = pltpu.roll(a, 1, 1) * keep_left
        right = pltpu.roll(a, L - 1, 1) * keep_right
        return jnp.concatenate([left, a, right], axis=0)

    # --- flux operator + field interaction, unrolled over the Bt sub-batch -----
    for b in range(Bt):
        x = x_ref[b]                                                       # (Cin_pad, L)
        # Conv1d(Cin->H, k=3, pad=1): one MXU matmul, K = 3*Cin_pad.
        h1 = jnp.dot(w1, tap_stack(x), preferred_element_type=jnp.float32,
                     precision=_HIGHEST) + conv1_b
        # nn.LayerNorm([hidden]) on (B, H, L): normalize over L (lanes), affine along L.
        mu = jnp.mean(h1, axis=1, keepdims=True)
        var = jnp.mean((h1 - mu) ** 2, axis=1, keepdims=True)
        h1g = _gelu_exact((h1 - mu) * jax.lax.rsqrt(var + LN_EPS) * ln1_w + ln1_b)
        # Conv1d(H->H, k=3, pad=1): three taps fused into one deep-K (K=3H) matmul.
        flux = jnp.dot(w2, tap_stack(h1g), preferred_element_type=jnp.float32,
                       precision=_HIGHEST) + conv2_b
        # Stash field_interaction directly in the output block (VMEM).
        out_ref[b] = (flux * field_strength).astype(out_ref.dtype)

    # --- curvature network on length-pooled features: lane-dense (Bt, .) dots ---
    pooled = jnp.mean(out_ref[...], axis=2)                                # (Bt, H)
    z = jnp.dot(pooled, l1wt_ref[...], preferred_element_type=jnp.float32,
                precision=_HIGHEST) + lin1_b                               # (Bt, 2H)
    mu2 = jnp.mean(z, axis=1, keepdims=True)
    var2 = jnp.mean((z - mu2) ** 2, axis=1, keepdims=True)
    zg = _gelu_exact((z - mu2) * jax.lax.rsqrt(var2 + LN_EPS) * ln2_w + ln2_b)
    curv = jnp.dot(zg, l2wt_ref[...], preferred_element_type=jnp.float32,
                   precision=_HIGHEST) + lin2_b                            # (Bt, H)

    # --- quantum correction + unified field -------------------------------------
    qc = (curv * H_BAR) * (C_LIGHT * length_scale)                         # (Bt, H)
    out_ref[...] = out_ref[...] + qc[:, :, None]


def _vmem_budget_bytes():
    """~75% of physical VMEM: 48 MiB on v7x (64 MiB parts), 96 MiB on v5e/v6e (128 MiB)."""
    phys = 64 * 1024 * 1024                       # v7x-safe fallback
    try:
        info = pltpu.get_tpu_info()
        phys = int(getattr(info, "vmem_capacity_bytes", 0)) or phys
    except Exception:
        pass
    return (phys * 3) // 4


def _pick_batch_tile(B, Cinp, H, L, budget):
    """Batches per grid step: big enough that the output DMA is >= ~512 KiB (true for
    16 batches at H=L>=128), small enough that double-buffered blocks + resident
    weights + per-batch temporaries fit the generation's VMEM budget; capped at 16
    to bound the unrolled body length."""
    out_blk = H * L * 4
    in_blk = Cinp * L * 4
    weights = 4 * (3 * H * Cinp + 3 * H * H + 2 * H * H + 2 * H * H + 11 * H + 2 * L)
    fixed = 2 * weights + 2 * 1024 * 1024         # double-buffered residents + slack
    temps = 6 * out_blk                           # peak per-batch intermediates ((3H,L) stack etc.)
    per_batch = 2 * (out_blk + in_blk)            # double-buffered in/out blocks
    fit = max(1, (budget - fixed - temps) // per_batch)
    return int(max(1, min(B, 16, fit)))


def init_params(key, input_dim, hidden_dim):
    """Deterministic parameter init mirroring the nn.Module's shapes."""
    ks = jax.random.split(key, 8)

    def u(k, shape, fan_in):
        bound = 1.0 / math.sqrt(fan_in)
        return jax.random.uniform(k, shape, jnp.float32, -bound, bound)

    return {
        "conv1_w": u(ks[0], (hidden_dim, input_dim, 3), input_dim * 3),
        "conv1_b": u(ks[1], (hidden_dim,), input_dim * 3),
        "ln1_w": jnp.ones((hidden_dim,), jnp.float32),
        "ln1_b": jnp.zeros((hidden_dim,), jnp.float32),
        "conv2_w": u(ks[2], (hidden_dim, hidden_dim, 3), hidden_dim * 3),
        "conv2_b": u(ks[3], (hidden_dim,), hidden_dim * 3),
        "field_strength": jnp.full((hidden_dim,), PI, jnp.float32),
        "length_scale": jnp.ones((hidden_dim,), jnp.float32),
        "lin1_w": u(ks[4], (hidden_dim * 2, hidden_dim), hidden_dim),
        "lin1_b": u(ks[5], (hidden_dim * 2,), hidden_dim),
        "ln2_w": jnp.ones((hidden_dim * 2,), jnp.float32),
        "ln2_b": jnp.zeros((hidden_dim * 2,), jnp.float32),
        "lin2_w": u(ks[6], (hidden_dim, hidden_dim * 2), hidden_dim * 2),
        "lin2_b": u(ks[7], (hidden_dim,), hidden_dim * 2),
    }


@jax.jit
def spacetime_curvature_forward(x, params):
    """x: (B, input_dim, L) NCW (PyTorch layout); returns {'unified_field': (B, hidden, L)}."""
    B, Cin, L = x.shape
    H = params["conv1_b"].shape[0]
    # LayerNorm([hidden_dim]) on a (B, H, L) tensor requires L == hidden_dim; this also
    # forbids L tiling / lane padding.  For production perf H (== L) should be a
    # multiple of 128 so output stores are unmasked full-lane writes.
    assert L == H, "module semantics require sequence length == hidden_dim"

    f32 = lambda v: v.astype(jnp.float32)
    Cinp = -(-Cin // 8) * 8                                  # pad channels to the sublane tile
    budget = _vmem_budget_bytes()
    bt = _pick_batch_tile(B, Cinp, H, L, budget)
    Bp = -(-B // bt) * bt                                    # pad batch to a multiple of bt

    # ---- pack / pre-layout parameters (tiny tensors, once per call) ----------
    cw1 = jnp.pad(f32(params["conv1_w"]), ((0, 0), (0, Cinp - Cin), (0, 0)))   # (H, Cinp, 3)
    w1 = jnp.concatenate([cw1[:, :, 0], cw1[:, :, 1], cw1[:, :, 2]], axis=1)   # (H, 3*Cinp)
    cw2 = f32(params["conv2_w"])
    w2 = jnp.concatenate([cw2[:, :, 0], cw2[:, :, 1], cw2[:, :, 2]], axis=1)   # (H, 3*H)
    l1wt = f32(params["lin1_w"]).T                                             # (H, 2H)
    l2wt = f32(params["lin2_w"]).T                                             # (2H, H)
    colh = jnp.stack([params["conv1_b"], params["conv2_b"],
                      params["field_strength"]], axis=1).astype(jnp.float32)   # (H, 3)
    rowh = jnp.stack([params["length_scale"],
                      params["lin2_b"]], axis=0).astype(jnp.float32)           # (2, H)
    row2h = jnp.stack([params["lin1_b"], params["ln2_w"],
                       params["ln2_b"]], axis=0).astype(jnp.float32)           # (3, 2H)
    ln1 = jnp.stack([params["ln1_w"], params["ln1_b"]], axis=0).astype(jnp.float32)  # (2, L)

    xp = jnp.pad(f32(x), ((0, Bp - B), (0, Cinp - Cin), (0, 0)))               # (Bp, Cinp, L)

    def const_spec(a):
        n = a.ndim
        return pl.BlockSpec(a.shape, lambda i: (0,) * n)     # resident, index never changes

    out = pl.pallas_call(
        spacetime_kernel,
        out_shape=jax.ShapeDtypeStruct((Bp, H, L), jnp.float32),
        grid=(Bp // bt,),
        in_specs=[
            pl.BlockSpec((bt, Cinp, L), lambda i: (i, 0, 0)),   # x: bt batches per step
            const_spec(w1), const_spec(w2), const_spec(l1wt), const_spec(l2wt),
            const_spec(colh), const_spec(rowh), const_spec(row2h), const_spec(ln1),
        ],
        out_specs=pl.BlockSpec((bt, H, L), lambda i: (i, 0, 0)),
        compiler_params=pltpu.CompilerParams(
            dimension_semantics=("parallel",),                  # batch is embarrassingly parallel
            vmem_limit_bytes=int(budget),                       # 48 MiB v7x / 96 MiB v5e-v6e
        ),
    )(xp, w1, w2, l1wt, l2wt, colh, rowh, row2h, ln1)

    return {"unified_field": out[:B]}                           # drop batch padding; NCW, no transpose


def _reference_forward(x, p):
    """Pure-JAX reference reproducing the PyTorch module (for validation)."""
    B, Cin, L = x.shape

    def conv1d(inp, w, b):  # inp (B, C, L), w (O, C, 3), pad=1
        xp = jnp.pad(inp, ((0, 0), (0, 0), (1, 1)))
        out = sum(jnp.einsum("oc,bcl->bol", w[:, :, k], xp[:, :, k:k + L],
                             precision=_HIGHEST) for k in range(3))
        return out + b[None, :, None]

    def ln(v, w, b):  # normalize over last axis
        mu = v.mean(-1, keepdims=True)
        var = ((v - mu) ** 2).mean(-1, keepdims=True)
        return (v - mu) / jnp.sqrt(var + LN_EPS) * w + b

    gelu = lambda v: 0.5 * v * (1.0 + jax.lax.erf(v * _INV_SQRT2))

    h1 = conv1d(x, p["conv1_w"], p["conv1_b"])            # (B, H, L)
    h1 = gelu(ln(h1, p["ln1_w"], p["ln1_b"]))             # LN over last dim (L == H)
    flux = conv1d(h1, p["conv2_w"], p["conv2_b"])
    fi = flux * p["field_strength"][None, :, None]
    pooled = fi.mean(-1)                                  # (B, H)
    z = jnp.dot(pooled, p["lin1_w"].T, precision=_HIGHEST) + p["lin1_b"]
    z = gelu(ln(z, p["ln2_w"], p["ln2_b"]))
    curv = jnp.dot(z, p["lin2_w"].T, precision=_HIGHEST) + p["lin2_b"]   # (B, H)
    qc = curv[:, :, None] * H_BAR * (C_LIGHT * p["length_scale"])[None, :, None]
    return qc + fi


if __name__ == "__main__":
    B, INPUT_DIM, HIDDEN_DIM = 2, 4, 32
    L = HIDDEN_DIM  # required by LayerNorm([hidden_dim]) applied over the length axis

    key = jax.random.PRNGKey(0)
    kx, kp = jax.random.split(key)
    x = jax.random.normal(kx, (B, INPUT_DIM, L), jnp.float32)
    params = init_params(kp, INPUT_DIM, HIDDEN_DIM)

    out = spacetime_curvature_forward(x, params)
    unified = jax.block_until_ready(out["unified_field"])

    ref = _reference_forward(x, params)
    np.testing.assert_allclose(np.asarray(unified), np.asarray(ref), rtol=1e-5, atol=1e-5)

    print("KERNEL_OK")
</pallas_src>

<mosaic_0001>
module attributes {stable_mosaic.version = 11 : i64} {
  func.func @spacetime_kernel(%arg0: i32, %arg1: memref<2x8x32xf32, #tpu.memory_space<vmem>>, %arg2: memref<32x24xf32, #tpu.memory_space<vmem>>, %arg3: memref<32x96xf32, #tpu.memory_space<vmem>>, %arg4: memref<32x64xf32, #tpu.memory_space<vmem>>, %arg5: memref<64x32xf32, #tpu.memory_space<vmem>>, %arg6: memref<32x3xf32, #tpu.memory_space<vmem>>, %arg7: memref<2x32xf32, #tpu.memory_space<vmem>>, %arg8: memref<3x64xf32, #tpu.memory_space<vmem>>, %arg9: memref<2x32xf32, #tpu.memory_space<vmem>>, %arg10: memref<2x32x32xf32, #tpu.memory_space<vmem>>) attributes {dimension_semantics = [#tpu.dimension_semantics<parallel>], iteration_bounds = array<i64: 1>, scalar_prefetch = 0 : i64, scratch_operands = 0 : i64, tpu.core_type = #tpu.core_type<tc>, window_params = [{transform_indices = @transform_0, window_bounds = array<i64: 2, 8, 32>}, {pipeline_mode = #tpu.pipeline_mode<synchronous>, transform_indices = @transform_1, window_bounds = array<i64: 32, 24>}, {pipeline_mode = #tpu.pipeline_mode<synchronous>, transform_indices = @transform_2, window_bounds = array<i64: 32, 96>}, {pipeline_mode = #tpu.pipeline_mode<synchronous>, transform_indices = @transform_3, window_bounds = array<i64: 32, 64>}, {pipeline_mode = #tpu.pipeline_mode<synchronous>, transform_indices = @transform_4, window_bounds = array<i64: 64, 32>}, {pipeline_mode = #tpu.pipeline_mode<synchronous>, transform_indices = @transform_5, window_bounds = array<i64: 32, 3>}, {pipeline_mode = #tpu.pipeline_mode<synchronous>, transform_indices = @transform_6, window_bounds = array<i64: 2, 32>}, {pipeline_mode = #tpu.pipeline_mode<synchronous>, transform_indices = @transform_7, window_bounds = array<i64: 3, 64>}, {pipeline_mode = #tpu.pipeline_mode<synchronous>, transform_indices = @transform_8, window_bounds = array<i64: 2, 32>}, {transform_indices = @transform_9, window_bounds = array<i64: 2, 32, 32>}]} {
    %c0 = arith.constant 0 : index
    %c0_0 = arith.constant 0 : index
    %0 = vector.load %arg6[%c0, %c0_0] : memref<32x3xf32, #tpu.memory_space<vmem>>, vector<32x3xf32>
    %1 = vector.extract_strided_slice %0 {offsets = [0, 0], sizes = [32, 1], strides = [1, 1]} : vector<32x3xf32> to vector<32x1xf32>
    %2 = vector.extract_strided_slice %0 {offsets = [0, 1], sizes = [32, 1], strides = [1, 1]} : vector<32x3xf32> to vector<32x1xf32>
    %3 = vector.extract_strided_slice %0 {offsets = [0, 2], sizes = [32, 1], strides = [1, 1]} : vector<32x3xf32> to vector<32x1xf32>
    %c0_1 = arith.constant 0 : index
    %c0_2 = arith.constant 0 : index
    %4 = vector.load %arg7[%c0_1, %c0_2] : memref<2x32xf32, #tpu.memory_space<vmem>>, vector<2x32xf32>
    %5 = vector.extract_strided_slice %4 {offsets = [0, 0], sizes = [1, 32], strides = [1, 1]} : vector<2x32xf32> to vector<1x32xf32>
    %6 = vector.extract_strided_slice %4 {offsets = [1, 0], sizes = [1, 32], strides = [1, 1]} : vector<2x32xf32> to vector<1x32xf32>
    %c0_3 = arith.constant 0 : index
    %c0_4 = arith.constant 0 : index
    %7 = vector.load %arg8[%c0_3, %c0_4] : memref<3x64xf32, #tpu.memory_space<vmem>>, vector<3x64xf32>
    %8 = vector.extract_strided_slice %7 {offsets = [0, 0], sizes = [1, 64], strides = [1, 1]} : vector<3x64xf32> to vector<1x64xf32>
    %9 = vector.extract_strided_slice %7 {offsets = [1, 0], sizes = [1, 64], strides = [1, 1]} : vector<3x64xf32> to vector<1x64xf32>
    %10 = vector.extract_strided_slice %7 {offsets = [2, 0], sizes = [1, 64], strides = [1, 1]} : vector<3x64xf32> to vector<1x64xf32>
    %c0_5 = arith.constant 0 : index
    %c0_6 = arith.constant 0 : index
    %11 = vector.load %arg9[%c0_5, %c0_6] : memref<2x32xf32, #tpu.memory_space<vmem>>, vector<2x32xf32>
    %12 = vector.extract_strided_slice %11 {offsets = [0, 0], sizes = [1, 32], strides = [1, 1]} : vector<2x32xf32> to vector<1x32xf32>
    %13 = vector.extract_strided_slice %11 {offsets = [1, 0], sizes = [1, 32], strides = [1, 1]} : vector<2x32xf32> to vector<1x32xf32>
    %c0_7 = arith.constant 0 : index
    %c0_8 = arith.constant 0 : index
    %14 = vector.load %arg2[%c0_7, %c0_8] : memref<32x24xf32, #tpu.memory_space<vmem>>, vector<32x24xf32>
    %c0_9 = arith.constant 0 : index
    %c0_10 = arith.constant 0 : index
    %15 = vector.load %arg3[%c0_9, %c0_10] : memref<32x96xf32, #tpu.memory_space<vmem>>, vector<32x96xf32>
    %16 = tpu.iota {dimensions = array<i32: 1>} : vector<1x32xi32>
    %c0_i32 = arith.constant 0 : i32
    %17 = vector.broadcast %c0_i32 : i32 to vector<1x32xi32>
    %18 = arith.cmpi ne, %16, %17 : vector<1x32xi32>
    %19 = arith.extui %18 : vector<1x32xi1> to vector<1x32xi32>
    %20 = arith.sitofp %19 : vector<1x32xi32> to vector<1x32xf32>
    %c31_i32 = arith.constant 31 : i32
    %21 = vector.broadcast %c31_i32 : i32 to vector<1x32xi32>
    %22 = arith.cmpi ne, %16, %21 : vector<1x32xi32>
    %23 = arith.extui %22 : vector<1x32xi1> to vector<1x32xi32>
    %24 = arith.sitofp %23 : vector<1x32xi32> to vector<1x32xf32>
    %c0_11 = arith.constant 0 : index
    %c0_12 = arith.constant 0 : index
    %c0_13 = arith.constant 0 : index
    %25 = vector.load %arg1[%c0_11, %c0_12, %c0_13] : memref<2x8x32xf32, #tpu.memory_space<vmem>>, vector<1x8x32xf32>
    %26 = vector.shape_cast %25 : vector<1x8x32xf32> to vector<8x32xf32>
    %c1_i32 = arith.constant 1 : i32
    %27 = tpu.dynamic_rotate %26 by %c1_i32 dim 1 : vector<8x32xf32>, i32 -> vector<8x32xf32>
    %28 = vector.broadcast %20 : vector<1x32xf32> to vector<8x32xf32>
    %29 = arith.mulf %27, %28 : vector<8x32xf32>
    %c31_i32_14 = arith.constant 31 : i32
    %30 = tpu.dynamic_rotate %26 by %c31_i32_14 dim 1 : vector<8x32xf32>, i32 -> vector<8x32xf32>
    %31 = vector.broadcast %24 : vector<1x32xf32> to vector<8x32xf32>
    %32 = arith.mulf %30, %31 : vector<8x32xf32>
    %33 = tpu.concatenate %29, %26, %32 in 0 : vector<8x32xf32>, vector<8x32xf32>, vector<8x32xf32> -> vector<24x32xf32>
    %cst = arith.constant dense<0.000000e+00> : vector<32x32xf32>
    %34 = tpu.matmul %14, %33, %cst {dimension_numbers = #tpu.dot_dimension_numbers<[1], [0], [0], [1], [0, 0, 1, 1], [], []>, precision = #tpu.contract_precision<fp32>} : vector<32x24xf32>, vector<24x32xf32>, vector<32x32xf32> -> vector<32x32xf32>
    %35 = vector.broadcast %1 : vector<32x1xf32> to vector<32x32xf32>
    %36 = arith.addf %34, %35 : vector<32x32xf32>
    %cst_15 = arith.constant dense<0.000000e+00> : vector<32xf32>
    %37 = vector.multi_reduction <add>, %36, %cst_15 [1] : vector<32x32xf32> to vector<32xf32>
    %38 = vector.shape_cast %37 : vector<32xf32> to vector<32x1xf32>
    %cst_16 = arith.constant 3.200000e+01 : f32
    %39 = vector.broadcast %cst_16 : f32 to vector<32x1xf32>
    %40 = arith.divf %38, %39 : vector<32x1xf32>
    %41 = vector.broadcast %40 : vector<32x1xf32> to vector<32x32xf32>
    %42 = arith.subf %36, %41 : vector<32x32xf32>
    %43 = arith.mulf %42, %42 : vector<32x32xf32>
    %cst_17 = arith.constant dense<0.000000e+00> : vector<32xf32>
    %44 = vector.multi_reduction <add>, %43, %cst_17 [1] : vector<32x32xf32> to vector<32xf32>
    %45 = vector.shape_cast %44 : vector<32xf32> to vector<32x1xf32>
    %cst_18 = arith.constant 3.200000e+01 : f32
    %46 = vector.broadcast %cst_18 : f32 to vector<32x1xf32>
    %47 = arith.divf %45, %46 : vector<32x1xf32>
    %48 = vector.broadcast %40 : vector<32x1xf32> to vector<32x32xf32>
    %49 = arith.subf %36, %48 : vector<32x32xf32>
    %cst_19 = arith.constant 9.99999974E-6 : f32
    %50 = vector.broadcast %cst_19 : f32 to vector<32x1xf32>
    %51 = arith.addf %47, %50 : vector<32x1xf32>
    %52 = math.rsqrt %51 : vector<32x1xf32>
    %53 = vector.broadcast %52 : vector<32x1xf32> to vector<32x32xf32>
    %54 = arith.mulf %49, %53 : vector<32x32xf32>
    %55 = vector.broadcast %12 : vector<1x32xf32> to vector<32x32xf32>
    %56 = arith.mulf %54, %55 : vector<32x32xf32>
    %57 = vector.broadcast %13 : vector<1x32xf32> to vector<32x32xf32>
    %58 = arith.addf %56, %57 : vector<32x32xf32>
    %cst_20 = arith.constant 5.000000e-01 : f32
    %59 = vector.broadcast %cst_20 : f32 to vector<32x32xf32>
    %60 = arith.mulf %59, %58 : vector<32x32xf32>
    %cst_21 = arith.constant 0.707106769 : f32
    %61 = vector.broadcast %cst_21 : f32 to vector<32x32xf32>
    %62 = arith.mulf %58, %61 : vector<32x32xf32>
    %63 = math.erf %62 : vector<32x32xf32>
    %cst_22 = arith.constant 1.000000e+00 : f32
    %64 = vector.broadcast %cst_22 : f32 to vector<32x32xf32>
    %65 = arith.addf %64, %63 : vector<32x32xf32>
    %66 = arith.mulf %60, %65 : vector<32x32xf32>
    %c1_i32_23 = arith.constant 1 : i32
    %67 = tpu.dynamic_rotate %66 by %c1_i32_23 dim 1 : vector<32x32xf32>, i32 -> vector<32x32xf32>
    %68 = vector.broadcast %20 : vector<1x32xf32> to vector<32x32xf32>
    %69 = arith.mulf %67, %68 : vector<32x32xf32>
    %c31_i32_24 = arith.constant 31 : i32
    %70 = tpu.dynamic_rotate %66 by %c31_i32_24 dim 1 : vector<32x32xf32>, i32 -> vector<32x32xf32>
    %71 = vector.broadcast %24 : vector<1x32xf32> to vector<32x32xf32>
    %72 = arith.mulf %70, %71 : vector<32x32xf32>
    %73 = tpu.concatenate %69, %66, %72 in 0 : vector<32x32xf32>, vector<32x32xf32>, vector<32x32xf32> -> vector<96x32xf32>
    %cst_25 = arith.constant dense<0.000000e+00> : vector<32x32xf32>
    %74 = tpu.matmul %15, %73, %cst_25 {dimension_numbers = #tpu.dot_dimension_numbers<[1], [0], [0], [1], [0, 0, 1, 1], [], []>, precision = #tpu.contract_precision<fp32>} : vector<32x96xf32>, vector<96x32xf32>, vector<32x32xf32> -> vector<32x32xf32>
    %75 = vector.broadcast %2 : vector<32x1xf32> to vector<32x32xf32>
    %76 = arith.addf %74, %75 : vector<32x32xf32>
    %77 = vector.broadcast %3 : vector<32x1xf32> to vector<32x32xf32>
    %78 = arith.mulf %76, %77 : vector<32x32xf32>
    %c0_26 = arith.constant 0 : index
    %c0_27 = arith.constant 0 : index
    %c0_28 = arith.constant 0 : index
    %79 = vector.load %arg10[%c0_26, %c0_27, %c0_28] : memref<2x32x32xf32, #tpu.memory_space<vmem>>, vector<1x32x32xf32>
    %80 = vector.shape_cast %79 : vector<1x32x32xf32> to vector<32x32xf32>
    %81 = vector.shape_cast %78 : vector<32x32xf32> to vector<1x32x32xf32>
    tpu.vector_store %arg10[%c0_26, %c0_27, %c0_28], %81 {strides = array<i32>} : memref<2x32x32xf32, #tpu.memory_space<vmem>>, vector<1x32x32xf32>,
    %c1 = arith.constant 1 : index
    %c0_29 = arith.constant 0 : index
    %c0_30 = arith.constant 0 : index
    %82 = vector.load %arg1[%c1, %c0_29, %c0_30] : memref<2x8x32xf32, #tpu.memory_space<vmem>>, vector<1x8x32xf32>
    %83 = vector.shape_cast %82 : vector<1x8x32xf32> to vector<8x32xf32>
    %c1_i32_31 = arith.constant 1 : i32
    %84 = tpu.dynamic_rotate %83 by %c1_i32_31 dim 1 : vector<8x32xf32>, i32 -> vector<8x32xf32>
    %85 = vector.broadcast %20 : vector<1x32xf32> to vector<8x32xf32>
    %86 = arith.mulf %84, %85 : vector<8x32xf32>
    %c31_i32_32 = arith.constant 31 : i32
    %87 = tpu.dynamic_rotate %83 by %c31_i32_32 dim 1 : vector<8x32xf32>, i32 -> vector<8x32xf32>
    %88 = vector.broadcast %24 : vector<1x32xf32> to vector<8x32xf32>
    %89 = arith.mulf %87, %88 : vector<8x32xf32>
    %90 = tpu.concatenate %86, %83, %89 in 0 : vector<8x32xf32>, vector<8x32xf32>, vector<8x32xf32> -> vector<24x32xf32>
    %cst_33 = arith.constant dense<0.000000e+00> : vector<32x32xf32>
    %91 = tpu.matmul %14, %90, %cst_33 {dimension_numbers = #tpu.dot_dimension_numbers<[1], [0], [0], [1], [0, 0, 1, 1], [], []>, precision = #tpu.contract_precision<fp32>} : vector<32x24xf32>, vector<24x32xf32>, vector<32x32xf32> -> vector<32x32xf32>
    %92 = vector.broadcast %1 : vector<32x1xf32> to vector<32x32xf32>
    %93 = arith.addf %91, %92 : vector<32x32xf32>
    %cst_34 = arith.constant dense<0.000000e+00> : vector<32xf32>
    %94 = vector.multi_reduction <add>, %93, %cst_34 [1] : vector<32x32xf32> to vector<32xf32>
    %95 = vector.shape_cast %94 : vector<32xf32> to vector<32x1xf32>
    %cst_35 = arith.constant 3.200000e+01 : f32
    %96 = vector.broadcast %cst_35 : f32 to vector<32x1xf32>
    %97 = arith.divf %95, %96 : vector<32x1xf32>
    %98 = vector.broadcast %97 : vector<32x1xf32> to vector<32x32xf32>
    %99 = arith.subf %93, %98 : vector<32x32xf32>
    %100 = arith.mulf %99, %99 : vector<32x32xf32>
    %cst_36 = arith.constant dense<0.000000e+00> : vector<32xf32>
    %101 = vector.multi_reduction <add>, %100, %cst_36 [1] : vector<32x32xf32> to vector<32xf32>
    %102 = vector.shape_cast %101 : vector<32xf32> to vector<32x1xf32>
    %cst_37 = arith.constant 3.200000e+01 : f32
    %103 = vector.broadcast %cst_37 : f32 to vector<32x1xf32>
    %104 = arith.divf %102, %103 : vector<32x1xf32>
    %105 = vector.broadcast %97 : vector<32x1xf32> to vector<32x32xf32>
    %106 = arith.subf %93, %105 : vector<32x32xf32>
    %cst_38 = arith.constant 9.99999974E-6 : f32
    %107 = vector.broadcast %cst_38 : f32 to vector<32x1xf32>
    %108 = arith.addf %104, %107 : vector<32x1xf32>
    %109 = math.rsqrt %108 : vector<32x1xf32>
    %110 = vector.broadcast %109 : vector<32x1xf32> to vector<32x32xf32>
    %111 = arith.mulf %106, %110 : vector<32x32xf32>
    %112 = vector.broadcast %12 : vector<1x32xf32> to vector<32x32xf32>
    %113 = arith.mulf %111, %112 : vector<32x32xf32>
    %114 = vector.broadcast %13 : vector<1x32xf32> to vector<32x32xf32>
    %115 = arith.addf %113, %114 : vector<32x32xf32>
    %cst_39 = arith.constant 5.000000e-01 : f32
    %116 = vector.broadcast %cst_39 : f32 to vector<32x32xf32>
    %117 = arith.mulf %116, %115 : vector<32x32xf32>
    %cst_40 = arith.constant 0.707106769 : f32
    %118 = vector.broadcast %cst_40 : f32 to vector<32x32xf32>
    %119 = arith.mulf %115, %118 : vector<32x32xf32>
    %120 = math.erf %119 : vector<32x32xf32>
    %cst_41 = arith.constant 1.000000e+00 : f32
    %121 = vector.broadcast %cst_41 : f32 to vector<32x32xf32>
    %122 = arith.addf %121, %120 : vector<32x32xf32>
    %123 = arith.mulf %117, %122 : vector<32x32xf32>
    %c1_i32_42 = arith.constant 1 : i32
    %124 = tpu.dynamic_rotate %123 by %c1_i32_42 dim 1 : vector<32x32xf32>, i32 -> vector<32x32xf32>
    %125 = vector.broadcast %20 : vector<1x32xf32> to vector<32x32xf32>
    %126 = arith.mulf %124, %125 : vector<32x32xf32>
    %c31_i32_43 = arith.constant 31 : i32
    %127 = tpu.dynamic_rotate %123 by %c31_i32_43 dim 1 : vector<32x32xf32>, i32 -> vector<32x32xf32>
    %128 = vector.broadcast %24 : vector<1x32xf32> to vector<32x32xf32>
    %129 = arith.mulf %127, %128 : vector<32x32xf32>
    %130 = tpu.concatenate %126, %123, %129 in 0 : vector<32x32xf32>, vector<32x32xf32>, vector<32x32xf32> -> vector<96x32xf32>
    %cst_44 = arith.constant dense<0.000000e+00> : vector<32x32xf32>
    %131 = tpu.matmul %15, %130, %cst_44 {dimension_numbers = #tpu.dot_dimension_numbers<[1], [0], [0], [1], [0, 0, 1, 1], [], []>, precision = #tpu.contract_precision<fp32>} : vector<32x96xf32>, vector<96x32xf32>, vector<32x32xf32> -> vector<32x32xf32>
    %132 = vector.broadcast %2 : vector<32x1xf32> to vector<32x32xf32>
    %133 = arith.addf %131, %132 : vector<32x32xf32>
    %134 = vector.broadcast %3 : vector<32x1xf32> to vector<32x32xf32>
    %135 = arith.mulf %133, %134 : vector<32x32xf32>
    %c1_45 = arith.constant 1 : index
    %c0_46 = arith.constant 0 : index
    %c0_47 = arith.constant 0 : index
    %136 = vector.load %arg10[%c1_45, %c0_46, %c0_47] : memref<2x32x32xf32, #tpu.memory_space<vmem>>, vector<1x32x32xf32>
    %137 = vector.shape_cast %136 : vector<1x32x32xf32> to vector<32x32xf32>
    %138 = vector.shape_cast %135 : vector<32x32xf32> to vector<1x32x32xf32>
    tpu.vector_store %arg10[%c1_45, %c0_46, %c0_47], %138 {strides = array<i32>} : memref<2x32x32xf32, #tpu.memory_space<vmem>>, vector<1x32x32xf32>,
    %c0_48 = arith.constant 0 : index
    %c0_49 = arith.constant 0 : index
    %c0_50 = arith.constant 0 : index
    %139 = vector.load %arg10[%c0_48, %c0_49, %c0_50] : memref<2x32x32xf32, #tpu.memory_space<vmem>>, vector<2x32x32xf32>
    %cst_51 = arith.constant dense<0.000000e+00> : vector<2x32xf32>
    %140 = vector.multi_reduction <add>, %139, %cst_51 [2] : vector<2x32x32xf32> to vector<2x32xf32>
    %cst_52 = arith.constant 3.200000e+01 : f32
    %141 = vector.broadcast %cst_52 : f32 to vector<2x32xf32>
    %142 = arith.divf %140, %141 : vector<2x32xf32>
    %c0_53 = arith.constant 0 : index
    %c0_54 = arith.constant 0 : index
    %143 = vector.load %arg4[%c0_53, %c0_54] : memref<32x64xf32, #tpu.memory_space<vmem>>, vector<32x64xf32>
    %cst_55 = arith.constant dense<0.000000e+00> : vector<2x64xf32>
    %144 = tpu.matmul %142, %143, %cst_55 {dimension_numbers = #tpu.dot_dimension_numbers<[1], [0], [0], [1], [0, 0, 1, 1], [], []>, precision = #tpu.contract_precision<fp32>} : vector<2x32xf32>, vector<32x64xf32>, vector<2x64xf32> -> vector<2x64xf32>
    %145 = vector.broadcast %8 : vector<1x64xf32> to vector<2x64xf32>
    %146 = arith.addf %144, %145 : vector<2x64xf32>
    %cst_56 = arith.constant dense<0.000000e+00> : vector<2xf32>
    %147 = vector.multi_reduction <add>, %146, %cst_56 [1] : vector<2x64xf32> to vector<2xf32>
    %148 = vector.shape_cast %147 : vector<2xf32> to vector<2x1xf32>
    %cst_57 = arith.constant 6.400000e+01 : f32
    %149 = vector.broadcast %cst_57 : f32 to vector<2x1xf32>
    %150 = arith.divf %148, %149 : vector<2x1xf32>
    %151 = vector.broadcast %150 : vector<2x1xf32> to vector<2x64xf32>
    %152 = arith.subf %146, %151 : vector<2x64xf32>
    %153 = arith.mulf %152, %152 : vector<2x64xf32>
    %cst_58 = arith.constant dense<0.000000e+00> : vector<2xf32>
    %154 = vector.multi_reduction <add>, %153, %cst_58 [1] : vector<2x64xf32> to vector<2xf32>
    %155 = vector.shape_cast %154 : vector<2xf32> to vector<2x1xf32>
    %cst_59 = arith.constant 6.400000e+01 : f32
    %156 = vector.broadcast %cst_59 : f32 to vector<2x1xf32>
    %157 = arith.divf %155, %156 : vector<2x1xf32>
    %158 = vector.broadcast %150 : vector<2x1xf32> to vector<2x64xf32>
    %159 = arith.subf %146, %158 : vector<2x64xf32>
    %cst_60 = arith.constant 9.99999974E-6 : f32
    %160 = vector.broadcast %cst_60 : f32 to vector<2x1xf32>
    %161 = arith.addf %157, %160 : vector<2x1xf32>
    %162 = math.rsqrt %161 : vector<2x1xf32>
    %163 = vector.broadcast %162 : vector<2x1xf32> to vector<2x64xf32>
    %164 = arith.mulf %159, %163 : vector<2x64xf32>
    %165 = vector.broadcast %9 : vector<1x64xf32> to vector<2x64xf32>
    %166 = arith.mulf %164, %165 : vector<2x64xf32>
    %167 = vector.broadcast %10 : vector<1x64xf32> to vector<2x64xf32>
    %168 = arith.addf %166, %167 : vector<2x64xf32>
    %cst_61 = arith.constant 5.000000e-01 : f32
    %169 = vector.broadcast %cst_61 : f32 to vector<2x64xf32>
    %170 = arith.mulf %169, %168 : vector<2x64xf32>
    %cst_62 = arith.constant 0.707106769 : f32
    %171 = vector.broadcast %cst_62 : f32 to vector<2x64xf32>
    %172 = arith.mulf %168, %171 : vector<2x64xf32>
    %173 = math.erf %172 : vector<2x64xf32>
    %cst_63 = arith.constant 1.000000e+00 : f32
    %174 = vector.broadcast %cst_63 : f32 to vector<2x64xf32>
    %175 = arith.addf %174, %173 : vector<2x64xf32>
    %176 = arith.mulf %170, %175 : vector<2x64xf32>
    %c0_64 = arith.constant 0 : index
    %c0_65 = arith.constant 0 : index
    %177 = vector.load %arg5[%c0_64, %c0_65] : memref<64x32xf32, #tpu.memory_space<vmem>>, vector<64x32xf32>
    %cst_66 = arith.constant dense<0.000000e+00> : vector<2x32xf32>
    %178 = tpu.matmul %176, %177, %cst_66 {dimension_numbers = #tpu.dot_dimension_numbers<[1], [0], [0], [1], [0, 0, 1, 1], [], []>, precision = #tpu.contract_precision<fp32>} : vector<2x64xf32>, vector<64x32xf32>, vector<2x32xf32> -> vector<2x32xf32>
    %179 = vector.broadcast %6 : vector<1x32xf32> to vector<2x32xf32>
    %180 = arith.addf %178, %179 : vector<2x32xf32>
    %cst_67 = arith.constant 1.0545718E-34 : f32
    %181 = vector.broadcast %cst_67 : f32 to vector<2x32xf32>
    %182 = arith.mulf %180, %181 : vector<2x32xf32>
    %cst_68 = arith.constant 0x4D8EF3C2 : f32
    %183 = vector.broadcast %cst_68 : f32 to vector<1x32xf32>
    %184 = arith.mulf %183, %5 : vector<1x32xf32>
    %185 = vector.broadcast %184 : vector<1x32xf32> to vector<2x32xf32>
    %186 = arith.mulf %182, %185 : vector<2x32xf32>
    %c0_69 = arith.constant 0 : index
    %c0_70 = arith.constant 0 : index
    %c0_71 = arith.constant 0 : index
    %187 = vector.load %arg10[%c0_69, %c0_70, %c0_71] : memref<2x32x32xf32, #tpu.memory_space<vmem>>, vector<2x32x32xf32>
    %188 = vector.shape_cast %186 : vector<2x32xf32> to vector<2x32x1xf32>
    %189 = vector.broadcast %188 : vector<2x32x1xf32> to vector<2x32x32xf32>
    %190 = arith.addf %187, %189 : vector<2x32x32xf32>
    %c0_72 = arith.constant 0 : index
    %c0_73 = arith.constant 0 : index
    %c0_74 = arith.constant 0 : index
    %191 = vector.load %arg10[%c0_72, %c0_73, %c0_74] : memref<2x32x32xf32, #tpu.memory_space<vmem>>, vector<2x32x32xf32>
    tpu.vector_store %arg10[%c0_72, %c0_73, %c0_74], %190 {strides = array<i32>} : memref<2x32x32xf32, #tpu.memory_space<vmem>>, vector<2x32x32xf32>,
    return
  }
  func.func @transform_0(%arg0: i32) -> (i32, i32, i32) {
    %c0_i32 = arith.constant 0 : i32
    %c0_i32_0 = arith.constant 0 : i32
    %c0_i32_1 = arith.constant 0 : i32
    return %arg0, %c0_i32, %c0_i32_0 : i32, i32, i32
  }
  func.func @transform_1(%arg0: i32) -> (i32, i32) {
    %c0_i32 = arith.constant 0 : i32
    %c0_i32_0 = arith.constant 0 : i32
    %c0_i32_1 = arith.constant 0 : i32
    return %c0_i32, %c0_i32_0 : i32, i32
  }
  func.func @transform_2(%arg0: i32) -> (i32, i32) {
    %c0_i32 = arith.constant 0 : i32
    %c0_i32_0 = arith.constant 0 : i32
    %c0_i32_1 = arith.constant 0 : i32
    return %c0_i32, %c0_i32_0 : i32, i32
  }
  func.func @transform_3(%arg0: i32) -> (i32, i32) {
    %c0_i32 = arith.constant 0 : i32
    %c0_i32_0 = arith.constant 0 : i32
    %c0_i32_1 = arith.constant 0 : i32
    return %c0_i32, %c0_i32_0 : i32, i32
  }
  func.func @transform_4(%arg0: i32) -> (i32, i32) {
    %c0_i32 = arith.constant 0 : i32
    %c0_i32_0 = arith.constant 0 : i32
    %c0_i32_1 = arith.constant 0 : i32
    return %c0_i32, %c0_i32_0 : i32, i32
  }
  func.func @transform_5(%arg0: i32) -> (i32, i32) {
    %c0_i32 = arith.constant 0 : i32
    %c0_i32_0 = arith.constant 0 : i32
    %c0_i32_1 = arith.constant 0 : i32
    return %c0_i32, %c0_i32_0 : i32, i32
  }
  func.func @transform_6(%arg0: i32) -> (i32, i32) {
    %c0_i32 = arith.constant 0 : i32
    %c0_i32_0 = arith.constant 0 : i32
    %c0_i32_1 = arith.constant 0 : i32
    return %c0_i32, %c0_i32_0 : i32, i32
  }
  func.func @transform_7(%arg0: i32) -> (i32, i32) {
    %c0_i32 = arith.constant 0 : i32
    %c0_i32_0 = arith.constant 0 : i32
    %c0_i32_1 = arith.constant 0 : i32
    return %c0_i32, %c0_i32_0 : i32, i32
  }
  func.func @transform_8(%arg0: i32) -> (i32, i32) {
    %c0_i32 = arith.constant 0 : i32
    %c0_i32_0 = arith.constant 0 : i32
    %c0_i32_1 = arith.constant 0 : i32
    return %c0_i32, %c0_i32_0 : i32, i32
  }
  func.func @transform_9(%arg0: i32) -> (i32, i32, i32) {
    %c0_i32 = arith.constant 0 : i32
    %c0_i32_0 = arith.constant 0 : i32
    %c0_i32_1 = arith.constant 0 : i32
    return %arg0, %c0_i32, %c0_i32_0 : i32, i32, i32
  }
}

</mosaic_0001>

<llo_original>
// kernel: spacetime_curvature_forward.1
$region0: #{spacetime_curvature_forward.1}
  #allocation0 [shape = 'u32[]', space=smem, size = 0x4, offset = 0x4, fixed_abs, tag = 'smem constant byte address 0x4 - core index']
  #allocation1 [shape = 'u32[144,128]{1,0:T(1,128)}', space=vmem, size = 0x12000, scoped, tag = 'internal scratch']
  %s0 = inlined_call_operand.vmem [shape: f32[2,8,32], index: 0, kind: input, shape index: {}]
  %s1 = inlined_call_operand.vmem [shape: f32[32,24], index: 1, kind: input, shape index: {}]
  %s2 = inlined_call_operand.vmem [shape: f32[32,96], index: 2, kind: input, shape index: {}]
  %s3 = inlined_call_operand.vmem [shape: f32[32,64], index: 3, kind: input, shape index: {}]
  %s4 = inlined_call_operand.vmem [shape: f32[64,32], index: 4, kind: input, shape index: {}]
  %s5 = inlined_call_operand.vmem [shape: f32[32,3], index: 5, kind: input, shape index: {}]
  %s6 = inlined_call_operand.vmem [shape: f32[2,32], index: 6, kind: input, shape index: {}]
  %s7 = inlined_call_operand.vmem [shape: f32[3,64], index: 7, kind: input, shape index: {}]
  %s8 = inlined_call_operand.vmem [shape: f32[2,32], index: 8, kind: input, shape index: {}]
  %s9 = inlined_call_operand.hbm [shape: f32[2,32,32], index: 9, kind: output, shape index: {}]
  %s10 = sld [smem:[#allocation0]]
  $region46: #{spacetime_curvature_forward.1} parent=0
    _
  %s12 = ssub.s32 1, %s10
  %s13 = scalar_select 0, %s12, %s10
  $region1: #{spacetime_curvature_forward.1} parent=0
    #allocation2 [shape = 'u8[32768]{0}', space=vmem, size = 0x8000, scoped, tag = 'output window, operand 0, single buffered']
    #allocation3 [shape = 's32[1]{0}', space=sflag, size = 0x4, scoped, tag = 'scoped memory for spacetime_curvature_forward.1']
    %14 = vsyncpa [#allocation3], 0
    // Predicated region
    $region2: #{spacetime_curvature_forward.1} parent=1 // pred_check
      _
    $region3: #{spacetime_curvature_forward.1} parent=1 // pred_check_branch
      %16 = sbr.rel (0) target = $region5
    $region4: #{spacetime_curvature_forward.1} parent=1 // pred_region
      _
    $region5: #{spacetime_curvature_forward.1} parent=1 // pred_fallthru
      _
    // Predicated region
    $region6: #{spacetime_curvature_forward.1} parent=1 // pred_check
      _
    $region7: #{spacetime_curvature_forward.1} parent=1 // pred_check_branch
      %18 = sbr.rel (0) target = $region9
    $region8: #{spacetime_curvature_forward.1} parent=1 // pred_region
      _
    $region9: #{spacetime_curvature_forward.1} parent=1 // pred_fallthru
      _
    // Predicated region
    $region10: #{spacetime_curvature_forward.1} parent=1 // pred_check
      _
    $region11: #{spacetime_curvature_forward.1} parent=1 // pred_check_branch
      %20 = sbr.rel (0) target = $region13
    $region12: #{spacetime_curvature_forward.1} parent=1 // pred_region
      _
    $region13: #{spacetime_curvature_forward.1} parent=1 // pred_fallthru
      _
    // Predicated region
    $region14: #{spacetime_curvature_forward.1} parent=1 // pred_check
      _
    $region15: #{spacetime_curvature_forward.1} parent=1 // pred_check_branch
      %22 = sbr.rel (0) target = $region17
    $region16: #{spacetime_curvature_forward.1} parent=1 // pred_region
      _
    $region17: #{spacetime_curvature_forward.1} parent=1 // pred_fallthru
      _
    // Predicated region
    $region18: #{spacetime_curvature_forward.1} parent=1 // pred_check
      _
    $region19: #{spacetime_curvature_forward.1} parent=1 // pred_check_branch
      %24 = sbr.rel (0) target = $region21
    $region20: #{spacetime_curvature_forward.1} parent=1 // pred_region
      _
    $region21: #{spacetime_curvature_forward.1} parent=1 // pred_fallthru
      _
    // Predicated region
    $region22: #{spacetime_curvature_forward.1} parent=1 // pred_check
      _
    $region23: #{spacetime_curvature_forward.1} parent=1 // pred_check_branch
      %26 = sbr.rel (0) target = $region25
    $region24: #{spacetime_curvature_forward.1} parent=1 // pred_region
      _
    $region25: #{spacetime_curvature_forward.1} parent=1 // pred_fallthru
      _
    // Predicated region
    $region26: #{spacetime_curvature_forward.1} parent=1 // pred_check
      _
    $region27: #{spacetime_curvature_forward.1} parent=1 // pred_check_branch
      %28 = sbr.rel (0) target = $region29
    $region28: #{spacetime_curvature_forward.1} parent=1 // pred_region
      _
    $region29: #{spacetime_curvature_forward.1} parent=1 // pred_fallthru
      _
    // Predicated region
    $region30: #{spacetime_curvature_forward.1} parent=1 // pred_check
      _
    $region31: #{spacetime_curvature_forward.1} parent=1 // pred_check_branch
      %30 = sbr.rel (0) target = $region33
    $region32: #{spacetime_curvature_forward.1} parent=1 // pred_region
      _
    $region33: #{spacetime_curvature_forward.1} parent=1 // pred_fallthru
      _
    // Predicated region
    $region34: #{spacetime_curvature_forward.1} parent=1 // pred_check
      _
    $region35: #{spacetime_curvature_forward.1} parent=1 // pred_check_branch
      %32 = sbr.rel (0) target = $region37
    $region36: #{spacetime_curvature_forward.1} parent=1 // pred_region
      _
    $region37: #{spacetime_curvature_forward.1} parent=1 // pred_fallthru
      _
    %v33 = vld [vmem:[%s5] sm:$0xff]
    %v34 = vld [vmem:[%s5 + $0x8] sm:$0xff]
    %v35 = vld [vmem:[%s5 + $0x10] sm:$0xff]
    %v36 = vld [vmem:[%s5 + $0x18] sm:$0xff]
    %v37 = vld [vmem:[%s6] sm:$0x3]
    %v38 = vld [vmem:[%s7] sm:$0x7]
    %v39 = vld [vmem:[%s8] sm:$0x3]
    %v40 = vld [vmem:[%s1] sm:$0xff]
    %v41 = vld [vmem:[%s1 + $0x8] sm:$0xff]
    %v42 = vld [vmem:[%s1 + $0x10] sm:$0xff]
    %v43 = vld [vmem:[%s1 + $0x18] sm:$0xff]
    %v44 = vld [vmem:[%s2] sm:$0xff]
    %v45 = vld [vmem:[%s2 + $0x8] sm:$0xff]
    %v46 = vld [vmem:[%s2 + $0x10] sm:$0xff]
    %v47 = vld [vmem:[%s2 + $0x18] sm:$0xff]
    %v48 = vlaneseq
    %v49 = vand.u32 %v48, 127
    %vm50 = vcmp.ne.s32.totalorder %v49, 0
    %v51 = vsel %vm50, 1, 0
    %v52 = vcvt.s32.f32 %v51
    %vm53 = vcmp.ne.s32.totalorder %v49, 31
    %v54 = vsel %vm53, 1, 0
    %v55 = vcvt.s32.f32 %v54
    %v56 = vld [vmem:[%s0] sm:$0xff]
    %vm57 = vcmask 1047808
    %58 = vrot.lane.b32.xlu0 %v56, 32
    %v59 = vpop.permute.xlu0 %58
    %v60 = vsel %vm57, %v59, %v56
    %61 = vrot.lane.b32.xlu0 %v60, 32
    %v62 = vpop.permute.xlu0 %61
    %v63 = vsel %vm57, %v62, %v56
    %65 = vrot.lane.b32.xlu0 %v52, 31
    %v66 = vpop.permute.xlu0 %65
    %v68 = vmul.f32 %v63, %v66
    %70 = vrot.lane.b32.xlu0 %v55, 1
    %v71 = vpop.permute.xlu0 %70
    %v73 = vmul.f32 %v63, %v71
    %75 = vrot.lane.b32.xlu0 %v56, 31
    %v76 = vpop.permute.xlu0 %75
    %78 = vrot.lane.b32.xlu0 %v73, 30
    %v79 = vpop.permute.xlu0 %78
    %81 = vset.pattern.permute.xlu0 0
    %82 = vperm.xlu0 %81, %v33
    %v83 = vpop.permute.xlu0 %82
    %86 = vset.pattern.permute.xlu0 0
    %87 = vperm.xlu0 %86, %v34
    %v88 = vpop.permute.xlu0 %87
    %91 = vset.pattern.permute.xlu0 0
    %92 = vperm.xlu0 %91, %v35
    %v93 = vpop.permute.xlu0 %92
    %96 = vset.pattern.permute.xlu0 0
    %97 = vperm.xlu0 %96, %v36
    %v98 = vpop.permute.xlu0 %97
    %101 = vrot.lane.b32.xlu0 %v68, 97
    %v102 = vpop.permute.xlu0 %101
    %103 = vrot.lane.b32.xlu0 %v76, 97
    %v104 = vpop.permute.xlu0 %103
    %105 = vrot.lane.b32.xlu0 %v79, 97
    %v106 = vpop.permute.xlu0 %105
    %vm110 = vcmask 195584
    %v112 = vsel %vm110, %v40, 0
    %v115 = vsel %vm110, %v41, 0
    %v118 = vsel %vm110, %v42, 0
    %v121 = vsel %vm110, %v43, 0
    %123 = vmatprep.subr.mxu0 0.0
    %v124 = vand.u32 %v102, 4294901760
    %125 = vmatpush1.msra.mxu0 %v124
    %126 = vmatprep.subr.mxu0 0.0
    %v127 = vand.u32 %v104, 4294901760
    %128 = vmatpush1.msra.mxu0 %v127
    %129 = vmatprep.subr.mxu0 0.0
    %v130 = vand.u32 %v106, 4294901760
    %131 = vmatpush1.msra.mxu0 %v130
    %132 = vmatprep.subr.mxu0 0.0
    %133 = vmatpush1.msra.mxu0 0.0
    %134 = vmatprep.subr.mxu0 0.0
    %135 = vmatpush1.msra.mxu0 0.0
    %136 = vmatprep.subr.mxu0 0.0
    %137 = vmatpush1.msra.mxu0 0.0
    %138 = vmatprep.subr.mxu0 0.0
    %139 = vmatpush1.msra.mxu0 0.0
    %140 = vmatprep.subr.mxu0 0.0
    %141 = vmatpush1.msra.mxu0 0.0
    %142 = vmatprep.subr.mxu0 0.0
    %143 = vmatpush1.msra.mxu0 0.0
    %144 = vmatprep.subr.mxu0 0.0
    %145 = vmatpush1.msra.mxu0 0.0
    %146 = vmatprep.subr.mxu0 0.0
    %147 = vmatpush1.msra.mxu0 0.0
    %148 = vmatprep.subr.mxu0 0.0
    %149 = vmatpush1.msra.mxu0 0.0
    %150 = vmatprep.subr.mxu0 0.0
    %151 = vmatpush1.msra.mxu0 0.0
    %152 = vmatprep.subr.mxu0 0.0
    %153 = vmatpush1.msra.mxu0 0.0
    %154 = vmatprep.subr.mxu0 0.0
    %155 = vmatpush1.msra.mxu0 0.0
    %156 = vmatprep.subr.mxu0 0.0
    %157 = vmatpush1.msra.mxu0 0.0
    %158 = vmatprep.subr.mxu0 0.0
    %159 = vmatpush1.msra.mxu0 0.0
    %160 = vmatprep.subr.mxu0 0.0
    %161 = vmatpush1.msra.mxu0 0.0
    %162 = vmatprep.subr.mxu0 0.0
    %163 = vmatpush1.msra.mxu0 0.0
    %164 = vmatprep.subr.mxu0 0.0
    %165 = vmatpush1.msra.mxu0 0.0
    %166 = vmatprep.subr.mxu0 0.0
    %167 = vmatpush1.msra.mxu0 0.0
    %168 = vmatprep.subr.mxu0 0.0
    %169 = vmatpush1.msra.mxu0 0.0
    %170 = vmatprep.subr.mxu0 0.0
    %171 = vmatpush1.msra.mxu0 0.0
    %172 = vmatprep.subr.mxu0 0.0
    %173 = vmatpush1.msra.mxu0 0.0
    %174 = vmatprep.subr.mxu0 0.0
    %175 = vmatpush1.msra.mxu0 0.0
    %176 = vmatprep.subr.mxu0 0.0
    %177 = vmatpush1.msra.mxu0 0.0
    %178 = vmatprep.subr.mxu0 0.0
    %179 = vmatpush1.msra.mxu0 0.0
    %180 = vmatprep.subr.mxu0 0.0
    %181 = vmatpush1.msra.mxu0 0.0
    %182 = vmatprep.subr.mxu0 0.0
    %183 = vmatpush1.msra.mxu0 0.0
    %184 = vmatprep.subr.mxu0 0.0
    %185 = vmatpush1.msra.mxu0 0.0
    %186 = vmatprep.subr.mxu0 0.0
    %187 = vmatpush1.msra.mxu0 0.0
    %188 = vmatprep.subr.mxu0 0.0
    %189 = vmatpush1.msra.mxu0 0.0
    %190 = vmatprep.mubr.f32.mxu0 0.0
    %v191 = vand.u32 %v112, 4294901760
    %v192 = vsub.f32 %v112, %v191
    %v193 = vand.u32 %v192, 4294901760
    %v194 = vsub.f32 %v192, %v193
    %v195 = vand.u32 %v194, 4294901760
    %196 = vmatmul.mubr.f32.gmra.mrb[0].mxu0 %v195
    %v197 = vpop.f32.mrb[0].mxu0
    %v198 = vadd.f32 %v83, %v197
    %v199 = vpop.f32.mrb[0].mxu0
    %200 = vmatprep.mubr.f32.mxu0 0.0
    %v201 = vand.u32 %v115, 4294901760
    %v202 = vsub.f32 %v115, %v201
    %v203 = vand.u32 %v202, 4294901760
    %v204 = vsub.f32 %v202, %v203
    %v205 = vand.u32 %v204, 4294901760
    %206 = vmatmul.mubr.f32.gmra.mrb[0].mxu0 %v205
    %v207 = vpop.f32.mrb[0].mxu0
    %v208 = vadd.f32 %v88, %v207
    %v209 = vpop.f32.mrb[0].mxu0
    %210 = vmatprep.mubr.f32.mxu0 0.0
    %v211 = vand.u32 %v118, 4294901760
    %v212 = vsub.f32 %v118, %v211
    %v213 = vand.u32 %v212, 4294901760
    %v214 = vsub.f32 %v212, %v213
    %v215 = vand.u32 %v214, 4294901760
    %216 = vmatmul.mubr.f32.gmra.mrb[0].mxu0 %v215
    %v217 = vpop.f32.mrb[0].mxu0
    %v218 = vadd.f32 %v93, %v217
    %v219 = vpop.f32.mrb[0].mxu0
    %220 = vmatprep.mubr.f32.mxu0 0.0
    %v221 = vand.u32 %v121, 4294901760
    %v222 = vsub.f32 %v121, %v221
    %v223 = vand.u32 %v222, 4294901760
    %v224 = vsub.f32 %v222, %v223
    %v225 = vand.u32 %v224, 4294901760
    %226 = vmatmul.mubr.f32.gmra.mrb[0].mxu0 %v225
    %v227 = vpop.f32.mrb[0].mxu0
    %v228 = vadd.f32 %v98, %v227
    %v229 = vpop.f32.mrb[0].mxu0
    %230 = vdwg.mxu0
    %231 = vmatprep.subr.mxu0 0.0
    %v232 = vand.u32 %v102, 4294901760
    %v233 = vsub.f32 %v102, %v232
    %v234 = vand.u32 %v233, 4294901760
    %v235 = vsub.f32 %v233, %v234
    %v236 = vand.u32 %v235, 4294901760
    %237 = vmatpush1.msra.mxu0 %v236
    %238 = vmatprep.subr.mxu0 0.0
    %v239 = vand.u32 %v104, 4294901760
    %v240 = vsub.f32 %v104, %v239
    %v241 = vand.u32 %v240, 4294901760
    %v242 = vsub.f32 %v240, %v241
    %v243 = vand.u32 %v242, 4294901760
    %244 = vmatpush1.msra.mxu0 %v243
    %245 = vmatprep.subr.mxu0 0.0
    %v246 = vand.u32 %v106, 4294901760
    %v247 = vsub.f32 %v106, %v246
    %v248 = vand.u32 %v247, 4294901760
    %v249 = vsub.f32 %v247, %v248
    %v250 = vand.u32 %v249, 4294901760
    %251 = vmatpush1.msra.mxu0 %v250
    %252 = vmatprep.subr.mxu0 0.0
    %253 = vmatpush1.msra.mxu0 0.0
    %254 = vmatprep.subr.mxu0 0.0
    %255 = vmatpush1.msra.mxu0 0.0
    %256 = vmatprep.subr.mxu0 0.0
    %257 = vmatpush1.msra.mxu0 0.0
    %258 = vmatprep.subr.mxu0 0.0
    %259 = vmatpush1.msra.mxu0 0.0
    %260 = vmatprep.subr.mxu0 0.0
    %261 = vmatpush1.msra.mxu0 0.0
    %262 = vmatprep.subr.mxu0 0.0
    %263 = vmatpush1.msra.mxu0 0.0
    %264 = vmatprep.subr.mxu0 0.0
    %265 = vmatpush1.msra.mxu0 0.0
    %266 = vmatprep.subr.mxu0 0.0
    %267 = vmatpush1.msra.mxu0 0.0
    %268 = vmatprep.subr.mxu0 0.0
    %269 = vmatpush1.msra.mxu0 0.0
    %270 = vmatprep.subr.mxu0 0.0
    %271 = vmatpush1.msra.mxu0 0.0
    %272 = vmatprep.subr.mxu0 0.0
    %273 = vmatpush1.msra.mxu0 0.0
    %274 = vmatprep.subr.mxu0 0.0
    %275 = vmatpush1.msra.mxu0 0.0
    %276 = vmatprep.subr.mxu0 0.0
    %277 = vmatpush1.msra.mxu0 0.0
    %278 = vmatprep.subr.mxu0 0.0
    %279 = vmatpush1.msra.mxu0 0.0
    %280 = vmatprep.subr.mxu0 0.0
    %281 = vmatpush1.msra.mxu0 0.0
    %282 = vmatprep.subr.mxu0 0.0
    %283 = vmatpush1.msra.mxu0 0.0
    %284 = vmatprep.subr.mxu0 0.0
    %285 = vmatpush1.msra.mxu0 0.0
    %286 = vmatprep.subr.mxu0 0.0
    %287 = vmatpush1.msra.mxu0 0.0
    %288 = vmatprep.subr.mxu0 0.0
    %289 = vmatpush1.msra.mxu0 0.0
    %290 = vmatprep.subr.mxu0 0.0
    %291 = vmatpush1.msra.mxu0 0.0
    %292 = vmatprep.subr.mxu0 0.0
    %293 = vmatpush1.msra.mxu0 0.0
    %294 = vmatprep.subr.mxu0 0.0
    %295 = vmatpush1.msra.mxu0 0.0
    %296 = vmatprep.subr.mxu0 0.0
    %297 = vmatpush1.msra.mxu0 0.0
    %298 = vmatprep.subr.mxu0 0.0
    %299 = vmatpush1.msra.mxu0 0.0
    %300 = vmatprep.subr.mxu0 0.0
    %301 = vmatpush1.msra.mxu0 0.0
    %302 = vmatprep.subr.mxu0 0.0
    %303 = vmatpush1.msra.mxu0 0.0
    %304 = vmatprep.subr.mxu0 0.0
    %305 = vmatpush1.msra.mxu0 0.0
    %306 = vmatprep.subr.mxu0 0.0
    %307 = vmatpush1.msra.mxu0 0.0
    %308 = vmatprep.subr.mxu0 0.0
    %309 = vmatpush1.msra.mxu0 0.0
    %310 = vmatprep.mubr.f32.mxu0 0.0
    %v311 = vand.u32 %v112, 4294901760
    %312 = vmatmul.mubr.f32.gmra.mrb[0].mxu0 %v311
    %v313 = vpop.f32.mrb[0].mxu0
    %v314 = vadd.f32 %v198, %v313
    %v315 = vpop.f32.mrb[0].mxu0
    %316 = vmatprep.mubr.f32.mxu0 0.0
    %v317 = vand.u32 %v115, 4294901760
    %318 = vmatmul.mubr.f32.gmra.mrb[0].mxu0 %v317
    %v319 = vpop.f32.mrb[0].mxu0
    %v320 = vadd.f32 %v208, %v319
    %v321 = vpop.f32.mrb[0].mxu0
    %322 = vmatprep.mubr.f32.mxu0 0.0
    %v323 = vand.u32 %v118, 4294901760
    %324 = vmatmul.mubr.f32.gmra.mrb[0].mxu0 %v323
    %v325 = vpop.f32.mrb[0].mxu0
    %v326 = vadd.f32 %v218, %v325
    %v327 = vpop.f32.mrb[0].mxu0
    %328 = vmatprep.mubr.f32.mxu0 0.0
    %v329 = vand.u32 %v121, 4294901760
    %330 = vmatmul.mubr.f32.gmra.mrb[0].mxu0 %v329
    %v331 = vpop.f32.mrb[0].mxu0
    %v332 = vadd.f32 %v228, %v331
    %v333 = vpop.f32.mrb[0].mxu0
    %334 = vdwg.mxu0
    %335 = vmatprep.subr.mxu0 0.0
    %v336 = vand.u32 %v102, 4294901760
    %v337 = vsub.f32 %v102, %v336
    %338 = vmatpush1.msra.mxu0 %v337
    %339 = vmatprep.subr.mxu0 0.0
    %v340 = vand.u32 %v104, 4294901760
    %v341 = vsub.f32 %v104, %v340
    %342 = vmatpush1.msra.mxu0 %v341
    %343 = vmatprep.subr.mxu0 0.0
    %v344 = vand.u32 %v106, 4294901760
    %v345 = vsub.f32 %v106, %v344
    %346 = vmatpush1.msra.mxu0 %v345
    %347 = vmatprep.subr.mxu0 0.0
    %348 = vmatpush1.msra.mxu0 0.0
    %349 = vmatprep.subr.mxu0 0.0
    %350 = vmatpush1.msra.mxu0 0.0
    %351 = vmatprep.subr.mxu0 0.0
    %352 = vmatpush1.msra.mxu0 0.0
    %353 = vmatprep.subr.mxu0 0.0
    %354 = vmatpush1.msra.mxu0 0.0
    %355 = vmatprep.subr.mxu0 0.0
    %356 = vmatpush1.msra.mxu0 0.0
    %357 = vmatprep.subr.mxu0 0.0
    %358 = vmatpush1.msra.mxu0 0.0
    %359 = vmatprep.subr.mxu0 0.0
    %360 = vmatpush1.msra.mxu0 0.0
    %361 = vmatprep.subr.mxu0 0.0
    %362 = vmatpush1.msra.mxu0 0.0
    %363 = vmatprep.subr.mxu0 0.0
    %364 = vmatpush1.msra.mxu0 0.0
    %365 = vmatprep.subr.mxu0 0.0
    %366 = vmatpush1.msra.mxu0 0.0
    %367 = vmatprep.subr.mxu0 0.0
    %368 = vmatpush1.msra.mxu0 0.0
    %369 = vmatprep.subr.mxu0 0.0
    %370 = vmatpush1.msra.mxu0 0.0
    %371 = vmatprep.subr.mxu0 0.0
    %372 = vmatpush1.msra.mxu0 0.0
    %373 = vmatprep.subr.mxu0 0.0
    %374 = vmatpush1.msra.mxu0 0.0
    %375 = vmatprep.subr.mxu0 0.0
    %376 = vmatpush1.msra.mxu0 0.0
    %377 = vmatprep.subr.mxu0 0.0
    %378 = vmatpush1.msra.mxu0 0.0
    %379 = vmatprep.subr.mxu0 0.0
    %380 = vmatpush1.msra.mxu0 0.0
    %381 = vmatprep.subr.mxu0 0.0
    %382 = vmatpush1.msra.mxu0 0.0
    %383 = vmatprep.subr.mxu0 0.0
    %384 = vmatpush1.msra.mxu0 0.0
    %385 = vmatprep.subr.mxu0 0.0
    %386 = vmatpush1.msra.mxu0 0.0
    %387 = vmatprep.subr.mxu0 0.0
    %388 = vmatpush1.msra.mxu0 0.0
    %389 = vmatprep.subr.mxu0 0.0
    %390 = vmatpush1.msra.mxu0 0.0
    %391 = vmatprep.subr.mxu0 0.0
    %392 = vmatpush1.msra.mxu0 0.0
    %393 = vmatprep.subr.mxu0 0.0
    %394 = vmatpush1.msra.mxu0 0.0
    %395 = vmatprep.subr.mxu0 0.0
    %396 = vmatpush1.msra.mxu0 0.0
    %397 = vmatprep.subr.mxu0 0.0
    %398 = vmatpush1.msra.mxu0 0.0
    %399 = vmatprep.subr.mxu0 0.0
    %400 = vmatpush1.msra.mxu0 0.0
    %401 = vmatprep.subr.mxu0 0.0
    %402 = vmatpush1.msra.mxu0 0.0
    %403 = vmatprep.subr.mxu0 0.0
    %404 = vmatpush1.msra.mxu0 0.0
    %405 = vmatprep.mubr.f32.mxu0 0.0
    %v406 = vand.u32 %v112, 4294901760
    %v407 = vsub.f32 %v112, %v406
    %408 = vmatmul.mubr.f32.gmra.mrb[0].mxu0 %v407
    %v409 = vpop.f32.mrb[0].mxu0
    %v410 = vadd.f32 %v314, %v409
    %v411 = vpop.f32.mrb[0].mxu0
    %412 = vmatprep.mubr.f32.mxu0 0.0
    %v413 = vand.u32 %v115, 4294901760
    %v414 = vsub.f32 %v115, %v413
    %415 = vmatmul.mubr.f32.gmra.mrb[0].mxu0 %v414
    %v416 = vpop.f32.mrb[0].mxu0
    %v417 = vadd.f32 %v320, %v416
    %v418 = vpop.f32.mrb[0].mxu0
    %419 = vmatprep.mubr.f32.mxu0 0.0
    %v420 = vand.u32 %v118, 4294901760
    %v421 = vsub.f32 %v118, %v420
    %422 = vmatmul.mubr.f32.gmra.mrb[0].mxu0 %v421
    %v423 = vpop.f32.mrb[0].mxu0
    %v424 = vadd.f32 %v326, %v423
    %v425 = vpop.f32.mrb[0].mxu0
    %426 = vmatprep.mubr.f32.mxu0 0.0
    %v427 = vand.u32 %v121, 4294901760
    %v428 = vsub.f32 %v121, %v427
    %429 = vmatmul.mubr.f32.gmra.mrb[0].mxu0 %v428
    %v430 = vpop.f32.mrb[0].mxu0
    %v431 = vadd.f32 %v332, %v430
    %v432 = vpop.f32.mrb[0].mxu0
    %433 = vdwg.mxu0
    %434 = vmatprep.subr.mxu0 0.0
    %v435 = vand.u32 %v102, 4294901760
    %436 = vmatpush1.msra.mxu0 %v435
    %437 = vmatprep.subr.mxu0 0.0
    %v438 = vand.u32 %v104, 4294901760
    %439 = vmatpush1.msra.mxu0 %v438
    %440 = vmatprep.subr.mxu0 0.0
    %v441 = vand.u32 %v106, 4294901760
    %442 = vmatpush1.msra.mxu0 %v441
    %443 = vmatprep.subr.mxu0 0.0
    %444 = vmatpush1.msra.mxu0 0.0
    %445 = vmatprep.subr.mxu0 0.0
    %446 = vmatpush1.msra.mxu0 0.0
    %447 = vmatprep.subr.mxu0 0.0
    %448 = vmatpush1.msra.mxu0 0.0
    %449 = vmatprep.subr.mxu0 0.0
    %450 = vmatpush1.msra.mxu0 0.0
    %451 = vmatprep.subr.mxu0 0.0
    %452 = vmatpush1.msra.mxu0 0.0
    %453 = vmatprep.subr.mxu0 0.0
    %454 = vmatpush1.msra.mxu0 0.0
    %455 = vmatprep.subr.mxu0 0.0
    %456 = vmatpush1.msra.mxu0 0.0
    %457 = vmatprep.subr.mxu0 0.0
    %458 = vmatpush1.msra.mxu0 0.0
    %459 = vmatprep.subr.mxu0 0.0
    %460 = vmatpush1.msra.mxu0 0.0
    %461 = vmatprep.subr.mxu0 0.0
    %462 = vmatpush1.msra.mxu0 0.0
    %463 = vmatprep.subr.mxu0 0.0
    %464 = vmatpush1.msra.mxu0 0.0
    %465 = vmatprep.subr.mxu0 0.0
    %466 = vmatpush1.msra.mxu0 0.0
    %467 = vmatprep.subr.mxu0 0.0
    %468 = vmatpush1.msra.mxu0 0.0
    %469 = vmatprep.subr.mxu0 0.0
    %470 = vmatpush1.msra.mxu0 0.0
    %471 = vmatprep.subr.mxu0 0.0
    %472 = vmatpush1.msra.mxu0 0.0
    %473 = vmatprep.subr.mxu0 0.0
    %474 = vmatpush1.msra.mxu0 0.0
    %475 = vmatprep.subr.mxu0 0.0
    %476 = vmatpush1.msra.mxu0 0.0
    %477 = vmatprep.subr.mxu0 0.0
    %478 = vmatpush1.msra.mxu0 0.0
    %479 = vmatprep.subr.mxu0 0.0
    %480 = vmatpush1.msra.mxu0 0.0
    %481 = vmatprep.subr.mxu0 0.0
    %482 = vmatpush1.msra.mxu0 0.0
    %483 = vmatprep.subr.mxu0 0.0
    %484 = vmatpush1.msra.mxu0 0.0
    %485 = vmatprep.subr.mxu0 0.0
    %486 = vmatpush1.msra.mxu0 0.0
    %487 = vmatprep.subr.mxu0 0.0
    %488 = vmatpush1.msra.mxu0 0.0
    %489 = vmatprep.subr.mxu0 0.0
    %490 = vmatpush1.msra.mxu0 0.0
    %491 = vmatprep.subr.mxu0 0.0
    %492 = vmatpush1.msra.mxu0 0.0
    %493 = vmatprep.subr.mxu0 0.0
    %494 = vmatpush1.msra.mxu0 0.0
    %495 = vmatprep.subr.mxu0 0.0
    %496 = vmatpush1.msra.mxu0 0.0
    %497 = vmatprep.subr.mxu0 0.0
    %498 = vmatpush1.msra.mxu0 0.0
    %499 = vmatprep.subr.mxu0 0.0
    %500 = vmatpush1.msra.mxu0 0.0
    %501 = vmatprep.mubr.f32.mxu0 0.0
    %v502 = vand.u32 %v112, 4294901760
    %v503 = vsub.f32 %v112, %v502
    %v504 = vand.u32 %v503, 4294901760
    %505 = vmatmul.mubr.f32.gmra.mrb[0].mxu0 %v504
    %v506 = vpop.f32.mrb[0].mxu0
    %v507 = vadd.f32 %v410, %v506
    %v508 = vpop.f32.mrb[0].mxu0
    %509 = vmatprep.mubr.f32.mxu0 0.0
    %v510 = vand.u32 %v115, 4294901760
    %v511 = vsub.f32 %v115, %v510
    %v512 = vand.u32 %v511, 4294901760
    %513 = vmatmul.mubr.f32.gmra.mrb[0].mxu0 %v512
    %v514 = vpop.f32.mrb[0].mxu0
    %v515 = vadd.f32 %v417, %v514
    %v516 = vpop.f32.mrb[0].mxu0
    %517 = vmatprep.mubr.f32.mxu0 0.0
    %v518 = vand.u32 %v118, 4294901760
    %v519 = vsub.f32 %v118, %v518
    %v520 = vand.u32 %v519, 4294901760
    %521 = vmatmul.mubr.f32.gmra.mrb[0].mxu0 %v520
    %v522 = vpop.f32.mrb[0].mxu0
    %v523 = vadd.f32 %v424, %v522
    %v524 = vpop.f32.mrb[0].mxu0
    %525 = vmatprep.mubr.f32.mxu0 0.0
    %v526 = vand.u32 %v121, 4294901760
    %v527 = vsub.f32 %v121, %v526
    %v528 = vand.u32 %v527, 4294901760
    %529 = vmatmul.mubr.f32.gmra.mrb[0].mxu0 %v528
    %v530 = vpop.f32.mrb[0].mxu0
    %v531 = vadd.f32 %v431, %v530
    %v532 = vpop.f32.mrb[0].mxu0
    %533 = vdwg.mxu0
    %534 = vmatprep.subr.mxu0 0.0
    %v535 = vand.u32 %v102, 4294901760
    %v536 = vsub.f32 %v102, %v535
    %v537 = vand.u32 %v536, 4294901760
    %538 = vmatpush1.msra.mxu0 %v537
    %539 = vmatprep.subr.mxu0 0.0
    %v540 = vand.u32 %v104, 4294901760
    %v541 = vsub.f32 %v104, %v540
    %v542 = vand.u32 %v541, 4294901760
    %543 = vmatpush1.msra.mxu0 %v542
    %544 = vmatprep.subr.mxu0 0.0
    %v545 = vand.u32 %v106, 4294901760
    %v546 = vsub.f32 %v106, %v545
    %v547 = vand.u32 %v546, 4294901760
    %548 = vmatpush1.msra.mxu0 %v547
    %549 = vmatprep.subr.mxu0 0.0
    %550 = vmatpush1.msra.mxu0 0.0
    %551 = vmatprep.subr.mxu0 0.0
    %552 = vmatpush1.msra.mxu0 0.0
    %553 = vmatprep.subr.mxu0 0.0
    %554 = vmatpush1.msra.mxu0 0.0
    %555 = vmatprep.subr.mxu0 0.0
    %556 = vmatpush1.msra.mxu0 0.0
    %557 = vmatprep.subr.mxu0 0.0
    %558 = vmatpush1.msra.mxu0 0.0
    %559 = vmatprep.subr.mxu0 0.0
    %560 = vmatpush1.msra.mxu0 0.0
    %561 = vmatprep.subr.mxu0 0.0
    %562 = vmatpush1.msra.mxu0 0.0
    %563 = vmatprep.subr.mxu0 0.0
    %564 = vmatpush1.msra.mxu0 0.0
    %565 = vmatprep.subr.mxu0 0.0
    %566 = vmatpush1.msra.mxu0 0.0
    %567 = vmatprep.subr.mxu0 0.0
    %568 = vmatpush1.msra.mxu0 0.0
    %569 = vmatprep.subr.mxu0 0.0
    %570 = vmatpush1.msra.mxu0 0.0
    %571 = vmatprep.subr.mxu0 0.0
    %572 = vmatpush1.msra.mxu0 0.0
    %573 = vmatprep.subr.mxu0 0.0
    %574 = vmatpush1.msra.mxu0 0.0
    %575 = vmatprep.subr.mxu0 0.0
    %576 = vmatpush1.msra.mxu0 0.0
    %577 = vmatprep.subr.mxu0 0.0
    %578 = vmatpush1.msra.mxu0 0.0
    %579 = vmatprep.subr.mxu0 0.0
    %580 = vmatpush1.msra.mxu0 0.0
    %581 = vmatprep.subr.mxu0 0.0
    %582 = vmatpush1.msra.mxu0 0.0
    %583 = vmatprep.subr.mxu0 0.0
    %584 = vmatpush1.msra.mxu0 0.0
    %585 = vmatprep.subr.mxu0 0.0
    %586 = vmatpush1.msra.mxu0 0.0
    %587 = vmatprep.subr.mxu0 0.0
    %588 = vmatpush1.msra.mxu0 0.0
    %589 = vmatprep.subr.mxu0 0.0
    %590 = vmatpush1.msra.mxu0 0.0
    %591 = vmatprep.subr.mxu0 0.0
    %592 = vmatpush1.msra.mxu0 0.0
    %593 = vmatprep.subr.mxu0 0.0
    %594 = vmatpush1.msra.mxu0 0.0
    %595 = vmatprep.subr.mxu0 0.0
    %596 = vmatpush1.msra.mxu0 0.0
    %597 = vmatprep.subr.mxu0 0.0
    %598 = vmatpush1.msra.mxu0 0.0
    %599 = vmatprep.subr.mxu0 0.0
    %600 = vmatpush1.msra.mxu0 0.0
    %601 = vmatprep.subr.mxu0 0.0
    %602 = vmatpush1.msra.mxu0 0.0
    %603 = vmatprep.subr.mxu0 0.0
    %604 = vmatpush1.msra.mxu0 0.0
    %605 = vmatprep.subr.mxu0 0.0
    %606 = vmatpush1.msra.mxu0 0.0
    %607 = vmatprep.mubr.f32.mxu0 0.0
    %v608 = vand.u32 %v112, 4294901760
    %609 = vmatmul.mubr.f32.gmra.mrb[0].mxu0 %v608
    %v610 = vpop.f32.mrb[0].mxu0
    %v611 = vadd.f32 %v507, %v610
    %v612 = vpop.f32.mrb[0].mxu0
    %613 = vmatprep.mubr.f32.mxu0 0.0
    %v614 = vand.u32 %v115, 4294901760
    %615 = vmatmul.mubr.f32.gmra.mrb[0].mxu0 %v614
    %v616 = vpop.f32.mrb[0].mxu0
    %v617 = vadd.f32 %v515, %v616
    %v618 = vpop.f32.mrb[0].mxu0
    %619 = vmatprep.mubr.f32.mxu0 0.0
    %v620 = vand.u32 %v118, 4294901760
    %621 = vmatmul.mubr.f32.gmra.mrb[0].mxu0 %v620
    %v622 = vpop.f32.mrb[0].mxu0
    %v623 = vadd.f32 %v523, %v622
    %v624 = vpop.f32.mrb[0].mxu0
    %625 = vmatprep.mubr.f32.mxu0 0.0
    %v626 = vand.u32 %v121, 4294901760
    %627 = vmatmul.mubr.f32.gmra.mrb[0].mxu0 %v626
    %v628 = vpop.f32.mrb[0].mxu0
    %v629 = vadd.f32 %v531, %v628
    %v630 = vpop.f32.mrb[0].mxu0
    %631 = vdwg.mxu0
    %632 = vmatprep.subr.mxu0 0.0
    %v633 = vand.u32 %v102, 4294901760
    %634 = vmatpush1.msra.mxu0 %v633
    %635 = vmatprep.subr.mxu0 0.0
    %v636 = vand.u32 %v104, 4294901760
    %637 = vmatpush1.msra.mxu0 %v636
    %638 = vmatprep.subr.mxu0 0.0
    %v639 = vand.u32 %v106, 4294901760
    %640 = vmatpush1.msra.mxu0 %v639
    %641 = vmatprep.subr.mxu0 0.0
    %642 = vmatpush1.msra.mxu0 0.0
    %643 = vmatprep.subr.mxu0 0.0
    %644 = vmatpush1.msra.mxu0 0.0
    %645 = vmatprep.subr.mxu0 0.0
    %646 = vmatpush1.msra.mxu0 0.0
    %647 = vmatprep.subr.mxu0 0.0
    %648 = vmatpush1.msra.mxu0 0.0
    %649 = vmatprep.subr.mxu0 0.0
    %650 = vmatpush1.msra.mxu0 0.0
    %651 = vmatprep.subr.mxu0 0.0
    %652 = vmatpush1.msra.mxu0 0.0
    %653 = vmatprep.subr.mxu0 0.0
    %654 = vmatpush1.msra.mxu0 0.0
    %655 = vmatprep.subr.mxu0 0.0
    %656 = vmatpush1.msra.mxu0 0.0
    %657 = vmatprep.subr.mxu0 0.0
    %658 = vmatpush1.msra.mxu0 0.0
    %659 = vmatprep.subr.mxu0 0.0
    %660 = vmatpush1.msra.mxu0 0.0
    %661 = vmatprep.subr.mxu0 0.0
    %662 = vmatpush1.msra.mxu0 0.0
    %663 = vmatprep.subr.mxu0 0.0
    %664 = vmatpush1.msra.mxu0 0.0
    %665 = vmatprep.subr.mxu0 0.0
    %666 = vmatpush1.msra.mxu0 0.0
    %667 = vmatprep.subr.mxu0 0.0
    %668 = vmatpush1.msra.mxu0 0.0
    %669 = vmatprep.subr.mxu0 0.0
    %670 = vmatpush1.msra.mxu0 0.0
    %671 = vmatprep.subr.mxu0 0.0
    %672 = vmatpush1.msra.mxu0 0.0
    %673 = vmatprep.subr.mxu0 0.0
    %674 = vmatpush1.msra.mxu0 0.0
    %675 = vmatprep.subr.mxu0 0.0
    %676 = vmatpush1.msra.mxu0 0.0
    %677 = vmatprep.subr.mxu0 0.0
    %678 = vmatpush1.msra.mxu0 0.0
    %679 = vmatprep.subr.mxu0 0.0
    %680 = vmatpush1.msra.mxu0 0.0
    %681 = vmatprep.subr.mxu0 0.0
    %682 = vmatpush1.msra.mxu0 0.0
    %683 = vmatprep.subr.mxu0 0.0
    %684 = vmatpush1.msra.mxu0 0.0
    %685 = vmatprep.subr.mxu0 0.0
    %686 = vmatpush1.msra.mxu0 0.0
    %687 = vmatprep.subr.mxu0 0.0
    %688 = vmatpush1.msra.mxu0 0.0
    %689 = vmatprep.subr.mxu0 0.0
    %690 = vmatpush1.msra.mxu0 0.0
    %691 = vmatprep.subr.mxu0 0.0
    %692 = vmatpush1.msra.mxu0 0.0
    %693 = vmatprep.subr.mxu0 0.0
    %694 = vmatpush1.msra.mxu0 0.0
    %695 = vmatprep.subr.mxu0 0.0
    %696 = vmatpush1.msra.mxu0 0.0
    %697 = vmatprep.subr.mxu0 0.0
    %698 = vmatpush1.msra.mxu0 0.0
    %699 = vmatprep.mubr.f32.mxu0 0.0
    %v700 = vand.u32 %v112, 4294901760
    %701 = vmatmul.mubr.f32.gmra.mrb[0].mxu0 %v700
    %v702 = vpop.f32.mrb[0].mxu0
    %v703 = vadd.f32 %v611, %v702
    %v704 = vpop.f32.mrb[0].mxu0
    %705 = vmatprep.mubr.f32.mxu0 0.0
    %v706 = vand.u32 %v115, 4294901760
    %707 = vmatmul.mubr.f32.gmra.mrb[0].mxu0 %v706
    %v708 = vpop.f32.mrb[0].mxu0
    %v709 = vadd.f32 %v617, %v708
    %v710 = vpop.f32.mrb[0].mxu0
    %711 = vmatprep.mubr.f32.mxu0 0.0
    %v712 = vand.u32 %v118, 4294901760
    %713 = vmatmul.mubr.f32.gmra.mrb[0].mxu0 %v712
    %v714 = vpop.f32.mrb[0].mxu0
    %v715 = vadd.f32 %v623, %v714
    %v716 = vpop.f32.mrb[0].mxu0
    %717 = vmatprep.mubr.f32.mxu0 0.0
    %v718 = vand.u32 %v121, 4294901760
    %719 = vmatmul.mubr.f32.gmra.mrb[0].mxu0 %v718
    %v720 = vpop.f32.mrb[0].mxu0
    %v721 = vadd.f32 %v629, %v720
    %v722 = vpop.f32.mrb[0].mxu0
    %723 = vdwg.mxu0
    %vm724 = vcmask 261120
    %v725 = vsel %vm724, %v703, 0.0
    %726 = vadd.xlane.f32.xlu0 %v725
    %v727 = vpop.xlane.xlu0 %726
    %v728 = vsel %vm724, %v709, 0.0
    %729 = vadd.xlane.f32.xlu0 %v728
    %v730 = vpop.xlane.xlu0 %729
    %v731 = vsel %vm724, %v715, 0.0
    %732 = vadd.xlane.f32.xlu0 %v731
    %v733 = vpop.xlane.xlu0 %732
    %v734 = vsel %vm724, %v721, 0.0
    %735 = vadd.xlane.f32.xlu0 %v734
    %v736 = vpop.xlane.xlu0 %735
    %v737 = vrcp.pop 32.0
    %v738 = vmul.f32 %v727, %v737
    %v739 = vmul.f32 %v730, %v737
    %v740 = vmul.f32 %v733, %v737
    %v741 = vmul.f32 %v736, %v737
    %v742 = vsub.f32 %v703, %v738
    %v743 = vsub.f32 %v709, %v739
    %v744 = vsub.f32 %v715, %v740
    %v745 = vsub.f32 %v721, %v741
    %v746 = vmul.f32 %v742, %v742
    %v747 = vmul.f32 %v743, %v743
    %v748 = vmul.f32 %v744, %v744
    %v749 = vmul.f32 %v745, %v745
    %v750 = vsel %vm724, %v746, 0.0
    %751 = vadd.xlane.f32.xlu0 %v750
    %v752 = vpop.xlane.xlu0 %751
    %v753 = vsel %vm724, %v747, 0.0
    %754 = vadd.xlane.f32.xlu0 %v753
    %v755 = vpop.xlane.xlu0 %754
    %v756 = vsel %vm724, %v748, 0.0
    %757 = vadd.xlane.f32.xlu0 %v756
    %v758 = vpop.xlane.xlu0 %757
    %v759 = vsel %vm724, %v749, 0.0
    %760 = vadd.xlane.f32.xlu0 %v759
    %v761 = vpop.xlane.xlu0 %760
    %v762 = vmul.f32 %v752, %v737
    %v763 = vmul.f32 %v755, %v737
    %v764 = vmul.f32 %v758, %v737
    %v765 = vmul.f32 %v761, %v737
    %v766 = vadd.f32 %v762, 1e-05
    %v767 = vadd.f32 %v763, 1e-05
    %v768 = vadd.f32 %v764, 1e-05
    %v769 = vadd.f32 %v765, 1e-05
    %v770 = vrsqrt.pop %v766
    %v771 = vrsqrt.pop %v767
    %v772 = vrsqrt.pop %v768
    %v773 = vrsqrt.pop %v769
    %v774 = vmul.f32 %v742, %v770
    %v775 = vmul.f32 %v743, %v771
    %v776 = vmul.f32 %v744, %v772
    %v777 = vmul.f32 %v745, %v773
    %v778 = vlaneseq
    %v779 = vshrl.u32 %v778, 7
    %v780 = vsub.s32 0, %v779
    %v781 = vrot.slane %v39, %v780
    %v782 = vmul.f32 %v774, %v781
    %v783 = vmul.f32 %v775, %v781
    %v784 = vmul.f32 %v776, %v781
    %v785 = vmul.f32 %v777, %v781
    %v786 = vlaneseq
    %v787 = vshrl.u32 %v786, 7
    %v788 = vsub.s32 1, %v787
    %v789 = vrot.slane %v39, %v788
    %v790 = vadd.f32 %v782, %v789
    %v791 = vadd.f32 %v783, %v789
    %v792 = vadd.f32 %v784, %v789
    %v793 = vadd.f32 %v785, %v789
    %v794 = vmul.f32 %v790, 0.5
    %v795 = vmul.f32 %v791, 0.5
    %v796 = vmul.f32 %v792, 0.5
    %v797 = vmul.f32 %v793, 0.5
    %v798 = vmul.f32 %v790, 0.70710677
    %v799 = vmul.f32 %v791, 0.70710677
    %v800 = vmul.f32 %v792, 0.70710677
    %v801 = vmul.f32 %v793, 0.70710677
    %v802 = verf.f32.pop %v798
    %v803 = verf.f32.pop %v799
    %v804 = verf.f32.pop %v800
    %v805 = verf.f32.pop %v801
    %v806 = vadd.f32 %v802, 1.0
    %v807 = vadd.f32 %v803, 1.0
    %v808 = vadd.f32 %v804, 1.0
    %v809 = vadd.f32 %v805, 1.0
    %v810 = vmul.f32 %v794, %v806
    %v811 = vmul.f32 %v795, %v807
    %v812 = vmul.f32 %v796, %v808
    %v813 = vmul.f32 %v797, %v809
    %814 = vrot.lane.b32.xlu0 %v810, 32
    %v815 = vpop.permute.xlu0 %814
    %v816 = vsel %vm57, %v815, %v810
    %817 = vrot.lane.b32.xlu0 %v811, 32
    %v818 = vpop.permute.xlu0 %817
    %v819 = vsel %vm57, %v818, %v811
    %820 = vrot.lane.b32.xlu0 %v812, 32
    %v821 = vpop.permute.xlu0 %820
    %v822 = vsel %vm57, %v821, %v812
    %823 = vrot.lane.b32.xlu0 %v813, 32
    %v824 = vpop.permute.xlu0 %823
    %v825 = vsel %vm57, %v824, %v813
    %826 = vrot.lane.b32.xlu0 %v816, 32
    %v827 = vpop.permute.xlu0 %826
    %828 = vrot.lane.b32.xlu0 %v819, 32
    %v829 = vpop.permute.xlu0 %828
    %830 = vrot.lane.b32.xlu0 %v822, 32
    %v831 = vpop.permute.xlu0 %830
    %832 = vrot.lane.b32.xlu0 %v825, 32
    %v833 = vpop.permute.xlu0 %832
    %v834 = vsel %vm57, %v827, %v810
    %v835 = vsel %vm57, %v829, %v811
    %v836 = vsel %vm57, %v831, %v812
    %v837 = vsel %vm57, %v833, %v813
    %v838 = vmul.f32 %v834, %v66
    %v839 = vmul.f32 %v835, %v66
    %v840 = vmul.f32 %v836, %v66
    %v841 = vmul.f32 %v837, %v66
    %v842 = vmul.f32 %v834, %v71
    %v843 = vmul.f32 %v835, %v71
    %v844 = vmul.f32 %v836, %v71
    %v845 = vmul.f32 %v837, %v71
    %850 = vrot.lane.b32.xlu0 %v810, 31
    %v851 = vpop.permute.xlu0 %850
    %852 = vrot.lane.b32.xlu0 %v811, 31
    %v853 = vpop.permute.xlu0 %852
    %854 = vrot.lane.b32.xlu0 %v812, 31
    %v855 = vpop.permute.xlu0 %854
    %856 = vrot.lane.b32.xlu0 %v813, 31
    %v857 = vpop.permute.xlu0 %856
    %862 = vrot.lane.b32.xlu0 %v842, 30
    %v863 = vpop.permute.xlu0 %862
    %864 = vrot.lane.b32.xlu0 %v843, 30
    %v865 = vpop.permute.xlu0 %864
    %866 = vrot.lane.b32.xlu0 %v844, 30
    %v867 = vpop.permute.xlu0 %866
    %868 = vrot.lane.b32.xlu0 %v845, 30
    %v869 = vpop.permute.xlu0 %868
    %870 = vset.pattern.permute.xlu0 1
    %871 = vperm.xlu0 %870, %v33
    %v872 = vpop.permute.xlu0 %871
    %874 = vset.pattern.permute.xlu0 1
    %875 = vperm.xlu0 %874, %v34
    %v876 = vpop.permute.xlu0 %875
    %878 = vset.pattern.permute.xlu0 1
    %879 = vperm.xlu0 %878, %v35
    %v880 = vpop.permute.xlu0 %879
    %882 = vset.pattern.permute.xlu0 1
    %883 = vperm.xlu0 %882, %v36
    %v884 = vpop.permute.xlu0 %883
    %890 = vrot.lane.b32.xlu0 %v838, 97
    %v891 = vpop.permute.xlu0 %890
    %892 = vrot.lane.b32.xlu0 %v839, 97
    %v893 = vpop.permute.xlu0 %892
    %894 = vrot.lane.b32.xlu0 %v840, 97
    %v895 = vpop.permute.xlu0 %894
    %896 = vrot.lane.b32.xlu0 %v841, 97
    %v897 = vpop.permute.xlu0 %896
    %898 = vrot.lane.b32.xlu0 %v851, 97
    %v899 = vpop.permute.xlu0 %898
    %900 = vrot.lane.b32.xlu0 %v853, 97
    %v901 = vpop.permute.xlu0 %900
    %902 = vrot.lane.b32.xlu0 %v855, 97
    %v903 = vpop.permute.xlu0 %902
    %904 = vrot.lane.b32.xlu0 %v857, 97
    %v905 = vpop.permute.xlu0 %904
    %906 = vrot.lane.b32.xlu0 %v863, 97
    %v907 = vpop.permute.xlu0 %906
    %908 = vrot.lane.b32.xlu0 %v865, 97
    %v909 = vpop.permute.xlu0 %908
    %910 = vrot.lane.b32.xlu0 %v867, 97
    %v911 = vpop.permute.xlu0 %910
    %912 = vrot.lane.b32.xlu0 %v869, 97
    %v913 = vpop.permute.xlu0 %912
    %vm926 = vcmask 785408
    %v928 = vsel %vm926, %v44, 0
    %v931 = vsel %vm926, %v45, 0
    %v934 = vsel %vm926, %v46, 0
    %v937 = vsel %vm926, %v47, 0
    %939 = vmatprep.subr.mxu0 0.0
    %v940 = vand.u32 %v891, 4294901760
    %941 = vmatpush1.msra.mxu0 %v940
    %942 = vmatprep.subr.mxu0 0.0
    %v943 = vand.u32 %v893, 4294901760
    %944 = vmatpush1.msra.mxu0 %v943
    %945 = vmatprep.subr.mxu0 0.0
    %v946 = vand.u32 %v895, 4294901760
    %947 = vmatpush1.msra.mxu0 %v946
    %948 = vmatprep.subr.mxu0 0.0
    %v949 = vand.u32 %v897, 4294901760
    %950 = vmatpush1.msra.mxu0 %v949
    %951 = vmatprep.subr.mxu0 0.0
    %v952 = vand.u32 %v899, 4294901760
    %953 = vmatpush1.msra.mxu0 %v952
    %954 = vmatprep.subr.mxu0 0.0
    %v955 = vand.u32 %v901, 4294901760
    %956 = vmatpush1.msra.mxu0 %v955
    %957 = vmatprep.subr.mxu0 0.0
    %v958 = vand.u32 %v903, 4294901760
    %959 = vmatpush1.msra.mxu0 %v958
    %960 = vmatprep.subr.mxu0 0.0
    %v961 = vand.u32 %v905, 4294901760
    %962 = vmatpush1.msra.mxu0 %v961
    %963 = vmatprep.subr.mxu0 0.0
    %v964 = vand.u32 %v907, 4294901760
    %965 = vmatpush1.msra.mxu0 %v964
    %966 = vmatprep.subr.mxu0 0.0
    %v967 = vand.u32 %v909, 4294901760
    %968 = vmatpush1.msra.mxu0 %v967
    %969 = vmatprep.subr.mxu0 0.0
    %v970 = vand.u32 %v911, 4294901760
    %971 = vmatpush1.msra.mxu0 %v970
    %972 = vmatprep.subr.mxu0 0.0
    %v973 = vand.u32 %v913, 4294901760
    %974 = vmatpush1.msra.mxu0 %v973
    %975 = vmatprep.subr.mxu0 0.0
    %976 = vmatpush1.msra.mxu0 0.0
    %977 = vmatprep.subr.mxu0 0.0
    %978 = vmatpush1.msra.mxu0 0.0
    %979 = vmatprep.subr.mxu0 0.0
    %980 = vmatpush1.msra.mxu0 0.0
    %981 = vmatprep.subr.mxu0 0.0
    %982 = vmatpush1.msra.mxu0 0.0
    %983 = vmatprep.subr.mxu0 0.0
    %984 = vmatpush1.msra.mxu0 0.0
    %985 = vmatprep.subr.mxu0 0.0
    %986 = vmatpush1.msra.mxu0 0.0
    %987 = vmatprep.subr.mxu0 0.0
    %988 = vmatpush1.msra.mxu0 0.0
    %989 = vmatprep.subr.mxu0 0.0
    %990 = vmatpush1.msra.mxu0 0.0
    %991 = vmatprep.subr.mxu0 0.0
    %992 = vmatpush1.msra.mxu0 0.0
    %993 = vmatprep.subr.mxu0 0.0
    %994 = vmatpush1.msra.mxu0 0.0
    %995 = vmatprep.subr.mxu0 0.0
    %996 = vmatpush1.msra.mxu0 0.0
    %997 = vmatprep.subr.mxu0 0.0
    %998 = vmatpush1.msra.mxu0 0.0
    %999 = vmatprep.subr.mxu0 0.0
    %1000 = vmatpush1.msra.mxu0 0.0
    %1001 = vmatprep.subr.mxu0 0.0
    %1002 = vmatpush1.msra.mxu0 0.0
    %1003 = vmatprep.subr.mxu0 0.0
    %1004 = vmatpush1.msra.mxu0 0.0
    %1005 = vmatprep.subr.mxu0 0.0
    %1006 = vmatpush1.msra.mxu0 0.0
    %1007 = vmatprep.subr.mxu0 0.0
    %1008 = vmatpush1.msra.mxu0 0.0
    %1009 = vmatprep.subr.mxu0 0.0
    %1010 = vmatpush1.msra.mxu0 0.0
    %1011 = vmatprep.subr.mxu0 0.0
    %1012 = vmatpush1.msra.mxu0 0.0
    %1013 = vmatprep.subr.mxu0 0.0
    %1014 = vmatpush1.msra.mxu0 0.0
    %1015 = vmatprep.mubr.f32.mxu0 0.0
    %v1016 = vand.u32 %v928, 4294901760
    %v1017 = vsub.f32 %v928, %v1016
    %v1018 = vand.u32 %v1017, 4294901760
    %v1019 = vsub.f32 %v1017, %v1018
    %v1020 = vand.u32 %v1019, 4294901760
    %1021 = vmatmul.mubr.f32.gmra.mrb[0].mxu0 %v1020
    %v1022 = vpop.f32.mrb[0].mxu0
    %v1023 = vadd.f32 %v872, %v1022
    %v1024 = vpop.f32.mrb[0].mxu0
    %1025 = vmatprep.mubr.f32.mxu0 0.0
    %v1026 = vand.u32 %v931, 4294901760
    %v1027 = vsub.f32 %v931, %v1026
    %v1028 = vand.u32 %v1027, 4294901760
    %v1029 = vsub.f32 %v1027, %v1028
    %v1030 = vand.u32 %v1029, 4294901760
    %1031 = vmatmul.mubr.f32.gmra.mrb[0].mxu0 %v1030
    %v1032 = vpop.f32.mrb[0].mxu0
    %v1033 = vadd.f32 %v876, %v1032
    %v1034 = vpop.f32.mrb[0].mxu0
    %1035 = vmatprep.mubr.f32.mxu0 0.0
    %v1036 = vand.u32 %v934, 4294901760
    %v1037 = vsub.f32 %v934, %v1036
    %v1038 = vand.u32 %v1037, 4294901760
    %v1039 = vsub.f32 %v1037, %v1038
    %v1040 = vand.u32 %v1039, 4294901760
    %1041 = vmatmul.mubr.f32.gmra.mrb[0].mxu0 %v1040
    %v1042 = vpop.f32.mrb[0].mxu0
    %v1043 = vadd.f32 %v880, %v1042
    %v1044 = vpop.f32.mrb[0].mxu0
    %1045 = vmatprep.mubr.f32.mxu0 0.0
    %v1046 = vand.u32 %v937, 4294901760
    %v1047 = vsub.f32 %v937, %v1046
    %v1048 = vand.u32 %v1047, 4294901760
    %v1049 = vsub.f32 %v1047, %v1048
    %v1050 = vand.u32 %v1049, 4294901760
    %1051 = vmatmul.mubr.f32.gmra.mrb[0].mxu0 %v1050
    %v1052 = vpop.f32.mrb[0].mxu0
    %v1053 = vadd.f32 %v884, %v1052
    %v1054 = vpop.f32.mrb[0].mxu0
    %1055 = vdwg.mxu0
    %1056 = vmatprep.subr.mxu0 0.0
    %v1057 = vand.u32 %v891, 4294901760
    %v1058 = vsub.f32 %v891, %v1057
    %v1059 = vand.u32 %v1058, 4294901760
    %v1060 = vsub.f32 %v1058, %v1059
    %v1061 = vand.u32 %v1060, 4294901760
    %1062 = vmatpush1.msra.mxu0 %v1061
    %1063 = vmatprep.subr.mxu0 0.0
    %v1064 = vand.u32 %v893, 4294901760
    %v1065 = vsub.f32 %v893, %v1064
    %v1066 = vand.u32 %v1065, 4294901760
    %v1067 = vsub.f32 %v1065, %v1066
    %v1068 = vand.u32 %v1067, 4294901760
    %1069 = vmatpush1.msra.mxu0 %v1068
    %1070 = vmatprep.subr.mxu0 0.0
    %v1071 = vand.u32 %v895, 4294901760
    %v1072 = vsub.f32 %v895, %v1071
    %v1073 = vand.u32 %v1072, 4294901760
    %v1074 = vsub.f32 %v1072, %v1073
    %v1075 = vand.u32 %v1074, 4294901760
    %1076 = vmatpush1.msra.mxu0 %v1075
    %1077 = vmatprep.subr.mxu0 0.0
    %v1078 = vand.u32 %v897, 4294901760
    %v1079 = vsub.f32 %v897, %v1078
    %v1080 = vand.u32 %v1079, 4294901760
    %v1081 = vsub.f32 %v1079, %v1080
    %v1082 = vand.u32 %v1081, 4294901760
    %1083 = vmatpush1.msra.mxu0 %v1082
    %1084 = vmatprep.subr.mxu0 0.0
    %v1085 = vand.u32 %v899, 4294901760
    %v1086 = vsub.f32 %v899, %v1085
    %v1087 = vand.u32 %v1086, 4294901760
    %v1088 = vsub.f32 %v1086, %v1087
    %v1089 = vand.u32 %v1088, 4294901760
    %1090 = vmatpush1.msra.mxu0 %v1089
    %1091 = vmatprep.subr.mxu0 0.0
    %v1092 = vand.u32 %v901, 4294901760
    %v1093 = vsub.f32 %v901, %v1092
    %v1094 = vand.u32 %v1093, 4294901760
    %v1095 = vsub.f32 %v1093, %v1094
    %v1096 = vand.u32 %v1095, 4294901760
    %1097 = vmatpush1.msra.mxu0 %v1096
    %1098 = vmatprep.subr.mxu0 0.0
    %v1099 = vand.u32 %v903, 4294901760
    %v1100 = vsub.f32 %v903, %v1099
    %v1101 = vand.u32 %v1100, 4294901760
    %v1102 = vsub.f32 %v1100, %v1101
    %v1103 = vand.u32 %v1102, 4294901760
    %1104 = vmatpush1.msra.mxu0 %v1103
    %1105 = vmatprep.subr.mxu0 0.0
    %v1106 = vand.u32 %v905, 4294901760
    %v1107 = vsub.f32 %v905, %v1106
    %v1108 = vand.u32 %v1107, 4294901760
    %v1109 = vsub.f32 %v1107, %v1108
    %v1110 = vand.u32 %v1109, 4294901760
    %1111 = vmatpush1.msra.mxu0 %v1110
    %1112 = vmatprep.subr.mxu0 0.0
    %v1113 = vand.u32 %v907, 4294901760
    %v1114 = vsub.f32 %v907, %v1113
    %v1115 = vand.u32 %v1114, 4294901760
    %v1116 = vsub.f32 %v1114, %v1115
    %v1117 = vand.u32 %v1116, 4294901760
    %1118 = vmatpush1.msra.mxu0 %v1117
    %1119 = vmatprep.subr.mxu0 0.0
    %v1120 = vand.u32 %v909, 4294901760
    %v1121 = vsub.f32 %v909, %v1120
    %v1122 = vand.u32 %v1121, 4294901760
    %v1123 = vsub.f32 %v1121, %v1122
    %v1124 = vand.u32 %v1123, 4294901760
    %1125 = vmatpush1.msra.mxu0 %v1124
    %1126 = vmatprep.subr.mxu0 0.0
    %v1127 = vand.u32 %v911, 4294901760
    %v1128 = vsub.f32 %v911, %v1127
    %v1129 = vand.u32 %v1128, 4294901760
    %v1130 = vsub.f32 %v1128, %v1129
    %v1131 = vand.u32 %v1130, 4294901760
    %1132 = vmatpush1.msra.mxu0 %v1131
    %1133 = vmatprep.subr.mxu0 0.0
    %v1134 = vand.u32 %v913, 4294901760
    %v1135 = vsub.f32 %v913, %v1134
    %v1136 = vand.u32 %v1135, 4294901760
    %v1137 = vsub.f32 %v1135, %v1136
    %v1138 = vand.u32 %v1137, 4294901760
    %1139 = vmatpush1.msra.mxu0 %v1138
    %1140 = vmatprep.subr.mxu0 0.0
    %1141 = vmatpush1.msra.mxu0 0.0
    %1142 = vmatprep.subr.mxu0 0.0
    %1143 = vmatpush1.msra.mxu0 0.0
    %1144 = vmatprep.subr.mxu0 0.0
    %1145 = vmatpush1.msra.mxu0 0.0
    %1146 = vmatprep.subr.mxu0 0.0
    %1147 = vmatpush1.msra.mxu0 0.0
    %1148 = vmatprep.subr.mxu0 0.0
    %1149 = vmatpush1.msra.mxu0 0.0
    %1150 = vmatprep.subr.mxu0 0.0
    %1151 = vmatpush1.msra.mxu0 0.0
    %1152 = vmatprep.subr.mxu0 0.0
    %1153 = vmatpush1.msra.mxu0 0.0
    %1154 = vmatprep.subr.mxu0 0.0
    %1155 = vmatpush1.msra.mxu0 0.0
    %1156 = vmatprep.subr.mxu0 0.0
    %1157 = vmatpush1.msra.mxu0 0.0
    %1158 = vmatprep.subr.mxu0 0.0
    %1159 = vmatpush1.msra.mxu0 0.0
    %1160 = vmatprep.subr.mxu0 0.0
    %1161 = vmatpush1.msra.mxu0 0.0
    %1162 = vmatprep.subr.mxu0 0.0
    %1163 = vmatpush1.msra.mxu0 0.0
    %1164 = vmatprep.subr.mxu0 0.0
    %1165 = vmatpush1.msra.mxu0 0.0
    %1166 = vmatprep.subr.mxu0 0.0
    %1167 = vmatpush1.msra.mxu0 0.0
    %1168 = vmatprep.subr.mxu0 0.0
    %1169 = vmatpush1.msra.mxu0 0.0
    %1170 = vmatprep.subr.mxu0 0.0
    %1171 = vmatpush1.msra.mxu0 0.0
    %1172 = vmatprep.subr.mxu0 0.0
    %1173 = vmatpush1.msra.mxu0 0.0
    %1174 = vmatprep.subr.mxu0 0.0
    %1175 = vmatpush1.msra.mxu0 0.0
    %1176 = vmatprep.subr.mxu0 0.0
    %1177 = vmatpush1.msra.mxu0 0.0
    %1178 = vmatprep.subr.mxu0 0.0
    %1179 = vmatpush1.msra.mxu0 0.0
    %1180 = vmatprep.mubr.f32.mxu0 0.0
    %v1181 = vand.u32 %v928, 4294901760
    %1182 = vmatmul.mubr.f32.gmra.mrb[0].mxu0 %v1181
    %v1183 = vpop.f32.mrb[0].mxu0
    %v1184 = vadd.f32 %v1023, %v1183
    %v1185 = vpop.f32.mrb[0].mxu0
    %1186 = vmatprep.mubr.f32.mxu0 0.0
    %v1187 = vand.u32 %v931, 4294901760
    %1188 = vmatmul.mubr.f32.gmra.mrb[0].mxu0 %v1187
    %v1189 = vpop.f32.mrb[0].mxu0
    %v1190 = vadd.f32 %v1033, %v1189
    %v1191 = vpop.f32.mrb[0].mxu0
    %1192 = vmatprep.mubr.f32.mxu0 0.0
    %v1193 = vand.u32 %v934, 4294901760
    %1194 = vmatmul.mubr.f32.gmra.mrb[0].mxu0 %v1193
    %v1195 = vpop.f32.mrb[0].mxu0
    %v1196 = vadd.f32 %v1043, %v1195
    %v1197 = vpop.f32.mrb[0].mxu0
    %1198 = vmatprep.mubr.f32.mxu0 0.0
    %v1199 = vand.u32 %v937, 4294901760
    %1200 = vmatmul.mubr.f32.gmra.mrb[0].mxu0 %v1199
    %v1201 = vpop.f32.mrb[0].mxu0
    %v1202 = vadd.f32 %v1053, %v1201
    %v1203 = vpop.f32.mrb[0].mxu0
    %1204 = vdwg.mxu0
    %1205 = vmatprep.subr.mxu0 0.0
    %v1206 = vand.u32 %v891, 4294901760
    %v1207 = vsub.f32 %v891, %v1206
    %1208 = vmatpush1.msra.mxu0 %v1207
    %1209 = vmatprep.subr.mxu0 0.0
    %v1210 = vand.u32 %v893, 4294901760
    %v1211 = vsub.f32 %v893, %v1210
    %1212 = vmatpush1.msra.mxu0 %v1211
    %1213 = vmatprep.subr.mxu0 0.0
    %v1214 = vand.u32 %v895, 4294901760
    %v1215 = vsub.f32 %v895, %v1214
    %1216 = vmatpush1.msra.mxu0 %v1215
    %1217 = vmatprep.subr.mxu0 0.0
    %v1218 = vand.u32 %v897, 4294901760
    %v1219 = vsub.f32 %v897, %v1218
    %1220 = vmatpush1.msra.mxu0 %v1219
    %1221 = vmatprep.subr.mxu0 0.0
    %v1222 = vand.u32 %v899, 4294901760
    %v1223 = vsub.f32 %v899, %v1222
    %1224 = vmatpush1.msra.mxu0 %v1223
    %1225 = vmatprep.subr.mxu0 0.0
    %v1226 = vand.u32 %v901, 4294901760
    %v1227 = vsub.f32 %v901, %v1226
    %1228 = vmatpush1.msra.mxu0 %v1227
    %1229 = vmatprep.subr.mxu0 0.0
    %v1230 = vand.u32 %v903, 4294901760
    %v1231 = vsub.f32 %v903, %v1230
    %1232 = vmatpush1.msra.mxu0 %v1231
    %1233 = vmatprep.subr.mxu0 0.0
    %v1234 = vand.u32 %v905, 4294901760
    %v1235 = vsub.f32 %v905, %v1234
    %1236 = vmatpush1.msra.mxu0 %v1235
    %1237 = vmatprep.subr.mxu0 0.0
    %v1238 = vand.u32 %v907, 4294901760
    %v1239 = vsub.f32 %v907, %v1238
    %1240 = vmatpush1.msra.mxu0 %v1239
    %1241 = vmatprep.subr.mxu0 0.0
    %v1242 = vand.u32 %v909, 4294901760
    %v1243 = vsub.f32 %v909, %v1242
    %1244 = vmatpush1.msra.mxu0 %v1243
    %1245 = vmatprep.subr.mxu0 0.0
    %v1246 = vand.u32 %v911, 4294901760
    %v1247 = vsub.f32 %v911, %v1246
    %1248 = vmatpush1.msra.mxu0 %v1247
    %1249 = vmatprep.subr.mxu0 0.0
    %v1250 = vand.u32 %v913, 4294901760
    %v1251 = vsub.f32 %v913, %v1250
    %1252 = vmatpush1.msra.mxu0 %v1251
    %1253 = vmatprep.subr.mxu0 0.0
    %1254 = vmatpush1.msra.mxu0 0.0
    %1255 = vmatprep.subr.mxu0 0.0
    %1256 = vmatpush1.msra.mxu0 0.0
    %1257 = vmatprep.subr.mxu0 0.0
    %1258 = vmatpush1.msra.mxu0 0.0
    %1259 = vmatprep.subr.mxu0 0.0
    %1260 = vmatpush1.msra.mxu0 0.0
    %1261 = vmatprep.subr.mxu0 0.0
    %1262 = vmatpush1.msra.mxu0 0.0
    %1263 = vmatprep.subr.mxu0 0.0
    %1264 = vmatpush1.msra.mxu0 0.0
    %1265 = vmatprep.subr.mxu0 0.0
    %1266 = vmatpush1.msra.mxu0 0.0
    %1267 = vmatprep.subr.mxu0 0.0
    %1268 = vmatpush1.msra.mxu0 0.0
    %1269 = vmatprep.subr.mxu0 0.0
    %1270 = vmatpush1.msra.mxu0 0.0
    %1271 = vmatprep.subr.mxu0 0.0
    %1272 = vmatpush1.msra.mxu0 0.0
    %1273 = vmatprep.subr.mxu0 0.0
    %1274 = vmatpush1.msra.mxu0 0.0
    %1275 = vmatprep.subr.mxu0 0.0
    %1276 = vmatpush1.msra.mxu0 0.0
    %1277 = vmatprep.subr.mxu0 0.0
    %1278 = vmatpush1.msra.mxu0 0.0
    %1279 = vmatprep.subr.mxu0 0.0
    %1280 = vmatpush1.msra.mxu0 0.0
    %1281 = vmatprep.subr.mxu0 0.0
    %1282 = vmatpush1.msra.mxu0 0.0
    %1283 = vmatprep.subr.mxu0 0.0
    %1284 = vmatpush1.msra.mxu0 0.0
    %1285 = vmatprep.subr.mxu0 0.0
    %1286 = vmatpush1.msra.mxu0 0.0
    %1287 = vmatprep.subr.mxu0 0.0
    %1288 = vmatpush1.msra.mxu0 0.0
    %1289 = vmatprep.subr.mxu0 0.0
    %1290 = vmatpush1.msra.mxu0 0.0
    %1291 = vmatprep.subr.mxu0 0.0
    %1292 = vmatpush1.msra.mxu0 0.0
    %1293 = vmatprep.mubr.f32.mxu0 0.0
    %v1294 = vand.u32 %v928, 4294901760
    %v1295 = vsub.f32 %v928, %v1294
    %1296 = vmatmul.mubr.f32.gmra.mrb[0].mxu0 %v1295
    %v1297 = vpop.f32.mrb[0].mxu0
    %v1298 = vadd.f32 %v1184, %v1297
    %v1299 = vpop.f32.mrb[0].mxu0
    %1300 = vmatprep.mubr.f32.mxu0 0.0
    %v1301 = vand.u32 %v931, 4294901760
    %v1302 = vsub.f32 %v931, %v1301
    %1303 = vmatmul.mubr.f32.gmra.mrb[0].mxu0 %v1302
    %v1304 = vpop.f32.mrb[0].mxu0
    %v1305 = vadd.f32 %v1190, %v1304
    %v1306 = vpop.f32.mrb[0].mxu0
    %1307 = vmatprep.mubr.f32.mxu0 0.0
    %v1308 = vand.u32 %v934, 4294901760
    %v1309 = vsub.f32 %v934, %v1308
    %1310 = vmatmul.mubr.f32.gmra.mrb[0].mxu0 %v1309
    %v1311 = vpop.f32.mrb[0].mxu0
    %v1312 = vadd.f32 %v1196, %v1311
    %v1313 = vpop.f32.mrb[0].mxu0
    %1314 = vmatprep.mubr.f32.mxu0 0.0
    %v1315 = vand.u32 %v937, 4294901760
    %v1316 = vsub.f32 %v937, %v1315
    %1317 = vmatmul.mubr.f32.gmra.mrb[0].mxu0 %v1316
    %v1318 = vpop.f32.mrb[0].mxu0
    %v1319 = vadd.f32 %v1202, %v1318
    %v1320 = vpop.f32.mrb[0].mxu0
    %1321 = vdwg.mxu0
    %1322 = vmatprep.subr.mxu0 0.0
    %v1323 = vand.u32 %v891, 4294901760
    %1324 = vmatpush1.msra.mxu0 %v1323
    %1325 = vmatprep.subr.mxu0 0.0
    %v1326 = vand.u32 %v893, 4294901760
    %1327 = vmatpush1.msra.mxu0 %v1326
    %1328 = vmatprep.subr.mxu0 0.0
    %v1329 = vand.u32 %v895, 4294901760
    %1330 = vmatpush1.msra.mxu0 %v1329
    %1331 = vmatprep.subr.mxu0 0.0
    %v1332 = vand.u32 %v897, 4294901760
    %1333 = vmatpush1.msra.mxu0 %v1332
    %1334 = vmatprep.subr.mxu0 0.0
    %v1335 = vand.u32 %v899, 4294901760
    %1336 = vmatpush1.msra.mxu0 %v1335
    %1337 = vmatprep.subr.mxu0 0.0
    %v1338 = vand.u32 %v901, 4294901760
    %1339 = vmatpush1.msra.mxu0 %v1338
    %1340 = vmatprep.subr.mxu0 0.0
    %v1341 = vand.u32 %v903, 4294901760
    %1342 = vmatpush1.msra.mxu0 %v1341
    %1343 = vmatprep.subr.mxu0 0.0
    %v1344 = vand.u32 %v905, 4294901760
    %1345 = vmatpush1.msra.mxu0 %v1344
    %1346 = vmatprep.subr.mxu0 0.0
    %v1347 = vand.u32 %v907, 4294901760
    %1348 = vmatpush1.msra.mxu0 %v1347
    %1349 = vmatprep.subr.mxu0 0.0
    %v1350 = vand.u32 %v909, 4294901760
    %1351 = vmatpush1.msra.mxu0 %v1350
    %1352 = vmatprep.subr.mxu0 0.0
    %v1353 = vand.u32 %v911, 4294901760
    %1354 = vmatpush1.msra.mxu0 %v1353
    %1355 = vmatprep.subr.mxu0 0.0
    %v1356 = vand.u32 %v913, 4294901760
    %1357 = vmatpush1.msra.mxu0 %v1356
    %1358 = vmatprep.subr.mxu0 0.0
    %1359 = vmatpush1.msra.mxu0 0.0
    %1360 = vmatprep.subr.mxu0 0.0
    %1361 = vmatpush1.msra.mxu0 0.0
    %1362 = vmatprep.subr.mxu0 0.0
    %1363 = vmatpush1.msra.mxu0 0.0
    %1364 = vmatprep.subr.mxu0 0.0
    %1365 = vmatpush1.msra.mxu0 0.0
    %1366 = vmatprep.subr.mxu0 0.0
    %1367 = vmatpush1.msra.mxu0 0.0
    %1368 = vmatprep.subr.mxu0 0.0
    %1369 = vmatpush1.msra.mxu0 0.0
    %1370 = vmatprep.subr.mxu0 0.0
    %1371 = vmatpush1.msra.mxu0 0.0
    %1372 = vmatprep.subr.mxu0 0.0
    %1373 = vmatpush1.msra.mxu0 0.0
    %1374 = vmatprep.subr.mxu0 0.0
    %1375 = vmatpush1.msra.mxu0 0.0
    %1376 = vmatprep.subr.mxu0 0.0
    %1377 = vmatpush1.msra.mxu0 0.0
    %1378 = vmatprep.subr.mxu0 0.0
    %1379 = vmatpush1.msra.mxu0 0.0
    %1380 = vmatprep.subr.mxu0 0.0
    %1381 = vmatpush1.msra.mxu0 0.0
    %1382 = vmatprep.subr.mxu0 0.0
    %1383 = vmatpush1.msra.mxu0 0.0
    %1384 = vmatprep.subr.mxu0 0.0
    %1385 = vmatpush1.msra.mxu0 0.0
    %1386 = vmatprep.subr.mxu0 0.0
    %1387 = vmatpush1.msra.mxu0 0.0
    %1388 = vmatprep.subr.mxu0 0.0
    %1389 = vmatpush1.msra.mxu0 0.0
    %1390 = vmatprep.subr.mxu0 0.0
    %1391 = vmatpush1.msra.mxu0 0.0
    %1392 = vmatprep.subr.mxu0 0.0
    %1393 = vmatpush1.msra.mxu0 0.0
    %1394 = vmatprep.subr.mxu0 0.0
    %1395 = vmatpush1.msra.mxu0 0.0
    %1396 = vmatprep.subr.mxu0 0.0
    %1397 = vmatpush1.msra.mxu0 0.0
    %1398 = vmatprep.mubr.f32.mxu0 0.0
    %v1399 = vand.u32 %v928, 4294901760
    %v1400 = vsub.f32 %v928, %v1399
    %v1401 = vand.u32 %v1400, 4294901760
    %1402 = vmatmul.mubr.f32.gmra.mrb[0].mxu0 %v1401
    %v1403 = vpop.f32.mrb[0].mxu0
    %v1404 = vadd.f32 %v1298, %v1403
    %v1405 = vpop.f32.mrb[0].mxu0
    %1406 = vmatprep.mubr.f32.mxu0 0.0
    %v1407 = vand.u32 %v931, 4294901760
    %v1408 = vsub.f32 %v931, %v1407
    %v1409 = vand.u32 %v1408, 4294901760
    %1410 = vmatmul.mubr.f32.gmra.mrb[0].mxu0 %v1409
    %v1411 = vpop.f32.mrb[0].mxu0
    %v1412 = vadd.f32 %v1305, %v1411
    %v1413 = vpop.f32.mrb[0].mxu0
    %1414 = vmatprep.mubr.f32.mxu0 0.0
    %v1415 = vand.u32 %v934, 4294901760
    %v1416 = vsub.f32 %v934, %v1415
    %v1417 = vand.u32 %v1416, 4294901760
    %1418 = vmatmul.mubr.f32.gmra.mrb[0].mxu0 %v1417
    %v1419 = vpop.f32.mrb[0].mxu0
    %v1420 = vadd.f32 %v1312, %v1419
    %v1421 = vpop.f32.mrb[0].mxu0
    %1422 = vmatprep.mubr.f32.mxu0 0.0
    %v1423 = vand.u32 %v937, 4294901760
    %v1424 = vsub.f32 %v937, %v1423
    %v1425 = vand.u32 %v1424, 4294901760
    %1426 = vmatmul.mubr.f32.gmra.mrb[0].mxu0 %v1425
    %v1427 = vpop.f32.mrb[0].mxu0
    %v1428 = vadd.f32 %v1319, %v1427
    %v1429 = vpop.f32.mrb[0].mxu0
    %1430 = vdwg.mxu0
    %1431 = vmatprep.subr.mxu0 0.0
    %v1432 = vand.u32 %v891, 4294901760
    %v1433 = vsub.f32 %v891, %v1432
    %v1434 = vand.u32 %v1433, 4294901760
    %1435 = vmatpush1.msra.mxu0 %v1434
    %1436 = vmatprep.subr.mxu0 0.0
    %v1437 = vand.u32 %v893, 4294901760
    %v1438 = vsub.f32 %v893, %v1437
    %v1439 = vand.u32 %v1438, 4294901760
    %1440 = vmatpush1.msra.mxu0 %v1439
    %1441 = vmatprep.subr.mxu0 0.0
    %v1442 = vand.u32 %v895, 4294901760
    %v1443 = vsub.f32 %v895, %v1442
    %v1444 = vand.u32 %v1443, 4294901760
    %1445 = vmatpush1.msra.mxu0 %v1444
    %1446 = vmatprep.subr.mxu0 0.0
    %v1447 = vand.u32 %v897, 4294901760
    %v1448 = vsub.f32 %v897, %v1447
    %v1449 = vand.u32 %v1448, 4294901760
    %1450 = vmatpush1.msra.mxu0 %v1449
    %1451 = vmatprep.subr.mxu0 0.0
    %v1452 = vand.u32 %v899, 4294901760
    %v1453 = vsub.f32 %v899, %v1452
    %v1454 = vand.u32 %v1453, 4294901760
    %1455 = vmatpush1.msra.mxu0 %v1454
    %1456 = vmatprep.subr.mxu0 0.0
    %v1457 = vand.u32 %v901, 4294901760
    %v1458 = vsub.f32 %v901, %v1457
    %v1459 = vand.u32 %v1458, 4294901760
    %1460 = vmatpush1.msra.mxu0 %v1459
    %1461 = vmatprep.subr.mxu0 0.0
    %v1462 = vand.u32 %v903, 4294901760
    %v1463 = vsub.f32 %v903, %v1462
    %v1464 = vand.u32 %v1463, 4294901760
    %1465 = vmatpush1.msra.mxu0 %v1464
    %1466 = vmatprep.subr.mxu0 0.0
    %v1467 = vand.u32 %v905, 4294901760
    %v1468 = vsub.f32 %v905, %v1467
    %v1469 = vand.u32 %v1468, 4294901760
    %1470 = vmatpush1.msra.mxu0 %v1469
    %1471 = vmatprep.subr.mxu0 0.0
    %v1472 = vand.u32 %v907, 4294901760
    %v1473 = vsub.f32 %v907, %v1472
    %v1474 = vand.u32 %v1473, 4294901760
    %1475 = vmatpush1.msra.mxu0 %v1474
    %1476 = vmatprep.subr.mxu0 0.0
    %v1477 = vand.u32 %v909, 4294901760
    %v1478 = vsub.f32 %v909, %v1477
    %v1479 = vand.u32 %v1478, 4294901760
    %1480 = vmatpush1.msra.mxu0 %v1479
    %1481 = vmatprep.subr.mxu0 0.0
    %v1482 = vand.u32 %v911, 4294901760
    %v1483 = vsub.f32 %v911, %v1482
    %v1484 = vand.u32 %v1483, 4294901760
    %1485 = vmatpush1.msra.mxu0 %v1484
    %1486 = vmatprep.subr.mxu0 0.0
    %v1487 = vand.u32 %v913, 4294901760
    %v1488 = vsub.f32 %v913, %v1487
    %v1489 = vand.u32 %v1488, 4294901760
    %1490 = vmatpush1.msra.mxu0 %v1489
    %1491 = vmatprep.subr.mxu0 0.0
    %1492 = vmatpush1.msra.mxu0 0.0
    %1493 = vmatprep.subr.mxu0 0.0
    %1494 = vmatpush1.msra.mxu0 0.0
    %1495 = vmatprep.subr.mxu0 0.0
    %1496 = vmatpush1.msra.mxu0 0.0
    %1497 = vmatprep.subr.mxu0 0.0
    %1498 = vmatpush1.msra.mxu0 0.0
    %1499 = vmatprep.subr.mxu0 0.0
    %1500 = vmatpush1.msra.mxu0 0.0
    %1501 = vmatprep.subr.mxu0 0.0
    %1502 = vmatpush1.msra.mxu0 0.0
    %1503 = vmatprep.subr.mxu0 0.0
    %1504 = vmatpush1.msra.mxu0 0.0
    %1505 = vmatprep.subr.mxu0 0.0
    %1506 = vmatpush1.msra.mxu0 0.0
    %1507 = vmatprep.subr.mxu0 0.0
    %1508 = vmatpush1.msra.mxu0 0.0
    %1509 = vmatprep.subr.mxu0 0.0
    %1510 = vmatpush1.msra.mxu0 0.0
    %1511 = vmatprep.subr.mxu0 0.0
    %1512 = vmatpush1.msra.mxu0 0.0
    %1513 = vmatprep.subr.mxu0 0.0
    %1514 = vmatpush1.msra.mxu0 0.0
    %1515 = vmatprep.subr.mxu0 0.0
    %1516 = vmatpush1.msra.mxu0 0.0
    %1517 = vmatprep.subr.mxu0 0.0
    %1518 = vmatpush1.msra.mxu0 0.0
    %1519 = vmatprep.subr.mxu0 0.0
    %1520 = vmatpush1.msra.mxu0 0.0
    %1521 = vmatprep.subr.mxu0 0.0
    %1522 = vmatpush1.msra.mxu0 0.0
    %1523 = vmatprep.subr.mxu0 0.0
    %1524 = vmatpush1.msra.mxu0 0.0
    %1525 = vmatprep.subr.mxu0 0.0
    %1526 = vmatpush1.msra.mxu0 0.0
    %1527 = vmatprep.subr.mxu0 0.0
    %1528 = vmatpush1.msra.mxu0 0.0
    %1529 = vmatprep.subr.mxu0 0.0
    %1530 = vmatpush1.msra.mxu0 0.0
    %1531 = vmatprep.mubr.f32.mxu0 0.0
    %v1532 = vand.u32 %v928, 4294901760
    %1533 = vmatmul.mubr.f32.gmra.mrb[0].mxu0 %v1532
    %v1534 = vpop.f32.mrb[0].mxu0
    %v1535 = vadd.f32 %v1404, %v1534
    %v1536 = vpop.f32.mrb[0].mxu0
    %1537 = vmatprep.mubr.f32.mxu0 0.0
    %v1538 = vand.u32 %v931, 4294901760
    %1539 = vmatmul.mubr.f32.gmra.mrb[0].mxu0 %v1538
    %v1540 = vpop.f32.mrb[0].mxu0
    %v1541 = vadd.f32 %v1412, %v1540
    %v1542 = vpop.f32.mrb[0].mxu0
    %1543 = vmatprep.mubr.f32.mxu0 0.0
    %v1544 = vand.u32 %v934, 4294901760
    %1545 = vmatmul.mubr.f32.gmra.mrb[0].mxu0 %v1544
    %v1546 = vpop.f32.mrb[0].mxu0
    %v1547 = vadd.f32 %v1420, %v1546
    %v1548 = vpop.f32.mrb[0].mxu0
    %1549 = vmatprep.mubr.f32.mxu0 0.0
    %v1550 = vand.u32 %v937, 4294901760
    %1551 = vmatmul.mubr.f32.gmra.mrb[0].mxu0 %v1550
    %v1552 = vpop.f32.mrb[0].mxu0
    %v1553 = vadd.f32 %v1428, %v1552
    %v1554 = vpop.f32.mrb[0].mxu0
    %1555 = vdwg.mxu0
    %1556 = vmatprep.subr.mxu0 0.0
    %v1557 = vand.u32 %v891, 4294901760
    %1558 = vmatpush1.msra.mxu0 %v1557
    %1559 = vmatprep.subr.mxu0 0.0
    %v1560 = vand.u32 %v893, 4294901760
    %1561 = vmatpush1.msra.mxu0 %v1560
    %1562 = vmatprep.subr.mxu0 0.0
    %v1563 = vand.u32 %v895, 4294901760
    %1564 = vmatpush1.msra.mxu0 %v1563
    %1565 = vmatprep.subr.mxu0 0.0
    %v1566 = vand.u32 %v897, 4294901760
    %1567 = vmatpush1.msra.mxu0 %v1566
    %1568 = vmatprep.subr.mxu0 0.0
    %v1569 = vand.u32 %v899, 4294901760
    %1570 = vmatpush1.msra.mxu0 %v1569
    %1571 = vmatprep.subr.mxu0 0.0
    %v1572 = vand.u32 %v901, 4294901760
    %1573 = vmatpush1.msra.mxu0 %v1572
    %1574 = vmatprep.subr.mxu0 0.0
    %v1575 = vand.u32 %v903, 4294901760
    %1576 = vmatpush1.msra.mxu0 %v1575
    %1577 = vmatprep.subr.mxu0 0.0
    %v1578 = vand.u32 %v905, 4294901760
    %1579 = vmatpush1.msra.mxu0 %v1578
    %1580 = vmatprep.subr.mxu0 0.0
    %v1581 = vand.u32 %v907, 4294901760
    %1582 = vmatpush1.msra.mxu0 %v1581
    %1583 = vmatprep.subr.mxu0 0.0
    %v1584 = vand.u32 %v909, 4294901760
    %1585 = vmatpush1.msra.mxu0 %v1584
    %1586 = vmatprep.subr.mxu0 0.0
    %v1587 = vand.u32 %v911, 4294901760
    %1588 = vmatpush1.msra.mxu0 %v1587
    %1589 = vmatprep.subr.mxu0 0.0
    %v1590 = vand.u32 %v913, 4294901760
    %1591 = vmatpush1.msra.mxu0 %v1590
    %1592 = vmatprep.subr.mxu0 0.0
    %1593 = vmatpush1.msra.mxu0 0.0
    %1594 = vmatprep.subr.mxu0 0.0
    %1595 = vmatpush1.msra.mxu0 0.0
    %1596 = vmatprep.subr.mxu0 0.0
    %1597 = vmatpush1.msra.mxu0 0.0
    %1598 = vmatprep.subr.mxu0 0.0
    %1599 = vmatpush1.msra.mxu0 0.0
    %1600 = vmatprep.subr.mxu0 0.0
    %1601 = vmatpush1.msra.mxu0 0.0
    %1602 = vmatprep.subr.mxu0 0.0
    %1603 = vmatpush1.msra.mxu0 0.0
    %1604 = vmatprep.subr.mxu0 0.0
    %1605 = vmatpush1.msra.mxu0 0.0
    %1606 = vmatprep.subr.mxu0 0.0
    %1607 = vmatpush1.msra.mxu0 0.0
    %1608 = vmatprep.subr.mxu0 0.0
    %1609 = vmatpush1.msra.mxu0 0.0
    %1610 = vmatprep.subr.mxu0 0.0
    %1611 = vmatpush1.msra.mxu0 0.0
    %1612 = vmatprep.subr.mxu0 0.0
    %1613 = vmatpush1.msra.mxu0 0.0
    %1614 = vmatprep.subr.mxu0 0.0
    %1615 = vmatpush1.msra.mxu0 0.0
    %1616 = vmatprep.subr.mxu0 0.0
    %1617 = vmatpush1.msra.mxu0 0.0
    %1618 = vmatprep.subr.mxu0 0.0
    %1619 = vmatpush1.msra.mxu0 0.0
    %1620 = vmatprep.subr.mxu0 0.0
    %1621 = vmatpush1.msra.mxu0 0.0
    %1622 = vmatprep.subr.mxu0 0.0
    %1623 = vmatpush1.msra.mxu0 0.0
    %1624 = vmatprep.subr.mxu0 0.0
    %1625 = vmatpush1.msra.mxu0 0.0
    %1626 = vmatprep.subr.mxu0 0.0
    %1627 = vmatpush1.msra.mxu0 0.0
    %1628 = vmatprep.subr.mxu0 0.0
    %1629 = vmatpush1.msra.mxu0 0.0
    %1630 = vmatprep.subr.mxu0 0.0
    %1631 = vmatpush1.msra.mxu0 0.0
    %1632 = vmatprep.mubr.f32.mxu0 0.0
    %v1633 = vand.u32 %v928, 4294901760
    %1634 = vmatmul.mubr.f32.gmra.mrb[0].mxu0 %v1633
    %v1635 = vpop.f32.mrb[0].mxu0
    %v1636 = vadd.f32 %v1535, %v1635
    %v1637 = vpop.f32.mrb[0].mxu0
    %1638 = vmatprep.mubr.f32.mxu0 0.0
    %v1639 = vand.u32 %v931, 4294901760
    %1640 = vmatmul.mubr.f32.gmra.mrb[0].mxu0 %v1639
    %v1641 = vpop.f32.mrb[0].mxu0
    %v1642 = vadd.f32 %v1541, %v1641
    %v1643 = vpop.f32.mrb[0].mxu0
    %1644 = vmatprep.mubr.f32.mxu0 0.0
    %v1645 = vand.u32 %v934, 4294901760
    %1646 = vmatmul.mubr.f32.gmra.mrb[0].mxu0 %v1645
    %v1647 = vpop.f32.mrb[0].mxu0
    %v1648 = vadd.f32 %v1547, %v1647
    %v1649 = vpop.f32.mrb[0].mxu0
    %1650 = vmatprep.mubr.f32.mxu0 0.0
    %v1651 = vand.u32 %v937, 4294901760
    %1652 = vmatmul.mubr.f32.gmra.mrb[0].mxu0 %v1651
    %v1653 = vpop.f32.mrb[0].mxu0
    %v1654 = vadd.f32 %v1553, %v1653
    %v1655 = vpop.f32.mrb[0].mxu0
    %1656 = vdwg.mxu0
    %1657 = vset.pattern.permute.xlu0 2
    %1658 = vperm.xlu0 %1657, %v33
    %v1659 = vpop.permute.xlu0 %1658
    %1661 = vset.pattern.permute.xlu0 2
    %1662 = vperm.xlu0 %1661, %v34
    %v1663 = vpop.permute.xlu0 %1662
    %1665 = vset.pattern.permute.xlu0 2
    %1666 = vperm.xlu0 %1665, %v35
    %v1667 = vpop.permute.xlu0 %1666
    %1669 = vset.pattern.permute.xlu0 2
    %1670 = vperm.xlu0 %1669, %v36
    %v1671 = vpop.permute.xlu0 %1670
    %v1673 = vmul.f32 %v1636, %v1659
    %v1674 = vmul.f32 %v1642, %v1663
    %v1675 = vmul.f32 %v1648, %v1667
    %v1676 = vmul.f32 %v1654, %v1671
    %1677 = vst.msk [vmem:[#allocation2] sm:$0xff] %vm724, %v1673
    %1678 = vst.msk [vmem:[#allocation2 + $0x8] sm:$0xff] %vm724, %v1674
    %1679 = vst.msk [vmem:[#allocation2 + $0x10] sm:$0xff] %vm724, %v1675
    %1680 = vst.msk [vmem:[#allocation2 + $0x18] sm:$0xff] %vm724, %v1676
    %s1681 = scalar_lea.vmem %s0, 8
    %v1682 = vld [vmem:[%s1681] sm:$0xff]
    %1683 = vrot.lane.b32.xlu0 %v1682, 32
    %v1684 = vpop.permute.xlu0 %1683
    %v1685 = vsel %vm57, %v1684, %v1682
    %1686 = vrot.lane.b32.xlu0 %v1685, 32
    %v1687 = vpop.permute.xlu0 %1686
    %v1688 = vsel %vm57, %v1687, %v1682
    %v1689 = vmul.f32 %v1688, %v66
    %v1690 = vmul.f32 %v1688, %v71
    %1692 = vrot.lane.b32.xlu0 %v1682, 31
    %v1693 = vpop.permute.xlu0 %1692
    %1695 = vrot.lane.b32.xlu0 %v1690, 30
    %v1696 = vpop.permute.xlu0 %1695
    %1698 = vrot.lane.b32.xlu0 %v1689, 97
    %v1699 = vpop.permute.xlu0 %1698
    %1700 = vrot.lane.b32.xlu0 %v1693, 97
    %v1701 = vpop.permute.xlu0 %1700
    %1702 = vrot.lane.b32.xlu0 %v1696, 97
    %v1703 = vpop.permute.xlu0 %1702
    %1707 = vmatprep.subr.mxu0 0.0
    %v1708 = vand.u32 %v1699, 4294901760
    %1709 = vmatpush1.msra.mxu0 %v1708
    %1710 = vmatprep.subr.mxu0 0.0
    %v1711 = vand.u32 %v1701, 4294901760
    %1712 = vmatpush1.msra.mxu0 %v1711
    %1713 = vmatprep.subr.mxu0 0.0
    %v1714 = vand.u32 %v1703, 4294901760
    %1715 = vmatpush1.msra.mxu0 %v1714
    %1716 = vmatprep.subr.mxu0 0.0
    %1717 = vmatpush1.msra.mxu0 0.0
    %1718 = vmatprep.subr.mxu0 0.0
    %1719 = vmatpush1.msra.mxu0 0.0
    %1720 = vmatprep.subr.mxu0 0.0
    %1721 = vmatpush1.msra.mxu0 0.0
    %1722 = vmatprep.subr.mxu0 0.0
    %1723 = vmatpush1.msra.mxu0 0.0
    %1724 = vmatprep.subr.mxu0 0.0
    %1725 = vmatpush1.msra.mxu0 0.0
    %1726 = vmatprep.subr.mxu0 0.0
    %1727 = vmatpush1.msra.mxu0 0.0
    %1728 = vmatprep.subr.mxu0 0.0
    %1729 = vmatpush1.msra.mxu0 0.0
    %1730 = vmatprep.subr.mxu0 0.0
    %1731 = vmatpush1.msra.mxu0 0.0
    %1732 = vmatprep.subr.mxu0 0.0
    %1733 = vmatpush1.msra.mxu0 0.0
    %1734 = vmatprep.subr.mxu0 0.0
    %1735 = vmatpush1.msra.mxu0 0.0
    %1736 = vmatprep.subr.mxu0 0.0
    %1737 = vmatpush1.msra.mxu0 0.0
    %1738 = vmatprep.subr.mxu0 0.0
    %1739 = vmatpush1.msra.mxu0 0.0
    %1740 = vmatprep.subr.mxu0 0.0
    %1741 = vmatpush1.msra.mxu0 0.0
    %1742 = vmatprep.subr.mxu0 0.0
    %1743 = vmatpush1.msra.mxu0 0.0
    %1744 = vmatprep.subr.mxu0 0.0
    %1745 = vmatpush1.msra.mxu0 0.0
    %1746 = vmatprep.subr.mxu0 0.0
    %1747 = vmatpush1.msra.mxu0 0.0
    %1748 = vmatprep.subr.mxu0 0.0
    %1749 = vmatpush1.msra.mxu0 0.0
    %1750 = vmatprep.subr.mxu0 0.0
    %1751 = vmatpush1.msra.mxu0 0.0
    %1752 = vmatprep.subr.mxu0 0.0
    %1753 = vmatpush1.msra.mxu0 0.0
    %1754 = vmatprep.subr.mxu0 0.0
    %1755 = vmatpush1.msra.mxu0 0.0
    %1756 = vmatprep.subr.mxu0 0.0
    %1757 = vmatpush1.msra.mxu0 0.0
    %1758 = vmatprep.subr.mxu0 0.0
    %1759 = vmatpush1.msra.mxu0 0.0
    %1760 = vmatprep.subr.mxu0 0.0
    %1761 = vmatpush1.msra.mxu0 0.0
    %1762 = vmatprep.subr.mxu0 0.0
    %1763 = vmatpush1.msra.mxu0 0.0
    %1764 = vmatprep.subr.mxu0 0.0
    %1765 = vmatpush1.msra.mxu0 0.0
    %1766 = vmatprep.subr.mxu0 0.0
    %1767 = vmatpush1.msra.mxu0 0.0
    %1768 = vmatprep.subr.mxu0 0.0
    %1769 = vmatpush1.msra.mxu0 0.0
    %1770 = vmatprep.subr.mxu0 0.0
    %1771 = vmatpush1.msra.mxu0 0.0
    %1772 = vmatprep.subr.mxu0 0.0
    %1773 = vmatpush1.msra.mxu0 0.0
    %1774 = vmatprep.mubr.f32.mxu0 0.0
    %v1775 = vand.u32 %v112, 4294901760
    %v1776 = vsub.f32 %v112, %v1775
    %v1777 = vand.u32 %v1776, 4294901760
    %v1778 = vsub.f32 %v1776, %v1777
    %v1779 = vand.u32 %v1778, 4294901760
    %1780 = vmatmul.mubr.f32.gmra.mrb[0].mxu0 %v1779
    %v1781 = vpop.f32.mrb[0].mxu0
    %v1782 = vadd.f32 %v83, %v1781
    %v1783 = vpop.f32.mrb[0].mxu0
    %1784 = vmatprep.mubr.f32.mxu0 0.0
    %v1785 = vand.u32 %v115, 4294901760
    %v1786 = vsub.f32 %v115, %v1785
    %v1787 = vand.u32 %v1786, 4294901760
    %v1788 = vsub.f32 %v1786, %v1787
    %v1789 = vand.u32 %v1788, 4294901760
    %1790 = vmatmul.mubr.f32.gmra.mrb[0].mxu0 %v1789
    %v1791 = vpop.f32.mrb[0].mxu0
    %v1792 = vadd.f32 %v88, %v1791
    %v1793 = vpop.f32.mrb[0].mxu0
    %1794 = vmatprep.mubr.f32.mxu0 0.0
    %v1795 = vand.u32 %v118, 4294901760
    %v1796 = vsub.f32 %v118, %v1795
    %v1797 = vand.u32 %v1796, 4294901760
    %v1798 = vsub.f32 %v1796, %v1797
    %v1799 = vand.u32 %v1798, 4294901760
    %1800 = vmatmul.mubr.f32.gmra.mrb[0].mxu0 %v1799
    %v1801 = vpop.f32.mrb[0].mxu0
    %v1802 = vadd.f32 %v93, %v1801
    %v1803 = vpop.f32.mrb[0].mxu0
    %1804 = vmatprep.mubr.f32.mxu0 0.0
    %v1805 = vand.u32 %v121, 4294901760
    %v1806 = vsub.f32 %v121, %v1805
    %v1807 = vand.u32 %v1806, 4294901760
    %v1808 = vsub.f32 %v1806, %v1807
    %v1809 = vand.u32 %v1808, 4294901760
    %1810 = vmatmul.mubr.f32.gmra.mrb[0].mxu0 %v1809
    %v1811 = vpop.f32.mrb[0].mxu0
    %v1812 = vadd.f32 %v98, %v1811
    %v1813 = vpop.f32.mrb[0].mxu0
    %1814 = vdwg.mxu0
    %1815 = vmatprep.subr.mxu0 0.0
    %v1816 = vand.u32 %v1699, 4294901760
    %v1817 = vsub.f32 %v1699, %v1816
    %v1818 = vand.u32 %v1817, 4294901760
    %v1819 = vsub.f32 %v1817, %v1818
    %v1820 = vand.u32 %v1819, 4294901760
    %1821 = vmatpush1.msra.mxu0 %v1820
    %1822 = vmatprep.subr.mxu0 0.0
    %v1823 = vand.u32 %v1701, 4294901760
    %v1824 = vsub.f32 %v1701, %v1823
    %v1825 = vand.u32 %v1824, 4294901760
    %v1826 = vsub.f32 %v1824, %v1825
    %v1827 = vand.u32 %v1826, 4294901760
    %1828 = vmatpush1.msra.mxu0 %v1827
    %1829 = vmatprep.subr.mxu0 0.0
    %v1830 = vand.u32 %v1703, 4294901760
    %v1831 = vsub.f32 %v1703, %v1830
    %v1832 = vand.u32 %v1831, 4294901760
    %v1833 = vsub.f32 %v1831, %v1832
    %v1834 = vand.u32 %v1833, 4294901760
    %1835 = vmatpush1.msra.mxu0 %v1834
    %1836 = vmatprep.subr.mxu0 0.0
    %1837 = vmatpush1.msra.mxu0 0.0
    %1838 = vmatprep.subr.mxu0 0.0
    %1839 = vmatpush1.msra.mxu0 0.0
    %1840 = vmatprep.subr.mxu0 0.0
    %1841 = vmatpush1.msra.mxu0 0.0
    %1842 = vmatprep.subr.mxu0 0.0
    %1843 = vmatpush1.msra.mxu0 0.0
    %1844 = vmatprep.subr.mxu0 0.0
    %1845 = vmatpush1.msra.mxu0 0.0
    %1846 = vmatprep.subr.mxu0 0.0
    %1847 = vmatpush1.msra.mxu0 0.0
    %1848 = vmatprep.subr.mxu0 0.0
    %1849 = vmatpush1.msra.mxu0 0.0
    %1850 = vmatprep.subr.mxu0 0.0
    %1851 = vmatpush1.msra.mxu0 0.0
    %1852 = vmatprep.subr.mxu0 0.0
    %1853 = vmatpush1.msra.mxu0 0.0
    %1854 = vmatprep.subr.mxu0 0.0
    %1855 = vmatpush1.msra.mxu0 0.0
    %1856 = vmatprep.subr.mxu0 0.0
    %1857 = vmatpush1.msra.mxu0 0.0
    %1858 = vmatprep.subr.mxu0 0.0
    %1859 = vmatpush1.msra.mxu0 0.0
    %1860 = vmatprep.subr.mxu0 0.0
    %1861 = vmatpush1.msra.mxu0 0.0
    %1862 = vmatprep.subr.mxu0 0.0
    %1863 = vmatpush1.msra.mxu0 0.0
    %1864 = vmatprep.subr.mxu0 0.0
    %1865 = vmatpush1.msra.mxu0 0.0
    %1866 = vmatprep.subr.mxu0 0.0
    %1867 = vmatpush1.msra.mxu0 0.0
    %1868 = vmatprep.subr.mxu0 0.0
    %1869 = vmatpush1.msra.mxu0 0.0
    %1870 = vmatprep.subr.mxu0 0.0
    %1871 = vmatpush1.msra.mxu0 0.0
    %1872 = vmatprep.subr.mxu0 0.0
    %1873 = vmatpush1.msra.mxu0 0.0
    %1874 = vmatprep.subr.mxu0 0.0
    %1875 = vmatpush1.msra.mxu0 0.0
    %1876 = vmatprep.subr.mxu0 0.0
    %1877 = vmatpush1.msra.mxu0 0.0
    %1878 = vmatprep.subr.mxu0 0.0
    %1879 = vmatpush1.msra.mxu0 0.0
    %1880 = vmatprep.subr.mxu0 0.0
    %1881 = vmatpush1.msra.mxu0 0.0
    %1882 = vmatprep.subr.mxu0 0.0
    %1883 = vmatpush1.msra.mxu0 0.0
    %1884 = vmatprep.subr.mxu0 0.0
    %1885 = vmatpush1.msra.mxu0 0.0
    %1886 = vmatprep.subr.mxu0 0.0
    %1887 = vmatpush1.msra.mxu0 0.0
    %1888 = vmatprep.subr.mxu0 0.0
    %1889 = vmatpush1.msra.mxu0 0.0
    %1890 = vmatprep.subr.mxu0 0.0
    %1891 = vmatpush1.msra.mxu0 0.0
    %1892 = vmatprep.subr.mxu0 0.0
    %1893 = vmatpush1.msra.mxu0 0.0
    %1894 = vmatprep.mubr.f32.mxu0 0.0
    %v1895 = vand.u32 %v112, 4294901760
    %1896 = vmatmul.mubr.f32.gmra.mrb[0].mxu0 %v1895
    %v1897 = vpop.f32.mrb[0].mxu0
    %v1898 = vadd.f32 %v1782, %v1897
    %v1899 = vpop.f32.mrb[0].mxu0
    %1900 = vmatprep.mubr.f32.mxu0 0.0
    %v1901 = vand.u32 %v115, 4294901760
    %1902 = vmatmul.mubr.f32.gmra.mrb[0].mxu0 %v1901
    %v1903 = vpop.f32.mrb[0].mxu0
    %v1904 = vadd.f32 %v1792, %v1903
    %v1905 = vpop.f32.mrb[0].mxu0
    %1906 = vmatprep.mubr.f32.mxu0 0.0
    %v1907 = vand.u32 %v118, 4294901760
    %1908 = vmatmul.mubr.f32.gmra.mrb[0].mxu0 %v1907
    %v1909 = vpop.f32.mrb[0].mxu0
    %v1910 = vadd.f32 %v1802, %v1909
    %v1911 = vpop.f32.mrb[0].mxu0
    %1912 = vmatprep.mubr.f32.mxu0 0.0
    %v1913 = vand.u32 %v121, 4294901760
    %1914 = vmatmul.mubr.f32.gmra.mrb[0].mxu0 %v1913
    %v1915 = vpop.f32.mrb[0].mxu0
    %v1916 = vadd.f32 %v1812, %v1915
    %v1917 = vpop.f32.mrb[0].mxu0
    %1918 = vdwg.mxu0
    %1919 = vmatprep.subr.mxu0 0.0
    %v1920 = vand.u32 %v1699, 4294901760
    %v1921 = vsub.f32 %v1699, %v1920
    %1922 = vmatpush1.msra.mxu0 %v1921
    %1923 = vmatprep.subr.mxu0 0.0
    %v1924 = vand.u32 %v1701, 4294901760
    %v1925 = vsub.f32 %v1701, %v1924
    %1926 = vmatpush1.msra.mxu0 %v1925
    %1927 = vmatprep.subr.mxu0 0.0
    %v1928 = vand.u32 %v1703, 4294901760
    %v1929 = vsub.f32 %v1703, %v1928
    %1930 = vmatpush1.msra.mxu0 %v1929
    %1931 = vmatprep.subr.mxu0 0.0
    %1932 = vmatpush1.msra.mxu0 0.0
    %1933 = vmatprep.subr.mxu0 0.0
    %1934 = vmatpush1.msra.mxu0 0.0
    %1935 = vmatprep.subr.mxu0 0.0
    %1936 = vmatpush1.msra.mxu0 0.0
    %1937 = vmatprep.subr.mxu0 0.0
    %1938 = vmatpush1.msra.mxu0 0.0
    %1939 = vmatprep.subr.mxu0 0.0
    %1940 = vmatpush1.msra.mxu0 0.0
    %1941 = vmatprep.subr.mxu0 0.0
    %1942 = vmatpush1.msra.mxu0 0.0
    %1943 = vmatprep.subr.mxu0 0.0
    %1944 = vmatpush1.msra.mxu0 0.0
    %1945 = vmatprep.subr.mxu0 0.0
    %1946 = vmatpush1.msra.mxu0 0.0
    %1947 = vmatprep.subr.mxu0 0.0
    %1948 = vmatpush1.msra.mxu0 0.0
    %1949 = vmatprep.subr.mxu0 0.0
    %1950 = vmatpush1.msra.mxu0 0.0
    %1951 = vmatprep.subr.mxu0 0.0
    %1952 = vmatpush1.msra.mxu0 0.0
    %1953 = vmatprep.subr.mxu0 0.0
    %1954 = vmatpush1.msra.mxu0 0.0
    %1955 = vmatprep.subr.mxu0 0.0
    %1956 = vmatpush1.msra.mxu0 0.0
    %1957 = vmatprep.subr.mxu0 0.0
    %1958 = vmatpush1.msra.mxu0 0.0
    %1959 = vmatprep.subr.mxu0 0.0
    %1960 = vmatpush1.msra.mxu0 0.0
    %1961 = vmatprep.subr.mxu0 0.0
    %1962 = vmatpush1.msra.mxu0 0.0
    %1963 = vmatprep.subr.mxu0 0.0
    %1964 = vmatpush1.msra.mxu0 0.0
    %1965 = vmatprep.subr.mxu0 0.0
    %1966 = vmatpush1.msra.mxu0 0.0
    %1967 = vmatprep.subr.mxu0 0.0
    %1968 = vmatpush1.msra.mxu0 0.0
    %1969 = vmatprep.subr.mxu0 0.0
    %1970 = vmatpush1.msra.mxu0 0.0
    %1971 = vmatprep.subr.mxu0 0.0
    %1972 = vmatpush1.msra.mxu0 0.0
    %1973 = vmatprep.subr.mxu0 0.0
    %1974 = vmatpush1.msra.mxu0 0.0
    %1975 = vmatprep.subr.mxu0 0.0
    %1976 = vmatpush1.msra.mxu0 0.0
    %1977 = vmatprep.subr.mxu0 0.0
    %1978 = vmatpush1.msra.mxu0 0.0
    %1979 = vmatprep.subr.mxu0 0.0
    %1980 = vmatpush1.msra.mxu0 0.0
    %1981 = vmatprep.subr.mxu0 0.0
    %1982 = vmatpush1.msra.mxu0 0.0
    %1983 = vmatprep.subr.mxu0 0.0
    %1984 = vmatpush1.msra.mxu0 0.0
    %1985 = vmatprep.subr.mxu0 0.0
    %1986 = vmatpush1.msra.mxu0 0.0
    %1987 = vmatprep.subr.mxu0 0.0
    %1988 = vmatpush1.msra.mxu0 0.0
    %1989 = vmatprep.mubr.f32.mxu0 0.0
    %v1990 = vand.u32 %v112, 4294901760
    %v1991 = vsub.f32 %v112, %v1990
    %1992 = vmatmul.mubr.f32.gmra.mrb[0].mxu0 %v1991
    %v1993 = vpop.f32.mrb[0].mxu0
    %v1994 = vadd.f32 %v1898, %v1993
    %v1995 = vpop.f32.mrb[0].mxu0
    %1996 = vmatprep.mubr.f32.mxu0 0.0
    %v1997 = vand.u32 %v115, 4294901760
    %v1998 = vsub.f32 %v115, %v1997
    %1999 = vmatmul.mubr.f32.gmra.mrb[0].mxu0 %v1998
    %v2000 = vpop.f32.mrb[0].mxu0
    %v2001 = vadd.f32 %v1904, %v2000
    %v2002 = vpop.f32.mrb[0].mxu0
    %2003 = vmatprep.mubr.f32.mxu0 0.0
    %v2004 = vand.u32 %v118, 4294901760
    %v2005 = vsub.f32 %v118, %v2004
    %2006 = vmatmul.mubr.f32.gmra.mrb[0].mxu0 %v2005
    %v2007 = vpop.f32.mrb[0].mxu0
    %v2008 = vadd.f32 %v1910, %v2007
    %v2009 = vpop.f32.mrb[0].mxu0
    %2010 = vmatprep.mubr.f32.mxu0 0.0
    %v2011 = vand.u32 %v121, 4294901760
    %v2012 = vsub.f32 %v121, %v2011
    %2013 = vmatmul.mubr.f32.gmra.mrb[0].mxu0 %v2012
    %v2014 = vpop.f32.mrb[0].mxu0
    %v2015 = vadd.f32 %v1916, %v2014
    %v2016 = vpop.f32.mrb[0].mxu0
    %2017 = vdwg.mxu0
    %2018 = vmatprep.subr.mxu0 0.0
    %v2019 = vand.u32 %v1699, 4294901760
    %2020 = vmatpush1.msra.mxu0 %v2019
    %2021 = vmatprep.subr.mxu0 0.0
    %v2022 = vand.u32 %v1701, 4294901760
    %2023 = vmatpush1.msra.mxu0 %v2022
    %2024 = vmatprep.subr.mxu0 0.0
    %v2025 = vand.u32 %v1703, 4294901760
    %2026 = vmatpush1.msra.mxu0 %v2025
    %2027 = vmatprep.subr.mxu0 0.0
    %2028 = vmatpush1.msra.mxu0 0.0
    %2029 = vmatprep.subr.mxu0 0.0
    %2030 = vmatpush1.msra.mxu0 0.0
    %2031 = vmatprep.subr.mxu0 0.0
    %2032 = vmatpush1.msra.mxu0 0.0
    %2033 = vmatprep.subr.mxu0 0.0
    %2034 = vmatpush1.msra.mxu0 0.0
    %2035 = vmatprep.subr.mxu0 0.0
    %2036 = vmatpush1.msra.mxu0 0.0
    %2037 = vmatprep.subr.mxu0 0.0
    %2038 = vmatpush1.msra.mxu0 0.0
    %2039 = vmatprep.subr.mxu0 0.0
    %2040 = vmatpush1.msra.mxu0 0.0
    %2041 = vmatprep.subr.mxu0 0.0
    %2042 = vmatpush1.msra.mxu0 0.0
    %2043 = vmatprep.subr.mxu0 0.0
    %2044 = vmatpush1.msra.mxu0 0.0
    %2045 = vmatprep.subr.mxu0 0.0
    %2046 = vmatpush1.msra.mxu0 0.0
    %2047 = vmatprep.subr.mxu0 0.0
    %2048 = vmatpush1.msra.mxu0 0.0
    %2049 = vmatprep.subr.mxu0 0.0
    %2050 = vmatpush1.msra.mxu0 0.0
    %2051 = vmatprep.subr.mxu0 0.0
    %2052 = vmatpush1.msra.mxu0 0.0
    %2053 = vmatprep.subr.mxu0 0.0
    %2054 = vmatpush1.msra.mxu0 0.0
    %2055 = vmatprep.subr.mxu0 0.0
    %2056 = vmatpush1.msra.mxu0 0.0
    %2057 = vmatprep.subr.mxu0 0.0
    %2058 = vmatpush1.msra.mxu0 0.0
    %2059 = vmatprep.subr.mxu0 0.0
    %2060 = vmatpush1.msra.mxu0 0.0
    %2061 = vmatprep.subr.mxu0 0.0
    %2062 = vmatpush1.msra.mxu0 0.0
    %2063 = vmatprep.subr.mxu0 0.0
    %2064 = vmatpush1.msra.mxu0 0.0
    %2065 = vmatprep.subr.mxu0 0.0
    %2066 = vmatpush1.msra.mxu0 0.0
    %2067 = vmatprep.subr.mxu0 0.0
    %2068 = vmatpush1.msra.mxu0 0.0
    %2069 = vmatprep.subr.mxu0 0.0
    %2070 = vmatpush1.msra.mxu0 0.0
    %2071 = vmatprep.subr.mxu0 0.0
    %2072 = vmatpush1.msra.mxu0 0.0
    %2073 = vmatprep.subr.mxu0 0.0
    %2074 = vmatpush1.msra.mxu0 0.0
    %2075 = vmatprep.subr.mxu0 0.0
    %2076 = vmatpush1.msra.mxu0 0.0
    %2077 = vmatprep.subr.mxu0 0.0
    %2078 = vmatpush1.msra.mxu0 0.0
    %2079 = vmatprep.subr.mxu0 0.0
    %2080 = vmatpush1.msra.mxu0 0.0
    %2081 = vmatprep.subr.mxu0 0.0
    %2082 = vmatpush1.msra.mxu0 0.0
    %2083 = vmatprep.subr.mxu0 0.0
    %2084 = vmatpush1.msra.mxu0 0.0
    %2085 = vmatprep.mubr.f32.mxu0 0.0
    %v2086 = vand.u32 %v112, 4294901760
    %v2087 = vsub.f32 %v112, %v2086
    %v2088 = vand.u32 %v2087, 4294901760
    %2089 = vmatmul.mubr.f32.gmra.mrb[0].mxu0 %v2088
    %v2090 = vpop.f32.mrb[0].mxu0
    %v2091 = vadd.f32 %v1994, %v2090
    %v2092 = vpop.f32.mrb[0].mxu0
    %2093 = vmatprep.mubr.f32.mxu0 0.0
    %v2094 = vand.u32 %v115, 4294901760
    %v2095 = vsub.f32 %v115, %v2094
    %v2096 = vand.u32 %v2095, 4294901760
    %2097 = vmatmul.mubr.f32.gmra.mrb[0].mxu0 %v2096
    %v2098 = vpop.f32.mrb[0].mxu0
    %v2099 = vadd.f32 %v2001, %v2098
    %v2100 = vpop.f32.mrb[0].mxu0
    %2101 = vmatprep.mubr.f32.mxu0 0.0
    %v2102 = vand.u32 %v118, 4294901760
    %v2103 = vsub.f32 %v118, %v2102
    %v2104 = vand.u32 %v2103, 4294901760
    %2105 = vmatmul.mubr.f32.gmra.mrb[0].mxu0 %v2104
    %v2106 = vpop.f32.mrb[0].mxu0
    %v2107 = vadd.f32 %v2008, %v2106
    %v2108 = vpop.f32.mrb[0].mxu0
    %2109 = vmatprep.mubr.f32.mxu0 0.0
    %v2110 = vand.u32 %v121, 4294901760
    %v2111 = vsub.f32 %v121, %v2110
    %v2112 = vand.u32 %v2111, 4294901760
    %2113 = vmatmul.mubr.f32.gmra.mrb[0].mxu0 %v2112
    %v2114 = vpop.f32.mrb[0].mxu0
    %v2115 = vadd.f32 %v2015, %v2114
    %v2116 = vpop.f32.mrb[0].mxu0
    %2117 = vdwg.mxu0
    %2118 = vmatprep.subr.mxu0 0.0
    %v2119 = vand.u32 %v1699, 4294901760
    %v2120 = vsub.f32 %v1699, %v2119
    %v2121 = vand.u32 %v2120, 4294901760
    %2122 = vmatpush1.msra.mxu0 %v2121
    %2123 = vmatprep.subr.mxu0 0.0
    %v2124 = vand.u32 %v1701, 4294901760
    %v2125 = vsub.f32 %v1701, %v2124
    %v2126 = vand.u32 %v2125, 4294901760
    %2127 = vmatpush1.msra.mxu0 %v2126
    %2128 = vmatprep.subr.mxu0 0.0
    %v2129 = vand.u32 %v1703, 4294901760
    %v2130 = vsub.f32 %v1703, %v2129
    %v2131 = vand.u32 %v2130, 4294901760
    %2132 = vmatpush1.msra.mxu0 %v2131
    %2133 = vmatprep.subr.mxu0 0.0
    %2134 = vmatpush1.msra.mxu0 0.0
    %2135 = vmatprep.subr.mxu0 0.0
    %2136 = vmatpush1.msra.mxu0 0.0
    %2137 = vmatprep.subr.mxu0 0.0
    %2138 = vmatpush1.msra.mxu0 0.0
    %2139 = vmatprep.subr.mxu0 0.0
    %2140 = vmatpush1.msra.mxu0 0.0
    %2141 = vmatprep.subr.mxu0 0.0
    %2142 = vmatpush1.msra.mxu0 0.0
    %2143 = vmatprep.subr.mxu0 0.0
    %2144 = vmatpush1.msra.mxu0 0.0
    %2145 = vmatprep.subr.mxu0 0.0
    %2146 = vmatpush1.msra.mxu0 0.0
    %2147 = vmatprep.subr.mxu0 0.0
    %2148 = vmatpush1.msra.mxu0 0.0
    %2149 = vmatprep.subr.mxu0 0.0
    %2150 = vmatpush1.msra.mxu0 0.0
    %2151 = vmatprep.subr.mxu0 0.0
    %2152 = vmatpush1.msra.mxu0 0.0
    %2153 = vmatprep.subr.mxu0 0.0
    %2154 = vmatpush1.msra.mxu0 0.0
    %2155 = vmatprep.subr.mxu0 0.0
    %2156 = vmatpush1.msra.mxu0 0.0
    %2157 = vmatprep.subr.mxu0 0.0
    %2158 = vmatpush1.msra.mxu0 0.0
    %2159 = vmatprep.subr.mxu0 0.0
    %2160 = vmatpush1.msra.mxu0 0.0
    %2161 = vmatprep.subr.mxu0 0.0
    %2162 = vmatpush1.msra.mxu0 0.0
    %2163 = vmatprep.subr.mxu0 0.0
    %2164 = vmatpush1.msra.mxu0 0.0
    %2165 = vmatprep.subr.mxu0 0.0
    %2166 = vmatpush1.msra.mxu0 0.0
    %2167 = vmatprep.subr.mxu0 0.0
    %2168 = vmatpush1.msra.mxu0 0.0
    %2169 = vmatprep.subr.mxu0 0.0
    %2170 = vmatpush1.msra.mxu0 0.0
    %2171 = vmatprep.subr.mxu0 0.0
    %2172 = vmatpush1.msra.mxu0 0.0
    %2173 = vmatprep.subr.mxu0 0.0
    %2174 = vmatpush1.msra.mxu0 0.0
    %2175 = vmatprep.subr.mxu0 0.0
    %2176 = vmatpush1.msra.mxu0 0.0
    %2177 = vmatprep.subr.mxu0 0.0
    %2178 = vmatpush1.msra.mxu0 0.0
    %2179 = vmatprep.subr.mxu0 0.0
    %2180 = vmatpush1.msra.mxu0 0.0
    %2181 = vmatprep.subr.mxu0 0.0
    %2182 = vmatpush1.msra.mxu0 0.0
    %2183 = vmatprep.subr.mxu0 0.0
    %2184 = vmatpush1.msra.mxu0 0.0
    %2185 = vmatprep.subr.mxu0 0.0
    %2186 = vmatpush1.msra.mxu0 0.0
    %2187 = vmatprep.subr.mxu0 0.0
    %2188 = vmatpush1.msra.mxu0 0.0
    %2189 = vmatprep.subr.mxu0 0.0
    %2190 = vmatpush1.msra.mxu0 0.0
    %2191 = vmatprep.mubr.f32.mxu0 0.0
    %v2192 = vand.u32 %v112, 4294901760
    %2193 = vmatmul.mubr.f32.gmra.mrb[0].mxu0 %v2192
    %v2194 = vpop.f32.mrb[0].mxu0
    %v2195 = vadd.f32 %v2091, %v2194
    %v2196 = vpop.f32.mrb[0].mxu0
    %2197 = vmatprep.mubr.f32.mxu0 0.0
    %v2198 = vand.u32 %v115, 4294901760
    %2199 = vmatmul.mubr.f32.gmra.mrb[0].mxu0 %v2198
    %v2200 = vpop.f32.mrb[0].mxu0
    %v2201 = vadd.f32 %v2099, %v2200
    %v2202 = vpop.f32.mrb[0].mxu0
    %2203 = vmatprep.mubr.f32.mxu0 0.0
    %v2204 = vand.u32 %v118, 4294901760
    %2205 = vmatmul.mubr.f32.gmra.mrb[0].mxu0 %v2204
    %v2206 = vpop.f32.mrb[0].mxu0
    %v2207 = vadd.f32 %v2107, %v2206
    %v2208 = vpop.f32.mrb[0].mxu0
    %2209 = vmatprep.mubr.f32.mxu0 0.0
    %v2210 = vand.u32 %v121, 4294901760
    %2211 = vmatmul.mubr.f32.gmra.mrb[0].mxu0 %v2210
    %v2212 = vpop.f32.mrb[0].mxu0
    %v2213 = vadd.f32 %v2115, %v2212
    %v2214 = vpop.f32.mrb[0].mxu0
    %2215 = vdwg.mxu0
    %2216 = vmatprep.subr.mxu0 0.0
    %v2217 = vand.u32 %v1699, 4294901760
    %2218 = vmatpush1.msra.mxu0 %v2217
    %2219 = vmatprep.subr.mxu0 0.0
    %v2220 = vand.u32 %v1701, 4294901760
    %2221 = vmatpush1.msra.mxu0 %v2220
    %2222 = vmatprep.subr.mxu0 0.0
    %v2223 = vand.u32 %v1703, 4294901760
    %2224 = vmatpush1.msra.mxu0 %v2223
    %2225 = vmatprep.subr.mxu0 0.0
    %2226 = vmatpush1.msra.mxu0 0.0
    %2227 = vmatprep.subr.mxu0 0.0
    %2228 = vmatpush1.msra.mxu0 0.0
    %2229 = vmatprep.subr.mxu0 0.0
    %2230 = vmatpush1.msra.mxu0 0.0
    %2231 = vmatprep.subr.mxu0 0.0
    %2232 = vmatpush1.msra.mxu0 0.0
    %2233 = vmatprep.subr.mxu0 0.0
    %2234 = vmatpush1.msra.mxu0 0.0
    %2235 = vmatprep.subr.mxu0 0.0
    %2236 = vmatpush1.msra.mxu0 0.0
    %2237 = vmatprep.subr.mxu0 0.0
    %2238 = vmatpush1.msra.mxu0 0.0
    %2239 = vmatprep.subr.mxu0 0.0
    %2240 = vmatpush1.msra.mxu0 0.0
    %2241 = vmatprep.subr.mxu0 0.0
    %2242 = vmatpush1.msra.mxu0 0.0
    %2243 = vmatprep.subr.mxu0 0.0
    %2244 = vmatpush1.msra.mxu0 0.0
    %2245 = vmatprep.subr.mxu0 0.0
    %2246 = vmatpush1.msra.mxu0 0.0
    %2247 = vmatprep.subr.mxu0 0.0
    %2248 = vmatpush1.msra.mxu0 0.0
    %2249 = vmatprep.subr.mxu0 0.0
    %2250 = vmatpush1.msra.mxu0 0.0
    %2251 = vmatprep.subr.mxu0 0.0
    %2252 = vmatpush1.msra.mxu0 0.0
    %2253 = vmatprep.subr.mxu0 0.0
    %2254 = vmatpush1.msra.mxu0 0.0
    %2255 = vmatprep.subr.mxu0 0.0
    %2256 = vmatpush1.msra.mxu0 0.0
    %2257 = vmatprep.subr.mxu0 0.0
    %2258 = vmatpush1.msra.mxu0 0.0
    %2259 = vmatprep.subr.mxu0 0.0
    %2260 = vmatpush1.msra.mxu0 0.0
    %2261 = vmatprep.subr.mxu0 0.0
    %2262 = vmatpush1.msra.mxu0 0.0
    %2263 = vmatprep.subr.mxu0 0.0
    %2264 = vmatpush1.msra.mxu0 0.0
    %2265 = vmatprep.subr.mxu0 0.0
    %2266 = vmatpush1.msra.mxu0 0.0
    %2267 = vmatprep.subr.mxu0 0.0
    %2268 = vmatpush1.msra.mxu0 0.0
    %2269 = vmatprep.subr.mxu0 0.0
    %2270 = vmatpush1.msra.mxu0 0.0
    %2271 = vmatprep.subr.mxu0 0.0
    %2272 = vmatpush1.msra.mxu0 0.0
    %2273 = vmatprep.subr.mxu0 0.0
    %2274 = vmatpush1.msra.mxu0 0.0
    %2275 = vmatprep.subr.mxu0 0.0
    %2276 = vmatpush1.msra.mxu0 0.0
    %2277 = vmatprep.subr.mxu0 0.0
    %2278 = vmatpush1.msra.mxu0 0.0
    %2279 = vmatprep.subr.mxu0 0.0
    %2280 = vmatpush1.msra.mxu0 0.0
    %2281 = vmatprep.subr.mxu0 0.0
    %2282 = vmatpush1.msra.mxu0 0.0
    %2283 = vmatprep.mubr.f32.mxu0 0.0
    %v2284 = vand.u32 %v112, 4294901760
    %2285 = vmatmul.mubr.f32.gmra.mrb[0].mxu0 %v2284
    %v2286 = vpop.f32.mrb[0].mxu0
    %v2287 = vadd.f32 %v2195, %v2286
    %v2288 = vpop.f32.mrb[0].mxu0
    %2289 = vmatprep.mubr.f32.mxu0 0.0
    %v2290 = vand.u32 %v115, 4294901760
    %2291 = vmatmul.mubr.f32.gmra.mrb[0].mxu0 %v2290
    %v2292 = vpop.f32.mrb[0].mxu0
    %v2293 = vadd.f32 %v2201, %v2292
    %v2294 = vpop.f32.mrb[0].mxu0
    %2295 = vmatprep.mubr.f32.mxu0 0.0
    %v2296 = vand.u32 %v118, 4294901760
    %2297 = vmatmul.mubr.f32.gmra.mrb[0].mxu0 %v2296
    %v2298 = vpop.f32.mrb[0].mxu0
    %v2299 = vadd.f32 %v2207, %v2298
    %v2300 = vpop.f32.mrb[0].mxu0
    %2301 = vmatprep.mubr.f32.mxu0 0.0
    %v2302 = vand.u32 %v121, 4294901760
    %2303 = vmatmul.mubr.f32.gmra.mrb[0].mxu0 %v2302
    %v2304 = vpop.f32.mrb[0].mxu0
    %v2305 = vadd.f32 %v2213, %v2304
    %v2306 = vpop.f32.mrb[0].mxu0
    %2307 = vdwg.mxu0
    %v2308 = vsel %vm724, %v2287, 0.0
    %2309 = vadd.xlane.f32.xlu0 %v2308
    %v2310 = vpop.xlane.xlu0 %2309
    %v2311 = vsel %vm724, %v2293, 0.0
    %2312 = vadd.xlane.f32.xlu0 %v2311
    %v2313 = vpop.xlane.xlu0 %2312
    %v2314 = vsel %vm724, %v2299, 0.0
    %2315 = vadd.xlane.f32.xlu0 %v2314
    %v2316 = vpop.xlane.xlu0 %2315
    %v2317 = vsel %vm724, %v2305, 0.0
    %2318 = vadd.xlane.f32.xlu0 %v2317
    %v2319 = vpop.xlane.xlu0 %2318
    %v2320 = vmul.f32 %v2310, %v737
    %v2321 = vmul.f32 %v2313, %v737
    %v2322 = vmul.f32 %v2316, %v737
    %v2323 = vmul.f32 %v2319, %v737
    %v2324 = vsub.f32 %v2287, %v2320
    %v2325 = vsub.f32 %v2293, %v2321
    %v2326 = vsub.f32 %v2299, %v2322
    %v2327 = vsub.f32 %v2305, %v2323
    %v2328 = vmul.f32 %v2324, %v2324
    %v2329 = vmul.f32 %v2325, %v2325
    %v2330 = vmul.f32 %v2326, %v2326
    %v2331 = vmul.f32 %v2327, %v2327
    %v2332 = vsel %vm724, %v2328, 0.0
    %2333 = vadd.xlane.f32.xlu0 %v2332
    %v2334 = vpop.xlane.xlu0 %2333
    %v2335 = vsel %vm724, %v2329, 0.0
    %2336 = vadd.xlane.f32.xlu0 %v2335
    %v2337 = vpop.xlane.xlu0 %2336
    %v2338 = vsel %vm724, %v2330, 0.0
    %2339 = vadd.xlane.f32.xlu0 %v2338
    %v2340 = vpop.xlane.xlu0 %2339
    %v2341 = vsel %vm724, %v2331, 0.0
    %2342 = vadd.xlane.f32.xlu0 %v2341
    %v2343 = vpop.xlane.xlu0 %2342
    %v2344 = vmul.f32 %v2334, %v737
    %v2345 = vmul.f32 %v2337, %v737
    %v2346 = vmul.f32 %v2340, %v737
    %v2347 = vmul.f32 %v2343, %v737
    %v2348 = vadd.f32 %v2344, 1e-05
    %v2349 = vadd.f32 %v2345, 1e-05
    %v2350 = vadd.f32 %v2346, 1e-05
    %v2351 = vadd.f32 %v2347, 1e-05
    %v2352 = vrsqrt.pop %v2348
    %v2353 = vrsqrt.pop %v2349
    %v2354 = vrsqrt.pop %v2350
    %v2355 = vrsqrt.pop %v2351
    %v2356 = vmul.f32 %v2324, %v2352
    %v2357 = vmul.f32 %v2325, %v2353
    %v2358 = vmul.f32 %v2326, %v2354
    %v2359 = vmul.f32 %v2327, %v2355
    %v2360 = vmul.f32 %v2356, %v781
    %v2361 = vmul.f32 %v2357, %v781
    %v2362 = vmul.f32 %v2358, %v781
    %v2363 = vmul.f32 %v2359, %v781
    %v2364 = vadd.f32 %v2360, %v789
    %v2365 = vadd.f32 %v2361, %v789
    %v2366 = vadd.f32 %v2362, %v789
    %v2367 = vadd.f32 %v2363, %v789
    %v2368 = vmul.f32 %v2364, 0.5
    %v2369 = vmul.f32 %v2365, 0.5
    %v2370 = vmul.f32 %v2366, 0.5
    %v2371 = vmul.f32 %v2367, 0.5
    %v2372 = vmul.f32 %v2364, 0.70710677
    %v2373 = vmul.f32 %v2365, 0.70710677
    %v2374 = vmul.f32 %v2366, 0.70710677
    %v2375 = vmul.f32 %v2367, 0.70710677
    %v2376 = verf.f32.pop %v2372
    %v2377 = verf.f32.pop %v2373
    %v2378 = verf.f32.pop %v2374
    %v2379 = verf.f32.pop %v2375
    %v2380 = vadd.f32 %v2376, 1.0
    %v2381 = vadd.f32 %v2377, 1.0
    %v2382 = vadd.f32 %v2378, 1.0
    %v2383 = vadd.f32 %v2379, 1.0
    %v2384 = vmul.f32 %v2368, %v2380
    %v2385 = vmul.f32 %v2369, %v2381
    %v2386 = vmul.f32 %v2370, %v2382
    %v2387 = vmul.f32 %v2371, %v2383
    %2388 = vrot.lane.b32.xlu0 %v2384, 32
    %v2389 = vpop.permute.xlu0 %2388
    %v2390 = vsel %vm57, %v2389, %v2384
    %2391 = vrot.lane.b32.xlu0 %v2385, 32
    %v2392 = vpop.permute.xlu0 %2391
    %v2393 = vsel %vm57, %v2392, %v2385
    %2394 = vrot.lane.b32.xlu0 %v2386, 32
    %v2395 = vpop.permute.xlu0 %2394
    %v2396 = vsel %vm57, %v2395, %v2386
    %2397 = vrot.lane.b32.xlu0 %v2387, 32
    %v2398 = vpop.permute.xlu0 %2397
    %v2399 = vsel %vm57, %v2398, %v2387
    %2400 = vrot.lane.b32.xlu0 %v2390, 32
    %v2401 = vpop.permute.xlu0 %2400
    %2402 = vrot.lane.b32.xlu0 %v2393, 32
    %v2403 = vpop.permute.xlu0 %2402
    %2404 = vrot.lane.b32.xlu0 %v2396, 32
    %v2405 = vpop.permute.xlu0 %2404
    %2406 = vrot.lane.b32.xlu0 %v2399, 32
    %v2407 = vpop.permute.xlu0 %2406
    %v2408 = vsel %vm57, %v2401, %v2384
    %v2409 = vsel %vm57, %v2403, %v2385
    %v2410 = vsel %vm57, %v2405, %v2386
    %v2411 = vsel %vm57, %v2407, %v2387
    %v2412 = vmul.f32 %v2408, %v66
    %v2413 = vmul.f32 %v2409, %v66
    %v2414 = vmul.f32 %v2410, %v66
    %v2415 = vmul.f32 %v2411, %v66
    %v2416 = vmul.f32 %v2408, %v71
    %v2417 = vmul.f32 %v2409, %v71
    %v2418 = vmul.f32 %v2410, %v71
    %v2419 = vmul.f32 %v2411, %v71
    %2424 = vrot.lane.b32.xlu0 %v2384, 31
    %v2425 = vpop.permute.xlu0 %2424
    %2426 = vrot.lane.b32.xlu0 %v2385, 31
    %v2427 = vpop.permute.xlu0 %2426
    %2428 = vrot.lane.b32.xlu0 %v2386, 31
    %v2429 = vpop.permute.xlu0 %2428
    %2430 = vrot.lane.b32.xlu0 %v2387, 31
    %v2431 = vpop.permute.xlu0 %2430
    %2436 = vrot.lane.b32.xlu0 %v2416, 30
    %v2437 = vpop.permute.xlu0 %2436
    %2438 = vrot.lane.b32.xlu0 %v2417, 30
    %v2439 = vpop.permute.xlu0 %2438
    %2440 = vrot.lane.b32.xlu0 %v2418, 30
    %v2441 = vpop.permute.xlu0 %2440
    %2442 = vrot.lane.b32.xlu0 %v2419, 30
    %v2443 = vpop.permute.xlu0 %2442
    %2448 = vrot.lane.b32.xlu0 %v2412, 97
    %v2449 = vpop.permute.xlu0 %2448
    %2450 = vrot.lane.b32.xlu0 %v2413, 97
    %v2451 = vpop.permute.xlu0 %2450
    %2452 = vrot.lane.b32.xlu0 %v2414, 97
    %v2453 = vpop.permute.xlu0 %2452
    %2454 = vrot.lane.b32.xlu0 %v2415, 97
    %v2455 = vpop.permute.xlu0 %2454
    %2456 = vrot.lane.b32.xlu0 %v2425, 97
    %v2457 = vpop.permute.xlu0 %2456
    %2458 = vrot.lane.b32.xlu0 %v2427, 97
    %v2459 = vpop.permute.xlu0 %2458
    %2460 = vrot.lane.b32.xlu0 %v2429, 97
    %v2461 = vpop.permute.xlu0 %2460
    %2462 = vrot.lane.b32.xlu0 %v2431, 97
    %v2463 = vpop.permute.xlu0 %2462
    %2464 = vrot.lane.b32.xlu0 %v2437, 97
    %v2465 = vpop.permute.xlu0 %2464
    %2466 = vrot.lane.b32.xlu0 %v2439, 97
    %v2467 = vpop.permute.xlu0 %2466
    %2468 = vrot.lane.b32.xlu0 %v2441, 97
    %v2469 = vpop.permute.xlu0 %2468
    %2470 = vrot.lane.b32.xlu0 %v2443, 97
    %v2471 = vpop.permute.xlu0 %2470
    %2484 = vmatprep.subr.mxu0 0.0
    %v2485 = vand.u32 %v2449, 4294901760
    %2486 = vmatpush1.msra.mxu0 %v2485
    %2487 = vmatprep.subr.mxu0 0.0
    %v2488 = vand.u32 %v2451, 4294901760
    %2489 = vmatpush1.msra.mxu0 %v2488
    %2490 = vmatprep.subr.mxu0 0.0
    %v2491 = vand.u32 %v2453, 4294901760
    %2492 = vmatpush1.msra.mxu0 %v2491
    %2493 = vmatprep.subr.mxu0 0.0
    %v2494 = vand.u32 %v2455, 4294901760
    %2495 = vmatpush1.msra.mxu0 %v2494
    %2496 = vmatprep.subr.mxu0 0.0
    %v2497 = vand.u32 %v2457, 4294901760
    %2498 = vmatpush1.msra.mxu0 %v2497
    %2499 = vmatprep.subr.mxu0 0.0
    %v2500 = vand.u32 %v2459, 4294901760
    %2501 = vmatpush1.msra.mxu0 %v2500
    %2502 = vmatprep.subr.mxu0 0.0
    %v2503 = vand.u32 %v2461, 4294901760
    %2504 = vmatpush1.msra.mxu0 %v2503
    %2505 = vmatprep.subr.mxu0 0.0
    %v2506 = vand.u32 %v2463, 4294901760
    %2507 = vmatpush1.msra.mxu0 %v2506
    %2508 = vmatprep.subr.mxu0 0.0
    %v2509 = vand.u32 %v2465, 4294901760
    %2510 = vmatpush1.msra.mxu0 %v2509
    %2511 = vmatprep.subr.mxu0 0.0
    %v2512 = vand.u32 %v2467, 4294901760
    %2513 = vmatpush1.msra.mxu0 %v2512
    %2514 = vmatprep.subr.mxu0 0.0
    %v2515 = vand.u32 %v2469, 4294901760
    %2516 = vmatpush1.msra.mxu0 %v2515
    %2517 = vmatprep.subr.mxu0 0.0
    %v2518 = vand.u32 %v2471, 4294901760
    %2519 = vmatpush1.msra.mxu0 %v2518
    %2520 = vmatprep.subr.mxu0 0.0
    %2521 = vmatpush1.msra.mxu0 0.0
    %2522 = vmatprep.subr.mxu0 0.0
    %2523 = vmatpush1.msra.mxu0 0.0
    %2524 = vmatprep.subr.mxu0 0.0
    %2525 = vmatpush1.msra.mxu0 0.0
    %2526 = vmatprep.subr.mxu0 0.0
    %2527 = vmatpush1.msra.mxu0 0.0
    %2528 = vmatprep.subr.mxu0 0.0
    %2529 = vmatpush1.msra.mxu0 0.0
    %2530 = vmatprep.subr.mxu0 0.0
    %2531 = vmatpush1.msra.mxu0 0.0
    %2532 = vmatprep.subr.mxu0 0.0
    %2533 = vmatpush1.msra.mxu0 0.0
    %2534 = vmatprep.subr.mxu0 0.0
    %2535 = vmatpush1.msra.mxu0 0.0
    %2536 = vmatprep.subr.mxu0 0.0
    %2537 = vmatpush1.msra.mxu0 0.0
    %2538 = vmatprep.subr.mxu0 0.0
    %2539 = vmatpush1.msra.mxu0 0.0
    %2540 = vmatprep.subr.mxu0 0.0
    %2541 = vmatpush1.msra.mxu0 0.0
    %2542 = vmatprep.subr.mxu0 0.0
    %2543 = vmatpush1.msra.mxu0 0.0
    %2544 = vmatprep.subr.mxu0 0.0
    %2545 = vmatpush1.msra.mxu0 0.0
    %2546 = vmatprep.subr.mxu0 0.0
    %2547 = vmatpush1.msra.mxu0 0.0
    %2548 = vmatprep.subr.mxu0 0.0
    %2549 = vmatpush1.msra.mxu0 0.0
    %2550 = vmatprep.subr.mxu0 0.0
    %2551 = vmatpush1.msra.mxu0 0.0
    %2552 = vmatprep.subr.mxu0 0.0
    %2553 = vmatpush1.msra.mxu0 0.0
    %2554 = vmatprep.subr.mxu0 0.0
    %2555 = vmatpush1.msra.mxu0 0.0
    %2556 = vmatprep.subr.mxu0 0.0
    %2557 = vmatpush1.msra.mxu0 0.0
    %2558 = vmatprep.subr.mxu0 0.0
    %2559 = vmatpush1.msra.mxu0 0.0
    %2560 = vmatprep.mubr.f32.mxu0 0.0
    %v2561 = vand.u32 %v928, 4294901760
    %v2562 = vsub.f32 %v928, %v2561
    %v2563 = vand.u32 %v2562, 4294901760
    %v2564 = vsub.f32 %v2562, %v2563
    %v2565 = vand.u32 %v2564, 4294901760
    %2566 = vmatmul.mubr.f32.gmra.mrb[0].mxu0 %v2565
    %v2567 = vpop.f32.mrb[0].mxu0
    %v2568 = vadd.f32 %v872, %v2567
    %v2569 = vpop.f32.mrb[0].mxu0
    %2570 = vmatprep.mubr.f32.mxu0 0.0
    %v2571 = vand.u32 %v931, 4294901760
    %v2572 = vsub.f32 %v931, %v2571
    %v2573 = vand.u32 %v2572, 4294901760
    %v2574 = vsub.f32 %v2572, %v2573
    %v2575 = vand.u32 %v2574, 4294901760
    %2576 = vmatmul.mubr.f32.gmra.mrb[0].mxu0 %v2575
    %v2577 = vpop.f32.mrb[0].mxu0
    %v2578 = vadd.f32 %v876, %v2577
    %v2579 = vpop.f32.mrb[0].mxu0
    %2580 = vmatprep.mubr.f32.mxu0 0.0
    %v2581 = vand.u32 %v934, 4294901760
    %v2582 = vsub.f32 %v934, %v2581
    %v2583 = vand.u32 %v2582, 4294901760
    %v2584 = vsub.f32 %v2582, %v2583
    %v2585 = vand.u32 %v2584, 4294901760
    %2586 = vmatmul.mubr.f32.gmra.mrb[0].mxu0 %v2585
    %v2587 = vpop.f32.mrb[0].mxu0
    %v2588 = vadd.f32 %v880, %v2587
    %v2589 = vpop.f32.mrb[0].mxu0
    %2590 = vmatprep.mubr.f32.mxu0 0.0
    %v2591 = vand.u32 %v937, 4294901760
    %v2592 = vsub.f32 %v937, %v2591
    %v2593 = vand.u32 %v2592, 4294901760
    %v2594 = vsub.f32 %v2592, %v2593
    %v2595 = vand.u32 %v2594, 4294901760
    %2596 = vmatmul.mubr.f32.gmra.mrb[0].mxu0 %v2595
    %v2597 = vpop.f32.mrb[0].mxu0
    %v2598 = vadd.f32 %v884, %v2597
    %v2599 = vpop.f32.mrb[0].mxu0
    %2600 = vdwg.mxu0
    %2601 = vmatprep.subr.mxu0 0.0
    %v2602 = vand.u32 %v2449, 4294901760
    %v2603 = vsub.f32 %v2449, %v2602
    %v2604 = vand.u32 %v2603, 4294901760
    %v2605 = vsub.f32 %v2603, %v2604
    %v2606 = vand.u32 %v2605, 4294901760
    %2607 = vmatpush1.msra.mxu0 %v2606
    %2608 = vmatprep.subr.mxu0 0.0
    %v2609 = vand.u32 %v2451, 4294901760
    %v2610 = vsub.f32 %v2451, %v2609
    %v2611 = vand.u32 %v2610, 4294901760
    %v2612 = vsub.f32 %v2610, %v2611
    %v2613 = vand.u32 %v2612, 4294901760
    %2614 = vmatpush1.msra.mxu0 %v2613
    %2615 = vmatprep.subr.mxu0 0.0
    %v2616 = vand.u32 %v2453, 4294901760
    %v2617 = vsub.f32 %v2453, %v2616
    %v2618 = vand.u32 %v2617, 4294901760
    %v2619 = vsub.f32 %v2617, %v2618
    %v2620 = vand.u32 %v2619, 4294901760
    %2621 = vmatpush1.msra.mxu0 %v2620
    %2622 = vmatprep.subr.mxu0 0.0
    %v2623 = vand.u32 %v2455, 4294901760
    %v2624 = vsub.f32 %v2455, %v2623
    %v2625 = vand.u32 %v2624, 4294901760
    %v2626 = vsub.f32 %v2624, %v2625
    %v2627 = vand.u32 %v2626, 4294901760
    %2628 = vmatpush1.msra.mxu0 %v2627
    %2629 = vmatprep.subr.mxu0 0.0
    %v2630 = vand.u32 %v2457, 4294901760
    %v2631 = vsub.f32 %v2457, %v2630
    %v2632 = vand.u32 %v2631, 4294901760
    %v2633 = vsub.f32 %v2631, %v2632
    %v2634 = vand.u32 %v2633, 4294901760
    %2635 = vmatpush1.msra.mxu0 %v2634
    %2636 = vmatprep.subr.mxu0 0.0
    %v2637 = vand.u32 %v2459, 4294901760
    %v2638 = vsub.f32 %v2459, %v2637
    %v2639 = vand.u32 %v2638, 4294901760
    %v2640 = vsub.f32 %v2638, %v2639
    %v2641 = vand.u32 %v2640, 4294901760
    %2642 = vmatpush1.msra.mxu0 %v2641
    %2643 = vmatprep.subr.mxu0 0.0
    %v2644 = vand.u32 %v2461, 4294901760
    %v2645 = vsub.f32 %v2461, %v2644
    %v2646 = vand.u32 %v2645, 4294901760
    %v2647 = vsub.f32 %v2645, %v2646
    %v2648 = vand.u32 %v2647, 4294901760
    %2649 = vmatpush1.msra.mxu0 %v2648
    %2650 = vmatprep.subr.mxu0 0.0
    %v2651 = vand.u32 %v2463, 4294901760
    %v2652 = vsub.f32 %v2463, %v2651
    %v2653 = vand.u32 %v2652, 4294901760
    %v2654 = vsub.f32 %v2652, %v2653
    %v2655 = vand.u32 %v2654, 4294901760
    %2656 = vmatpush1.msra.mxu0 %v2655
    %2657 = vmatprep.subr.mxu0 0.0
    %v2658 = vand.u32 %v2465, 4294901760
    %v2659 = vsub.f32 %v2465, %v2658
    %v2660 = vand.u32 %v2659, 4294901760
    %v2661 = vsub.f32 %v2659, %v2660
    %v2662 = vand.u32 %v2661, 4294901760
    %2663 = vmatpush1.msra.mxu0 %v2662
    %2664 = vmatprep.subr.mxu0 0.0
    %v2665 = vand.u32 %v2467, 4294901760
    %v2666 = vsub.f32 %v2467, %v2665
    %v2667 = vand.u32 %v2666, 4294901760
    %v2668 = vsub.f32 %v2666, %v2667
    %v2669 = vand.u32 %v2668, 4294901760
    %2670 = vmatpush1.msra.mxu0 %v2669
    %2671 = vmatprep.subr.mxu0 0.0
    %v2672 = vand.u32 %v2469, 4294901760
    %v2673 = vsub.f32 %v2469, %v2672
    %v2674 = vand.u32 %v2673, 4294901760
    %v2675 = vsub.f32 %v2673, %v2674
    %v2676 = vand.u32 %v2675, 4294901760
    %2677 = vmatpush1.msra.mxu0 %v2676
    %2678 = vmatprep.subr.mxu0 0.0
    %v2679 = vand.u32 %v2471, 4294901760
    %v2680 = vsub.f32 %v2471, %v2679
    %v2681 = vand.u32 %v2680, 4294901760
    %v2682 = vsub.f32 %v2680, %v2681
    %v2683 = vand.u32 %v2682, 4294901760
    %2684 = vmatpush1.msra.mxu0 %v2683
    %2685 = vmatprep.subr.mxu0 0.0
    %2686 = vmatpush1.msra.mxu0 0.0
    %2687 = vmatprep.subr.mxu0 0.0
    %2688 = vmatpush1.msra.mxu0 0.0
    %2689 = vmatprep.subr.mxu0 0.0
    %2690 = vmatpush1.msra.mxu0 0.0
    %2691 = vmatprep.subr.mxu0 0.0
    %2692 = vmatpush1.msra.mxu0 0.0
    %2693 = vmatprep.subr.mxu0 0.0
    %2694 = vmatpush1.msra.mxu0 0.0
    %2695 = vmatprep.subr.mxu0 0.0
    %2696 = vmatpush1.msra.mxu0 0.0
    %2697 = vmatprep.subr.mxu0 0.0
    %2698 = vmatpush1.msra.mxu0 0.0
    %2699 = vmatprep.subr.mxu0 0.0
    %2700 = vmatpush1.msra.mxu0 0.0
    %2701 = vmatprep.subr.mxu0 0.0
    %2702 = vmatpush1.msra.mxu0 0.0
    %2703 = vmatprep.subr.mxu0 0.0
    %2704 = vmatpush1.msra.mxu0 0.0
    %2705 = vmatprep.subr.mxu0 0.0
    %2706 = vmatpush1.msra.mxu0 0.0
    %2707 = vmatprep.subr.mxu0 0.0
    %2708 = vmatpush1.msra.mxu0 0.0
    %2709 = vmatprep.subr.mxu0 0.0
    %2710 = vmatpush1.msra.mxu0 0.0
    %2711 = vmatprep.subr.mxu0 0.0
    %2712 = vmatpush1.msra.mxu0 0.0
    %2713 = vmatprep.subr.mxu0 0.0
    %2714 = vmatpush1.msra.mxu0 0.0
    %2715 = vmatprep.subr.mxu0 0.0
    %2716 = vmatpush1.msra.mxu0 0.0
    %2717 = vmatprep.subr.mxu0 0.0
    %2718 = vmatpush1.msra.mxu0 0.0
    %2719 = vmatprep.subr.mxu0 0.0
    %2720 = vmatpush1.msra.mxu0 0.0
    %2721 = vmatprep.subr.mxu0 0.0
    %2722 = vmatpush1.msra.mxu0 0.0
    %2723 = vmatprep.subr.mxu0 0.0
    %2724 = vmatpush1.msra.mxu0 0.0
    %2725 = vmatprep.mubr.f32.mxu0 0.0
    %v2726 = vand.u32 %v928, 4294901760
    %2727 = vmatmul.mubr.f32.gmra.mrb[0].mxu0 %v2726
    %v2728 = vpop.f32.mrb[0].mxu0
    %v2729 = vadd.f32 %v2568, %v2728
    %v2730 = vpop.f32.mrb[0].mxu0
    %2731 = vmatprep.mubr.f32.mxu0 0.0
    %v2732 = vand.u32 %v931, 4294901760
    %2733 = vmatmul.mubr.f32.gmra.mrb[0].mxu0 %v2732
    %v2734 = vpop.f32.mrb[0].mxu0
    %v2735 = vadd.f32 %v2578, %v2734
    %v2736 = vpop.f32.mrb[0].mxu0
    %2737 = vmatprep.mubr.f32.mxu0 0.0
    %v2738 = vand.u32 %v934, 4294901760
    %2739 = vmatmul.mubr.f32.gmra.mrb[0].mxu0 %v2738
    %v2740 = vpop.f32.mrb[0].mxu0
    %v2741 = vadd.f32 %v2588, %v2740
    %v2742 = vpop.f32.mrb[0].mxu0
    %2743 = vmatprep.mubr.f32.mxu0 0.0
    %v2744 = vand.u32 %v937, 4294901760
    %2745 = vmatmul.mubr.f32.gmra.mrb[0].mxu0 %v2744
    %v2746 = vpop.f32.mrb[0].mxu0
    %v2747 = vadd.f32 %v2598, %v2746
    %v2748 = vpop.f32.mrb[0].mxu0
    %2749 = vdwg.mxu0
    %2750 = vmatprep.subr.mxu0 0.0
    %v2751 = vand.u32 %v2449, 4294901760
    %v2752 = vsub.f32 %v2449, %v2751
    %2753 = vmatpush1.msra.mxu0 %v2752
    %2754 = vmatprep.subr.mxu0 0.0
    %v2755 = vand.u32 %v2451, 4294901760
    %v2756 = vsub.f32 %v2451, %v2755
    %2757 = vmatpush1.msra.mxu0 %v2756
    %2758 = vmatprep.subr.mxu0 0.0
    %v2759 = vand.u32 %v2453, 4294901760
    %v2760 = vsub.f32 %v2453, %v2759
    %2761 = vmatpush1.msra.mxu0 %v2760
    %2762 = vmatprep.subr.mxu0 0.0
    %v2763 = vand.u32 %v2455, 4294901760
    %v2764 = vsub.f32 %v2455, %v2763
    %2765 = vmatpush1.msra.mxu0 %v2764
    %2766 = vmatprep.subr.mxu0 0.0
    %v2767 = vand.u32 %v2457, 4294901760
    %v2768 = vsub.f32 %v2457, %v2767
    %2769 = vmatpush1.msra.mxu0 %v2768
    %2770 = vmatprep.subr.mxu0 0.0
    %v2771 = vand.u32 %v2459, 4294901760
    %v2772 = vsub.f32 %v2459, %v2771
    %2773 = vmatpush1.msra.mxu0 %v2772
    %2774 = vmatprep.subr.mxu0 0.0
    %v2775 = vand.u32 %v2461, 4294901760
    %v2776 = vsub.f32 %v2461, %v2775
    %2777 = vmatpush1.msra.mxu0 %v2776
    %2778 = vmatprep.subr.mxu0 0.0
    %v2779 = vand.u32 %v2463, 4294901760
    %v2780 = vsub.f32 %v2463, %v2779
    %2781 = vmatpush1.msra.mxu0 %v2780
    %2782 = vmatprep.subr.mxu0 0.0
    %v2783 = vand.u32 %v2465, 4294901760
    %v2784 = vsub.f32 %v2465, %v2783
    %2785 = vmatpush1.msra.mxu0 %v2784
    %2786 = vmatprep.subr.mxu0 0.0
    %v2787 = vand.u32 %v2467, 4294901760
    %v2788 = vsub.f32 %v2467, %v2787
    %2789 = vmatpush1.msra.mxu0 %v2788
    %2790 = vmatprep.subr.mxu0 0.0
    %v2791 = vand.u32 %v2469, 4294901760
    %v2792 = vsub.f32 %v2469, %v2791
    %2793 = vmatpush1.msra.mxu0 %v2792
    %2794 = vmatprep.subr.mxu0 0.0
    %v2795 = vand.u32 %v2471, 4294901760
    %v2796 = vsub.f32 %v2471, %v2795
    %2797 = vmatpush1.msra.mxu0 %v2796
    %2798 = vmatprep.subr.mxu0 0.0
    %2799 = vmatpush1.msra.mxu0 0.0
    %2800 = vmatprep.subr.mxu0 0.0
    %2801 = vmatpush1.msra.mxu0 0.0
    %2802 = vmatprep.subr.mxu0 0.0
    %2803 = vmatpush1.msra.mxu0 0.0
    %2804 = vmatprep.subr.mxu0 0.0
    %2805 = vmatpush1.msra.mxu0 0.0
    %2806 = vmatprep.subr.mxu0 0.0
    %2807 = vmatpush1.msra.mxu0 0.0
    %2808 = vmatprep.subr.mxu0 0.0
    %2809 = vmatpush1.msra.mxu0 0.0
    %2810 = vmatprep.subr.mxu0 0.0
    %2811 = vmatpush1.msra.mxu0 0.0
    %2812 = vmatprep.subr.mxu0 0.0
    %2813 = vmatpush1.msra.mxu0 0.0
    %2814 = vmatprep.subr.mxu0 0.0
    %2815 = vmatpush1.msra.mxu0 0.0
    %2816 = vmatprep.subr.mxu0 0.0
    %2817 = vmatpush1.msra.mxu0 0.0
    %2818 = vmatprep.subr.mxu0 0.0
    %2819 = vmatpush1.msra.mxu0 0.0
    %2820 = vmatprep.subr.mxu0 0.0
    %2821 = vmatpush1.msra.mxu0 0.0
    %2822 = vmatprep.subr.mxu0 0.0
    %2823 = vmatpush1.msra.mxu0 0.0
    %2824 = vmatprep.subr.mxu0 0.0
    %2825 = vmatpush1.msra.mxu0 0.0
    %2826 = vmatprep.subr.mxu0 0.0
    %2827 = vmatpush1.msra.mxu0 0.0
    %2828 = vmatprep.subr.mxu0 0.0
    %2829 = vmatpush1.msra.mxu0 0.0
    %2830 = vmatprep.subr.mxu0 0.0
    %2831 = vmatpush1.msra.mxu0 0.0
    %2832 = vmatprep.subr.mxu0 0.0
    %2833 = vmatpush1.msra.mxu0 0.0
    %2834 = vmatprep.subr.mxu0 0.0
    %2835 = vmatpush1.msra.mxu0 0.0
    %2836 = vmatprep.subr.mxu0 0.0
    %2837 = vmatpush1.msra.mxu0 0.0
    %2838 = vmatprep.mubr.f32.mxu0 0.0
    %v2839 = vand.u32 %v928, 4294901760
    %v2840 = vsub.f32 %v928, %v2839
    %2841 = vmatmul.mubr.f32.gmra.mrb[0].mxu0 %v2840
    %v2842 = vpop.f32.mrb[0].mxu0
    %v2843 = vadd.f32 %v2729, %v2842
    %v2844 = vpop.f32.mrb[0].mxu0
    %2845 = vmatprep.mubr.f32.mxu0 0.0
    %v2846 = vand.u32 %v931, 4294901760
    %v2847 = vsub.f32 %v931, %v2846
    %2848 = vmatmul.mubr.f32.gmra.mrb[0].mxu0 %v2847
    %v2849 = vpop.f32.mrb[0].mxu0
    %v2850 = vadd.f32 %v2735, %v2849
    %v2851 = vpop.f32.mrb[0].mxu0
    %2852 = vmatprep.mubr.f32.mxu0 0.0
    %v2853 = vand.u32 %v934, 4294901760
    %v2854 = vsub.f32 %v934, %v2853
    %2855 = vmatmul.mubr.f32.gmra.mrb[0].mxu0 %v2854
    %v2856 = vpop.f32.mrb[0].mxu0
    %v2857 = vadd.f32 %v2741, %v2856
    %v2858 = vpop.f32.mrb[0].mxu0
    %2859 = vmatprep.mubr.f32.mxu0 0.0
    %v2860 = vand.u32 %v937, 4294901760
    %v2861 = vsub.f32 %v937, %v2860
    %2862 = vmatmul.mubr.f32.gmra.mrb[0].mxu0 %v2861
    %v2863 = vpop.f32.mrb[0].mxu0
    %v2864 = vadd.f32 %v2747, %v2863
    %v2865 = vpop.f32.mrb[0].mxu0
    %2866 = vdwg.mxu0
    %2867 = vmatprep.subr.mxu0 0.0
    %v2868 = vand.u32 %v2449, 4294901760
    %2869 = vmatpush1.msra.mxu0 %v2868
    %2870 = vmatprep.subr.mxu0 0.0
    %v2871 = vand.u32 %v2451, 4294901760
    %2872 = vmatpush1.msra.mxu0 %v2871
    %2873 = vmatprep.subr.mxu0 0.0
    %v2874 = vand.u32 %v2453, 4294901760
    %2875 = vmatpush1.msra.mxu0 %v2874
    %2876 = vmatprep.subr.mxu0 0.0
    %v2877 = vand.u32 %v2455, 4294901760
    %2878 = vmatpush1.msra.mxu0 %v2877
    %2879 = vmatprep.subr.mxu0 0.0
    %v2880 = vand.u32 %v2457, 4294901760
    %2881 = vmatpush1.msra.mxu0 %v2880
    %2882 = vmatprep.subr.mxu0 0.0
    %v2883 = vand.u32 %v2459, 4294901760
    %2884 = vmatpush1.msra.mxu0 %v2883
    %2885 = vmatprep.subr.mxu0 0.0
    %v2886 = vand.u32 %v2461, 4294901760
    %2887 = vmatpush1.msra.mxu0 %v2886
    %2888 = vmatprep.subr.mxu0 0.0
    %v2889 = vand.u32 %v2463, 4294901760
    %2890 = vmatpush1.msra.mxu0 %v2889
    %2891 = vmatprep.subr.mxu0 0.0
    %v2892 = vand.u32 %v2465, 4294901760
    %2893 = vmatpush1.msra.mxu0 %v2892
    %2894 = vmatprep.subr.mxu0 0.0
    %v2895 = vand.u32 %v2467, 4294901760
    %2896 = vmatpush1.msra.mxu0 %v2895
    %2897 = vmatprep.subr.mxu0 0.0
    %v2898 = vand.u32 %v2469, 4294901760
    %2899 = vmatpush1.msra.mxu0 %v2898
    %2900 = vmatprep.subr.mxu0 0.0
    %v2901 = vand.u32 %v2471, 4294901760
    %2902 = vmatpush1.msra.mxu0 %v2901
    %2903 = vmatprep.subr.mxu0 0.0
    %2904 = vmatpush1.msra.mxu0 0.0
    %2905 = vmatprep.subr.mxu0 0.0
    %2906 = vmatpush1.msra.mxu0 0.0
    %2907 = vmatprep.subr.mxu0 0.0
    %2908 = vmatpush1.msra.mxu0 0.0
    %2909 = vmatprep.subr.mxu0 0.0
    %2910 = vmatpush1.msra.mxu0 0.0
    %2911 = vmatprep.subr.mxu0 0.0
    %2912 = vmatpush1.msra.mxu0 0.0
    %2913 = vmatprep.subr.mxu0 0.0
    %2914 = vmatpush1.msra.mxu0 0.0
    %2915 = vmatprep.subr.mxu0 0.0
    %2916 = vmatpush1.msra.mxu0 0.0
    %2917 = vmatprep.subr.mxu0 0.0
    %2918 = vmatpush1.msra.mxu0 0.0
    %2919 = vmatprep.subr.mxu0 0.0
    %2920 = vmatpush1.msra.mxu0 0.0
    %2921 = vmatprep.subr.mxu0 0.0
    %2922 = vmatpush1.msra.mxu0 0.0
    %2923 = vmatprep.subr.mxu0 0.0
    %2924 = vmatpush1.msra.mxu0 0.0
    %2925 = vmatprep.subr.mxu0 0.0
    %2926 = vmatpush1.msra.mxu0 0.0
    %2927 = vmatprep.subr.mxu0 0.0
    %2928 = vmatpush1.msra.mxu0 0.0
    %2929 = vmatprep.subr.mxu0 0.0
    %2930 = vmatpush1.msra.mxu0 0.0
    %2931 = vmatprep.subr.mxu0 0.0
    %2932 = vmatpush1.msra.mxu0 0.0
    %2933 = vmatprep.subr.mxu0 0.0
    %2934 = vmatpush1.msra.mxu0 0.0
    %2935 = vmatprep.subr.mxu0 0.0
    %2936 = vmatpush1.msra.mxu0 0.0
    %2937 = vmatprep.subr.mxu0 0.0
    %2938 = vmatpush1.msra.mxu0 0.0
    %2939 = vmatprep.subr.mxu0 0.0
    %2940 = vmatpush1.msra.mxu0 0.0
    %2941 = vmatprep.subr.mxu0 0.0
    %2942 = vmatpush1.msra.mxu0 0.0
    %2943 = vmatprep.mubr.f32.mxu0 0.0
    %v2944 = vand.u32 %v928, 4294901760
    %v2945 = vsub.f32 %v928, %v2944
    %v2946 = vand.u32 %v2945, 4294901760
    %2947 = vmatmul.mubr.f32.gmra.mrb[0].mxu0 %v2946
    %v2948 = vpop.f32.mrb[0].mxu0
    %v2949 = vadd.f32 %v2843, %v2948
    %v2950 = vpop.f32.mrb[0].mxu0
    %2951 = vmatprep.mubr.f32.mxu0 0.0
    %v2952 = vand.u32 %v931, 4294901760
    %v2953 = vsub.f32 %v931, %v2952
    %v2954 = vand.u32 %v2953, 4294901760
    %2955 = vmatmul.mubr.f32.gmra.mrb[0].mxu0 %v2954
    %v2956 = vpop.f32.mrb[0].mxu0
    %v2957 = vadd.f32 %v2850, %v2956
    %v2958 = vpop.f32.mrb[0].mxu0
    %2959 = vmatprep.mubr.f32.mxu0 0.0
    %v2960 = vand.u32 %v934, 4294901760
    %v2961 = vsub.f32 %v934, %v2960
    %v2962 = vand.u32 %v2961, 4294901760
    %2963 = vmatmul.mubr.f32.gmra.mrb[0].mxu0 %v2962
    %v2964 = vpop.f32.mrb[0].mxu0
    %v2965 = vadd.f32 %v2857, %v2964
    %v2966 = vpop.f32.mrb[0].mxu0
    %2967 = vmatprep.mubr.f32.mxu0 0.0
    %v2968 = vand.u32 %v937, 4294901760
    %v2969 = vsub.f32 %v937, %v2968
    %v2970 = vand.u32 %v2969, 4294901760
    %2971 = vmatmul.mubr.f32.gmra.mrb[0].mxu0 %v2970
    %v2972 = vpop.f32.mrb[0].mxu0
    %v2973 = vadd.f32 %v2864, %v2972
    %v2974 = vpop.f32.mrb[0].mxu0
    %2975 = vdwg.mxu0
    %2976 = vmatprep.subr.mxu0 0.0
    %v2977 = vand.u32 %v2449, 4294901760
    %v2978 = vsub.f32 %v2449, %v2977
    %v2979 = vand.u32 %v2978, 4294901760
    %2980 = vmatpush1.msra.mxu0 %v2979
    %2981 = vmatprep.subr.mxu0 0.0
    %v2982 = vand.u32 %v2451, 4294901760
    %v2983 = vsub.f32 %v2451, %v2982
    %v2984 = vand.u32 %v2983, 4294901760
    %2985 = vmatpush1.msra.mxu0 %v2984
    %2986 = vmatprep.subr.mxu0 0.0
    %v2987 = vand.u32 %v2453, 4294901760
    %v2988 = vsub.f32 %v2453, %v2987
    %v2989 = vand.u32 %v2988, 4294901760
    %2990 = vmatpush1.msra.mxu0 %v2989
    %2991 = vmatprep.subr.mxu0 0.0
    %v2992 = vand.u32 %v2455, 4294901760
    %v2993 = vsub.f32 %v2455, %v2992
    %v2994 = vand.u32 %v2993, 4294901760
    %2995 = vmatpush1.msra.mxu0 %v2994
    %2996 = vmatprep.subr.mxu0 0.0
    %v2997 = vand.u32 %v2457, 4294901760
    %v2998 = vsub.f32 %v2457, %v2997
    %v2999 = vand.u32 %v2998, 4294901760
    %3000 = vmatpush1.msra.mxu0 %v2999
    %3001 = vmatprep.subr.mxu0 0.0
    %v3002 = vand.u32 %v2459, 4294901760
    %v3003 = vsub.f32 %v2459, %v3002
    %v3004 = vand.u32 %v3003, 4294901760
    %3005 = vmatpush1.msra.mxu0 %v3004
    %3006 = vmatprep.subr.mxu0 0.0
    %v3007 = vand.u32 %v2461, 4294901760
    %v3008 = vsub.f32 %v2461, %v3007
    %v3009 = vand.u32 %v3008, 4294901760
    %3010 = vmatpush1.msra.mxu0 %v3009
    %3011 = vmatprep.subr.mxu0 0.0
    %v3012 = vand.u32 %v2463, 4294901760
    %v3013 = vsub.f32 %v2463, %v3012
    %v3014 = vand.u32 %v3013, 4294901760
    %3015 = vmatpush1.msra.mxu0 %v3014
    %3016 = vmatprep.subr.mxu0 0.0
    %v3017 = vand.u32 %v2465, 4294901760
    %v3018 = vsub.f32 %v2465, %v3017
    %v3019 = vand.u32 %v3018, 4294901760
    %3020 = vmatpush1.msra.mxu0 %v3019
    %3021 = vmatprep.subr.mxu0 0.0
    %v3022 = vand.u32 %v2467, 4294901760
    %v3023 = vsub.f32 %v2467, %v3022
    %v3024 = vand.u32 %v3023, 4294901760
    %3025 = vmatpush1.msra.mxu0 %v3024
    %3026 = vmatprep.subr.mxu0 0.0
    %v3027 = vand.u32 %v2469, 4294901760
    %v3028 = vsub.f32 %v2469, %v3027
    %v3029 = vand.u32 %v3028, 4294901760
    %3030 = vmatpush1.msra.mxu0 %v3029
    %3031 = vmatprep.subr.mxu0 0.0
    %v3032 = vand.u32 %v2471, 4294901760
    %v3033 = vsub.f32 %v2471, %v3032
    %v3034 = vand.u32 %v3033, 4294901760
    %3035 = vmatpush1.msra.mxu0 %v3034
    %3036 = vmatprep.subr.mxu0 0.0
    %3037 = vmatpush1.msra.mxu0 0.0
    %3038 = vmatprep.subr.mxu0 0.0
    %3039 = vmatpush1.msra.mxu0 0.0
    %3040 = vmatprep.subr.mxu0 0.0
    %3041 = vmatpush1.msra.mxu0 0.0
    %3042 = vmatprep.subr.mxu0 0.0
    %3043 = vmatpush1.msra.mxu0 0.0
    %3044 = vmatprep.subr.mxu0 0.0
    %3045 = vmatpush1.msra.mxu0 0.0
    %3046 = vmatprep.subr.mxu0 0.0
    %3047 = vmatpush1.msra.mxu0 0.0
    %3048 = vmatprep.subr.mxu0 0.0
    %3049 = vmatpush1.msra.mxu0 0.0
    %3050 = vmatprep.subr.mxu0 0.0
    %3051 = vmatpush1.msra.mxu0 0.0
    %3052 = vmatprep.subr.mxu0 0.0
    %3053 = vmatpush1.msra.mxu0 0.0
    %3054 = vmatprep.subr.mxu0 0.0
    %3055 = vmatpush1.msra.mxu0 0.0
    %3056 = vmatprep.subr.mxu0 0.0
    %3057 = vmatpush1.msra.mxu0 0.0
    %3058 = vmatprep.subr.mxu0 0.0
    %3059 = vmatpush1.msra.mxu0 0.0
    %3060 = vmatprep.subr.mxu0 0.0
    %3061 = vmatpush1.msra.mxu0 0.0
    %3062 = vmatprep.subr.mxu0 0.0
    %3063 = vmatpush1.msra.mxu0 0.0
    %3064 = vmatprep.subr.mxu0 0.0
    %3065 = vmatpush1.msra.mxu0 0.0
    %3066 = vmatprep.subr.mxu0 0.0
    %3067 = vmatpush1.msra.mxu0 0.0
    %3068 = vmatprep.subr.mxu0 0.0
    %3069 = vmatpush1.msra.mxu0 0.0
    %3070 = vmatprep.subr.mxu0 0.0
    %3071 = vmatpush1.msra.mxu0 0.0
    %3072 = vmatprep.subr.mxu0 0.0
    %3073 = vmatpush1.msra.mxu0 0.0
    %3074 = vmatprep.subr.mxu0 0.0
    %3075 = vmatpush1.msra.mxu0 0.0
    %3076 = vmatprep.mubr.f32.mxu0 0.0
    %v3077 = vand.u32 %v928, 4294901760
    %3078 = vmatmul.mubr.f32.gmra.mrb[0].mxu0 %v3077
    %v3079 = vpop.f32.mrb[0].mxu0
    %v3080 = vadd.f32 %v2949, %v3079
    %v3081 = vpop.f32.mrb[0].mxu0
    %3082 = vmatprep.mubr.f32.mxu0 0.0
    %v3083 = vand.u32 %v931, 4294901760
    %3084 = vmatmul.mubr.f32.gmra.mrb[0].mxu0 %v3083
    %v3085 = vpop.f32.mrb[0].mxu0
    %v3086 = vadd.f32 %v2957, %v3085
    %v3087 = vpop.f32.mrb[0].mxu0
    %3088 = vmatprep.mubr.f32.mxu0 0.0
    %v3089 = vand.u32 %v934, 4294901760
    %3090 = vmatmul.mubr.f32.gmra.mrb[0].mxu0 %v3089
    %v3091 = vpop.f32.mrb[0].mxu0
    %v3092 = vadd.f32 %v2965, %v3091
    %v3093 = vpop.f32.mrb[0].mxu0
    %3094 = vmatprep.mubr.f32.mxu0 0.0
    %v3095 = vand.u32 %v937, 4294901760
    %3096 = vmatmul.mubr.f32.gmra.mrb[0].mxu0 %v3095
    %v3097 = vpop.f32.mrb[0].mxu0
    %v3098 = vadd.f32 %v2973, %v3097
    %v3099 = vpop.f32.mrb[0].mxu0
    %3100 = vdwg.mxu0
    %3101 = vmatprep.subr.mxu0 0.0
    %v3102 = vand.u32 %v2449, 4294901760
    %3103 = vmatpush1.msra.mxu0 %v3102
    %3104 = vmatprep.subr.mxu0 0.0
    %v3105 = vand.u32 %v2451, 4294901760
    %3106 = vmatpush1.msra.mxu0 %v3105
    %3107 = vmatprep.subr.mxu0 0.0
    %v3108 = vand.u32 %v2453, 4294901760
    %3109 = vmatpush1.msra.mxu0 %v3108
    %3110 = vmatprep.subr.mxu0 0.0
    %v3111 = vand.u32 %v2455, 4294901760
    %3112 = vmatpush1.msra.mxu0 %v3111
    %3113 = vmatprep.subr.mxu0 0.0
    %v3114 = vand.u32 %v2457, 4294901760
    %3115 = vmatpush1.msra.mxu0 %v3114
    %3116 = vmatprep.subr.mxu0 0.0
    %v3117 = vand.u32 %v2459, 4294901760
    %3118 = vmatpush1.msra.mxu0 %v3117
    %3119 = vmatprep.subr.mxu0 0.0
    %v3120 = vand.u32 %v2461, 4294901760
    %3121 = vmatpush1.msra.mxu0 %v3120
    %3122 = vmatprep.subr.mxu0 0.0
    %v3123 = vand.u32 %v2463, 4294901760
    %3124 = vmatpush1.msra.mxu0 %v3123
    %3125 = vmatprep.subr.mxu0 0.0
    %v3126 = vand.u32 %v2465, 4294901760
    %3127 = vmatpush1.msra.mxu0 %v3126
    %3128 = vmatprep.subr.mxu0 0.0
    %v3129 = vand.u32 %v2467, 4294901760
    %3130 = vmatpush1.msra.mxu0 %v3129
    %3131 = vmatprep.subr.mxu0 0.0
    %v3132 = vand.u32 %v2469, 4294901760
    %3133 = vmatpush1.msra.mxu0 %v3132
    %3134 = vmatprep.subr.mxu0 0.0
    %v3135 = vand.u32 %v2471, 4294901760
    %3136 = vmatpush1.msra.mxu0 %v3135
    %3137 = vmatprep.subr.mxu0 0.0
    %3138 = vmatpush1.msra.mxu0 0.0
    %3139 = vmatprep.subr.mxu0 0.0
    %3140 = vmatpush1.msra.mxu0 0.0
    %3141 = vmatprep.subr.mxu0 0.0
    %3142 = vmatpush1.msra.mxu0 0.0
    %3143 = vmatprep.subr.mxu0 0.0
    %3144 = vmatpush1.msra.mxu0 0.0
    %3145 = vmatprep.subr.mxu0 0.0
    %3146 = vmatpush1.msra.mxu0 0.0
    %3147 = vmatprep.subr.mxu0 0.0
    %3148 = vmatpush1.msra.mxu0 0.0
    %3149 = vmatprep.subr.mxu0 0.0
    %3150 = vmatpush1.msra.mxu0 0.0
    %3151 = vmatprep.subr.mxu0 0.0
    %3152 = vmatpush1.msra.mxu0 0.0
    %3153 = vmatprep.subr.mxu0 0.0
    %3154 = vmatpush1.msra.mxu0 0.0
    %3155 = vmatprep.subr.mxu0 0.0
    %3156 = vmatpush1.msra.mxu0 0.0
    %3157 = vmatprep.subr.mxu0 0.0
    %3158 = vmatpush1.msra.mxu0 0.0
    %3159 = vmatprep.subr.mxu0 0.0
    %3160 = vmatpush1.msra.mxu0 0.0
    %3161 = vmatprep.subr.mxu0 0.0
    %3162 = vmatpush1.msra.mxu0 0.0
    %3163 = vmatprep.subr.mxu0 0.0
    %3164 = vmatpush1.msra.mxu0 0.0
    %3165 = vmatprep.subr.mxu0 0.0
    %3166 = vmatpush1.msra.mxu0 0.0
    %3167 = vmatprep.subr.mxu0 0.0
    %3168 = vmatpush1.msra.mxu0 0.0
    %3169 = vmatprep.subr.mxu0 0.0
    %3170 = vmatpush1.msra.mxu0 0.0
    %3171 = vmatprep.subr.mxu0 0.0
    %3172 = vmatpush1.msra.mxu0 0.0
    %3173 = vmatprep.subr.mxu0 0.0
    %3174 = vmatpush1.msra.mxu0 0.0
    %3175 = vmatprep.subr.mxu0 0.0
    %3176 = vmatpush1.msra.mxu0 0.0
    %3177 = vmatprep.mubr.f32.mxu0 0.0
    %v3178 = vand.u32 %v928, 4294901760
    %3179 = vmatmul.mubr.f32.gmra.mrb[0].mxu0 %v3178
    %v3180 = vpop.f32.mrb[0].mxu0
    %v3181 = vadd.f32 %v3080, %v3180
    %v3182 = vpop.f32.mrb[0].mxu0
    %3183 = vmatprep.mubr.f32.mxu0 0.0
    %v3184 = vand.u32 %v931, 4294901760
    %3185 = vmatmul.mubr.f32.gmra.mrb[0].mxu0 %v3184
    %v3186 = vpop.f32.mrb[0].mxu0
    %v3187 = vadd.f32 %v3086, %v3186
    %v3188 = vpop.f32.mrb[0].mxu0
    %3189 = vmatprep.mubr.f32.mxu0 0.0
    %v3190 = vand.u32 %v934, 4294901760
    %3191 = vmatmul.mubr.f32.gmra.mrb[0].mxu0 %v3190
    %v3192 = vpop.f32.mrb[0].mxu0
    %v3193 = vadd.f32 %v3092, %v3192
    %v3194 = vpop.f32.mrb[0].mxu0
    %3195 = vmatprep.mubr.f32.mxu0 0.0
    %v3196 = vand.u32 %v937, 4294901760
    %3197 = vmatmul.mubr.f32.gmra.mrb[0].mxu0 %v3196
    %v3198 = vpop.f32.mrb[0].mxu0
    %v3199 = vadd.f32 %v3098, %v3198
    %v3200 = vpop.f32.mrb[0].mxu0
    %3201 = vdwg.mxu0
    %v3202 = vmul.f32 %v3181, %v1659
    %v3203 = vmul.f32 %v3187, %v1663
    %v3204 = vmul.f32 %v3193, %v1667
    %v3205 = vmul.f32 %v3199, %v1671
    %s3206 = scalar_lea.vmem [#allocation2], 32
    %3207 = vst.msk [vmem:[%s3206] sm:$0xff] %vm724, %v3202
    %3208 = vst.msk [vmem:[%s3206 + $0x8] sm:$0xff] %vm724, %v3203
    %3209 = vst.msk [vmem:[%s3206 + $0x10] sm:$0xff] %vm724, %v3204
    %3210 = vst.msk [vmem:[%s3206 + $0x18] sm:$0xff] %vm724, %v3205
    %v3211 = vld [vmem:[#allocation2] sm:$0xff]
    %v3212 = vld [vmem:[#allocation2 + $0x8] sm:$0xff]
    %v3213 = vld [vmem:[#allocation2 + $0x10] sm:$0xff]
    %v3214 = vld [vmem:[#allocation2 + $0x18] sm:$0xff]
    %v3215 = vld [vmem:[#allocation2 + $0x20] sm:$0xff]
    %v3216 = vld [vmem:[#allocation2 + $0x28] sm:$0xff]
    %v3217 = vld [vmem:[#allocation2 + $0x30] sm:$0xff]
    %v3218 = vld [vmem:[#allocation2 + $0x38] sm:$0xff]
    %v3219 = vsel %vm724, %v3211, 0.0
    %3220 = vadd.xlane.f32.xlu0 %v3219
    %v3221 = vpop.xlane.xlu0 %3220
    %v3222 = vsel %vm724, %v3212, 0.0
    %3223 = vadd.xlane.f32.xlu0 %v3222
    %v3224 = vpop.xlane.xlu0 %3223
    %v3225 = vsel %vm724, %v3213, 0.0
    %3226 = vadd.xlane.f32.xlu0 %v3225
    %v3227 = vpop.xlane.xlu0 %3226
    %v3228 = vsel %vm724, %v3214, 0.0
    %3229 = vadd.xlane.f32.xlu0 %v3228
    %v3230 = vpop.xlane.xlu0 %3229
    %v3231 = vsel %vm724, %v3215, 0.0
    %3232 = vadd.xlane.f32.xlu0 %v3231
    %v3233 = vpop.xlane.xlu0 %3232
    %v3234 = vsel %vm724, %v3216, 0.0
    %3235 = vadd.xlane.f32.xlu0 %v3234
    %v3236 = vpop.xlane.xlu0 %3235
    %v3237 = vsel %vm724, %v3217, 0.0
    %3238 = vadd.xlane.f32.xlu0 %v3237
    %v3239 = vpop.xlane.xlu0 %3238
    %v3240 = vsel %vm724, %v3218, 0.0
    %3241 = vadd.xlane.f32.xlu0 %v3240
    %v3242 = vpop.xlane.xlu0 %3241
    %v3243 = vmul.f32 %v3221, %v737
    %v3244 = vmul.f32 %v3224, %v737
    %v3245 = vmul.f32 %v3227, %v737
    %v3246 = vmul.f32 %v3230, %v737
    %v3247 = vmul.f32 %v3233, %v737
    %v3248 = vmul.f32 %v3236, %v737
    %v3249 = vmul.f32 %v3239, %v737
    %v3250 = vmul.f32 %v3242, %v737
    %v3251 = vld [vmem:[%s3] sm:$0xff]
    %v3252 = vld [vmem:[%s3 + $0x8] sm:$0xff]
    %v3253 = vld [vmem:[%s3 + $0x10] sm:$0xff]
    %v3254 = vld [vmem:[%s3 + $0x18] sm:$0xff]
    %v3255 = vlaneseq
    %v3256 = vshrl.u32 %v3255, 7
    %v3257 = vsub.s32 0, %v3256
    %v3258 = vrot.slane %v38, %v3257
    %v3267 = vlaneseq
    %v3268 = vshrl.u32 %v3267, 7
    %v3269 = vsub.s32 %v49, %v3268
    %v3270 = vrot.slane %v3243, %v3269
    %v3271 = vadd.s32 %v49, 4294967288
    %v3272 = vlaneseq
    %v3273 = vshrl.u32 %v3272, 7
    %v3274 = vsub.s32 %v3271, %v3273
    %v3275 = vrot.slane %v3244, %v3274
    %vm3276 = vcmask 130112
    %v3277 = vsel %vm3276, %v3275, %v3270
    %v3278 = vadd.s32 %v49, 4294967280
    %v3279 = vlaneseq
    %v3280 = vshrl.u32 %v3279, 7
    %v3281 = vsub.s32 %v3278, %v3280
    %v3282 = vrot.slane %v3245, %v3281
    %vm3283 = vcmask 195712
    %v3284 = vsel %vm3283, %v3282, %v3277
    %v3285 = vadd.s32 %v49, 4294967272
    %v3286 = vlaneseq
    %v3287 = vshrl.u32 %v3286, 7
    %v3288 = vsub.s32 %v3285, %v3287
    %v3289 = vrot.slane %v3246, %v3288
    %vm3290 = vcmask 261312
    %v3291 = vsel %vm3290, %v3289, %v3284
    %v3292 = vlaneseq
    %v3293 = vshrl.u32 %v3292, 7
    %v3294 = vsub.s32 %v49, %v3293
    %v3295 = vrot.slane %v3247, %v3294
    %v3296 = vlaneseq
    %v3297 = vshrl.u32 %v3296, 7
    %v3298 = vsub.s32 %v3271, %v3297
    %v3299 = vrot.slane %v3248, %v3298
    %v3300 = vsel %vm3276, %v3299, %v3295
    %v3301 = vlaneseq
    %v3302 = vshrl.u32 %v3301, 7
    %v3303 = vsub.s32 %v3278, %v3302
    %v3304 = vrot.slane %v3249, %v3303
    %v3305 = vsel %vm3283, %v3304, %v3300
    %v3306 = vlaneseq
    %v3307 = vshrl.u32 %v3306, 7
    %v3308 = vsub.s32 %v3285, %v3307
    %v3309 = vrot.slane %v3250, %v3308
    %v3310 = vsel %vm3290, %v3309, %v3305
    %vm3311 = vcmask 1041409
    %v3312 = vsel %vm3311, %v3310, %v3291
    %v3313 = vsel %vm724, %v3312, 0
    %3315 = vmatprep.subr.mxu0 0.0
    %v3316 = vand.u32 %v3251, 4294901760
    %3317 = vmatpush1.msra.mxu0 %v3316
    %3318 = vmatprep.subr.mxu0 0.0
    %v3319 = vand.u32 %v3252, 4294901760
    %3320 = vmatpush1.msra.mxu0 %v3319
    %3321 = vmatprep.subr.mxu0 0.0
    %v3322 = vand.u32 %v3253, 4294901760
    %3323 = vmatpush1.msra.mxu0 %v3322
    %3324 = vmatprep.subr.mxu0 0.0
    %v3325 = vand.u32 %v3254, 4294901760
    %3326 = vmatpush1.msra.mxu0 %v3325
    %3327 = vmatprep.subr.mxu0 0.0
    %3328 = vmatpush1.msra.mxu0 0.0
    %3329 = vmatprep.subr.mxu0 0.0
    %3330 = vmatpush1.msra.mxu0 0.0
    %3331 = vmatprep.subr.mxu0 0.0
    %3332 = vmatpush1.msra.mxu0 0.0
    %3333 = vmatprep.subr.mxu0 0.0
    %3334 = vmatpush1.msra.mxu0 0.0
    %3335 = vmatprep.subr.mxu0 0.0
    %3336 = vmatpush1.msra.mxu0 0.0
    %3337 = vmatprep.subr.mxu0 0.0
    %3338 = vmatpush1.msra.mxu0 0.0
    %3339 = vmatprep.subr.mxu0 0.0
    %3340 = vmatpush1.msra.mxu0 0.0
    %3341 = vmatprep.subr.mxu0 0.0
    %3342 = vmatpush1.msra.mxu0 0.0
    %3343 = vmatprep.subr.mxu0 0.0
    %3344 = vmatpush1.msra.mxu0 0.0
    %3345 = vmatprep.subr.mxu0 0.0
    %3346 = vmatpush1.msra.mxu0 0.0
    %3347 = vmatprep.subr.mxu0 0.0
    %3348 = vmatpush1.msra.mxu0 0.0
    %3349 = vmatprep.subr.mxu0 0.0
    %3350 = vmatpush1.msra.mxu0 0.0
    %3351 = vmatprep.subr.mxu0 0.0
    %3352 = vmatpush1.msra.mxu0 0.0
    %3353 = vmatprep.subr.mxu0 0.0
    %3354 = vmatpush1.msra.mxu0 0.0
    %3355 = vmatprep.subr.mxu0 0.0
    %3356 = vmatpush1.msra.mxu0 0.0
    %3357 = vmatprep.subr.mxu0 0.0
    %3358 = vmatpush1.msra.mxu0 0.0
    %3359 = vmatprep.subr.mxu0 0.0
    %3360 = vmatpush1.msra.mxu0 0.0
    %3361 = vmatprep.subr.mxu0 0.0
    %3362 = vmatpush1.msra.mxu0 0.0
    %3363 = vmatprep.subr.mxu0 0.0
    %3364 = vmatpush1.msra.mxu0 0.0
    %3365 = vmatprep.subr.mxu0 0.0
    %3366 = vmatpush1.msra.mxu0 0.0
    %3367 = vmatprep.subr.mxu0 0.0
    %3368 = vmatpush1.msra.mxu0 0.0
    %3369 = vmatprep.subr.mxu0 0.0
    %3370 = vmatpush1.msra.mxu0 0.0
    %3371 = vmatprep.subr.mxu0 0.0
    %3372 = vmatpush1.msra.mxu0 0.0
    %3373 = vmatprep.subr.mxu0 0.0
    %3374 = vmatpush1.msra.mxu0 0.0
    %3375 = vmatprep.subr.mxu0 0.0
    %3376 = vmatpush1.msra.mxu0 0.0
    %3377 = vmatprep.subr.mxu0 0.0
    %3378 = vmatpush1.msra.mxu0 0.0
    %3379 = vmatprep.subr.mxu0 0.0
    %3380 = vmatpush1.msra.mxu0 0.0
    %3381 = vmatprep.subr.mxu0 0.0
    %3382 = vmatpush1.msra.mxu0 0.0
    %3383 = vmatprep.mubr.f32.mxu0 0.0
    %v3384 = vand.u32 %v3313, 4294901760
    %v3385 = vsub.f32 %v3313, %v3384
    %v3386 = vand.u32 %v3385, 4294901760
    %v3387 = vsub.f32 %v3385, %v3386
    %v3388 = vand.u32 %v3387, 4294901760
    %3389 = vmatmul.mubr.f32.gmra.mrb[0].mxu0 %v3388
    %v3390 = vpop.f32.mrb[0].mxu0
    %v3391 = vadd.f32 %v3258, %v3390
    %v3392 = vpop.f32.mrb[0].mxu0
    %3393 = vdwg.mxu0
    %3394 = vmatprep.subr.mxu0 0.0
    %v3395 = vand.u32 %v3251, 4294901760
    %v3396 = vsub.f32 %v3251, %v3395
    %v3397 = vand.u32 %v3396, 4294901760
    %v3398 = vsub.f32 %v3396, %v3397
    %v3399 = vand.u32 %v3398, 4294901760
    %3400 = vmatpush1.msra.mxu0 %v3399
    %3401 = vmatprep.subr.mxu0 0.0
    %v3402 = vand.u32 %v3252, 4294901760
    %v3403 = vsub.f32 %v3252, %v3402
    %v3404 = vand.u32 %v3403, 4294901760
    %v3405 = vsub.f32 %v3403, %v3404
    %v3406 = vand.u32 %v3405, 4294901760
    %3407 = vmatpush1.msra.mxu0 %v3406
    %3408 = vmatprep.subr.mxu0 0.0
    %v3409 = vand.u32 %v3253, 4294901760
    %v3410 = vsub.f32 %v3253, %v3409
    %v3411 = vand.u32 %v3410, 4294901760
    %v3412 = vsub.f32 %v3410, %v3411
    %v3413 = vand.u32 %v3412, 4294901760
    %3414 = vmatpush1.msra.mxu0 %v3413
    %3415 = vmatprep.subr.mxu0 0.0
    %v3416 = vand.u32 %v3254, 4294901760
    %v3417 = vsub.f32 %v3254, %v3416
    %v3418 = vand.u32 %v3417, 4294901760
    %v3419 = vsub.f32 %v3417, %v3418
    %v3420 = vand.u32 %v3419, 4294901760
    %3421 = vmatpush1.msra.mxu0 %v3420
    %3422 = vmatprep.subr.mxu0 0.0
    %3423 = vmatpush1.msra.mxu0 0.0
    %3424 = vmatprep.subr.mxu0 0.0
    %3425 = vmatpush1.msra.mxu0 0.0
    %3426 = vmatprep.subr.mxu0 0.0
    %3427 = vmatpush1.msra.mxu0 0.0
    %3428 = vmatprep.subr.mxu0 0.0
    %3429 = vmatpush1.msra.mxu0 0.0
    %3430 = vmatprep.subr.mxu0 0.0
    %3431 = vmatpush1.msra.mxu0 0.0
    %3432 = vmatprep.subr.mxu0 0.0
    %3433 = vmatpush1.msra.mxu0 0.0
    %3434 = vmatprep.subr.mxu0 0.0
    %3435 = vmatpush1.msra.mxu0 0.0
    %3436 = vmatprep.subr.mxu0 0.0
    %3437 = vmatpush1.msra.mxu0 0.0
    %3438 = vmatprep.subr.mxu0 0.0
    %3439 = vmatpush1.msra.mxu0 0.0
    %3440 = vmatprep.subr.mxu0 0.0
    %3441 = vmatpush1.msra.mxu0 0.0
    %3442 = vmatprep.subr.mxu0 0.0
    %3443 = vmatpush1.msra.mxu0 0.0
    %3444 = vmatprep.subr.mxu0 0.0
    %3445 = vmatpush1.msra.mxu0 0.0
    %3446 = vmatprep.subr.mxu0 0.0
    %3447 = vmatpush1.msra.mxu0 0.0
    %3448 = vmatprep.subr.mxu0 0.0
    %3449 = vmatpush1.msra.mxu0 0.0
    %3450 = vmatprep.subr.mxu0 0.0
    %3451 = vmatpush1.msra.mxu0 0.0
    %3452 = vmatprep.subr.mxu0 0.0
    %3453 = vmatpush1.msra.mxu0 0.0
    %3454 = vmatprep.subr.mxu0 0.0
    %3455 = vmatpush1.msra.mxu0 0.0
    %3456 = vmatprep.subr.mxu0 0.0
    %3457 = vmatpush1.msra.mxu0 0.0
    %3458 = vmatprep.subr.mxu0 0.0
    %3459 = vmatpush1.msra.mxu0 0.0
    %3460 = vmatprep.subr.mxu0 0.0
    %3461 = vmatpush1.msra.mxu0 0.0
    %3462 = vmatprep.subr.mxu0 0.0
    %3463 = vmatpush1.msra.mxu0 0.0
    %3464 = vmatprep.subr.mxu0 0.0
    %3465 = vmatpush1.msra.mxu0 0.0
    %3466 = vmatprep.subr.mxu0 0.0
    %3467 = vmatpush1.msra.mxu0 0.0
    %3468 = vmatprep.subr.mxu0 0.0
    %3469 = vmatpush1.msra.mxu0 0.0
    %3470 = vmatprep.subr.mxu0 0.0
    %3471 = vmatpush1.msra.mxu0 0.0
    %3472 = vmatprep.subr.mxu0 0.0
    %3473 = vmatpush1.msra.mxu0 0.0
    %3474 = vmatprep.subr.mxu0 0.0
    %3475 = vmatpush1.msra.mxu0 0.0
    %3476 = vmatprep.subr.mxu0 0.0
    %3477 = vmatpush1.msra.mxu0 0.0
    %3478 = vmatprep.mubr.f32.mxu0 0.0
    %v3479 = vand.u32 %v3313, 4294901760
    %3480 = vmatmul.mubr.f32.gmra.mrb[0].mxu0 %v3479
    %v3481 = vpop.f32.mrb[0].mxu0
    %v3482 = vadd.f32 %v3391, %v3481
    %v3483 = vpop.f32.mrb[0].mxu0
    %3484 = vdwg.mxu0
    %3485 = vmatprep.subr.mxu0 0.0
    %v3486 = vand.u32 %v3251, 4294901760
    %v3487 = vsub.f32 %v3251, %v3486
    %3488 = vmatpush1.msra.mxu0 %v3487
    %3489 = vmatprep.subr.mxu0 0.0
    %v3490 = vand.u32 %v3252, 4294901760
    %v3491 = vsub.f32 %v3252, %v3490
    %3492 = vmatpush1.msra.mxu0 %v3491
    %3493 = vmatprep.subr.mxu0 0.0
    %v3494 = vand.u32 %v3253, 4294901760
    %v3495 = vsub.f32 %v3253, %v3494
    %3496 = vmatpush1.msra.mxu0 %v3495
    %3497 = vmatprep.subr.mxu0 0.0
    %v3498 = vand.u32 %v3254, 4294901760
    %v3499 = vsub.f32 %v3254, %v3498
    %3500 = vmatpush1.msra.mxu0 %v3499
    %3501 = vmatprep.subr.mxu0 0.0
    %3502 = vmatpush1.msra.mxu0 0.0
    %3503 = vmatprep.subr.mxu0 0.0
    %3504 = vmatpush1.msra.mxu0 0.0
    %3505 = vmatprep.subr.mxu0 0.0
    %3506 = vmatpush1.msra.mxu0 0.0
    %3507 = vmatprep.subr.mxu0 0.0
    %3508 = vmatpush1.msra.mxu0 0.0
    %3509 = vmatprep.subr.mxu0 0.0
    %3510 = vmatpush1.msra.mxu0 0.0
    %3511 = vmatprep.subr.mxu0 0.0
    %3512 = vmatpush1.msra.mxu0 0.0
    %3513 = vmatprep.subr.mxu0 0.0
    %3514 = vmatpush1.msra.mxu0 0.0
    %3515 = vmatprep.subr.mxu0 0.0
    %3516 = vmatpush1.msra.mxu0 0.0
    %3517 = vmatprep.subr.mxu0 0.0
    %3518 = vmatpush1.msra.mxu0 0.0
    %3519 = vmatprep.subr.mxu0 0.0
    %3520 = vmatpush1.msra.mxu0 0.0
    %3521 = vmatprep.subr.mxu0 0.0
    %3522 = vmatpush1.msra.mxu0 0.0
    %3523 = vmatprep.subr.mxu0 0.0
    %3524 = vmatpush1.msra.mxu0 0.0
    %3525 = vmatprep.subr.mxu0 0.0
    %3526 = vmatpush1.msra.mxu0 0.0
    %3527 = vmatprep.subr.mxu0 0.0
    %3528 = vmatpush1.msra.mxu0 0.0
    %3529 = vmatprep.subr.mxu0 0.0
    %3530 = vmatpush1.msra.mxu0 0.0
    %3531 = vmatprep.subr.mxu0 0.0
    %3532 = vmatpush1.msra.mxu0 0.0
    %3533 = vmatprep.subr.mxu0 0.0
    %3534 = vmatpush1.msra.mxu0 0.0
    %3535 = vmatprep.subr.mxu0 0.0
    %3536 = vmatpush1.msra.mxu0 0.0
    %3537 = vmatprep.subr.mxu0 0.0
    %3538 = vmatpush1.msra.mxu0 0.0
    %3539 = vmatprep.subr.mxu0 0.0
    %3540 = vmatpush1.msra.mxu0 0.0
    %3541 = vmatprep.subr.mxu0 0.0
    %3542 = vmatpush1.msra.mxu0 0.0
    %3543 = vmatprep.subr.mxu0 0.0
    %3544 = vmatpush1.msra.mxu0 0.0
    %3545 = vmatprep.subr.mxu0 0.0
    %3546 = vmatpush1.msra.mxu0 0.0
    %3547 = vmatprep.subr.mxu0 0.0
    %3548 = vmatpush1.msra.mxu0 0.0
    %3549 = vmatprep.subr.mxu0 0.0
    %3550 = vmatpush1.msra.mxu0 0.0
    %3551 = vmatprep.subr.mxu0 0.0
    %3552 = vmatpush1.msra.mxu0 0.0
    %3553 = vmatprep.subr.mxu0 0.0
    %3554 = vmatpush1.msra.mxu0 0.0
    %3555 = vmatprep.subr.mxu0 0.0
    %3556 = vmatpush1.msra.mxu0 0.0
    %3557 = vmatprep.mubr.f32.mxu0 0.0
    %v3558 = vand.u32 %v3313, 4294901760
    %v3559 = vsub.f32 %v3313, %v3558
    %3560 = vmatmul.mubr.f32.gmra.mrb[0].mxu0 %v3559
    %v3561 = vpop.f32.mrb[0].mxu0
    %v3562 = vadd.f32 %v3482, %v3561
    %v3563 = vpop.f32.mrb[0].mxu0
    %3564 = vdwg.mxu0
    %3565 = vmatprep.subr.mxu0 0.0
    %v3566 = vand.u32 %v3251, 4294901760
    %3567 = vmatpush1.msra.mxu0 %v3566
    %3568 = vmatprep.subr.mxu0 0.0
    %v3569 = vand.u32 %v3252, 4294901760
    %3570 = vmatpush1.msra.mxu0 %v3569
    %3571 = vmatprep.subr.mxu0 0.0
    %v3572 = vand.u32 %v3253, 4294901760
    %3573 = vmatpush1.msra.mxu0 %v3572
    %3574 = vmatprep.subr.mxu0 0.0
    %v3575 = vand.u32 %v3254, 4294901760
    %3576 = vmatpush1.msra.mxu0 %v3575
    %3577 = vmatprep.subr.mxu0 0.0
    %3578 = vmatpush1.msra.mxu0 0.0
    %3579 = vmatprep.subr.mxu0 0.0
    %3580 = vmatpush1.msra.mxu0 0.0
    %3581 = vmatprep.subr.mxu0 0.0
    %3582 = vmatpush1.msra.mxu0 0.0
    %3583 = vmatprep.subr.mxu0 0.0
    %3584 = vmatpush1.msra.mxu0 0.0
    %3585 = vmatprep.subr.mxu0 0.0
    %3586 = vmatpush1.msra.mxu0 0.0
    %3587 = vmatprep.subr.mxu0 0.0
    %3588 = vmatpush1.msra.mxu0 0.0
    %3589 = vmatprep.subr.mxu0 0.0
    %3590 = vmatpush1.msra.mxu0 0.0
    %3591 = vmatprep.subr.mxu0 0.0
    %3592 = vmatpush1.msra.mxu0 0.0
    %3593 = vmatprep.subr.mxu0 0.0
    %3594 = vmatpush1.msra.mxu0 0.0
    %3595 = vmatprep.subr.mxu0 0.0
    %3596 = vmatpush1.msra.mxu0 0.0
    %3597 = vmatprep.subr.mxu0 0.0
    %3598 = vmatpush1.msra.mxu0 0.0
    %3599 = vmatprep.subr.mxu0 0.0
    %3600 = vmatpush1.msra.mxu0 0.0
    %3601 = vmatprep.subr.mxu0 0.0
    %3602 = vmatpush1.msra.mxu0 0.0
    %3603 = vmatprep.subr.mxu0 0.0
    %3604 = vmatpush1.msra.mxu0 0.0
    %3605 = vmatprep.subr.mxu0 0.0
    %3606 = vmatpush1.msra.mxu0 0.0
    %3607 = vmatprep.subr.mxu0 0.0
    %3608 = vmatpush1.msra.mxu0 0.0
    %3609 = vmatprep.subr.mxu0 0.0
    %3610 = vmatpush1.msra.mxu0 0.0
    %3611 = vmatprep.subr.mxu0 0.0
    %3612 = vmatpush1.msra.mxu0 0.0
    %3613 = vmatprep.subr.mxu0 0.0
    %3614 = vmatpush1.msra.mxu0 0.0
    %3615 = vmatprep.subr.mxu0 0.0
    %3616 = vmatpush1.msra.mxu0 0.0
    %3617 = vmatprep.subr.mxu0 0.0
    %3618 = vmatpush1.msra.mxu0 0.0
    %3619 = vmatprep.subr.mxu0 0.0
    %3620 = vmatpush1.msra.mxu0 0.0
    %3621 = vmatprep.subr.mxu0 0.0
    %3622 = vmatpush1.msra.mxu0 0.0
    %3623 = vmatprep.subr.mxu0 0.0
    %3624 = vmatpush1.msra.mxu0 0.0
    %3625 = vmatprep.subr.mxu0 0.0
    %3626 = vmatpush1.msra.mxu0 0.0
    %3627 = vmatprep.subr.mxu0 0.0
    %3628 = vmatpush1.msra.mxu0 0.0
    %3629 = vmatprep.subr.mxu0 0.0
    %3630 = vmatpush1.msra.mxu0 0.0
    %3631 = vmatprep.subr.mxu0 0.0
    %3632 = vmatpush1.msra.mxu0 0.0
    %3633 = vmatprep.mubr.f32.mxu0 0.0
    %v3634 = vand.u32 %v3313, 4294901760
    %v3635 = vsub.f32 %v3313, %v3634
    %v3636 = vand.u32 %v3635, 4294901760
    %3637 = vmatmul.mubr.f32.gmra.mrb[0].mxu0 %v3636
    %v3638 = vpop.f32.mrb[0].mxu0
    %v3639 = vadd.f32 %v3562, %v3638
    %v3640 = vpop.f32.mrb[0].mxu0
    %3641 = vdwg.mxu0
    %3642 = vmatprep.subr.mxu0 0.0
    %v3643 = vand.u32 %v3251, 4294901760
    %v3644 = vsub.f32 %v3251, %v3643
    %v3645 = vand.u32 %v3644, 4294901760
    %3646 = vmatpush1.msra.mxu0 %v3645
    %3647 = vmatprep.subr.mxu0 0.0
    %v3648 = vand.u32 %v3252, 4294901760
    %v3649 = vsub.f32 %v3252, %v3648
    %v3650 = vand.u32 %v3649, 4294901760
    %3651 = vmatpush1.msra.mxu0 %v3650
    %3652 = vmatprep.subr.mxu0 0.0
    %v3653 = vand.u32 %v3253, 4294901760
    %v3654 = vsub.f32 %v3253, %v3653
    %v3655 = vand.u32 %v3654, 4294901760
    %3656 = vmatpush1.msra.mxu0 %v3655
    %3657 = vmatprep.subr.mxu0 0.0
    %v3658 = vand.u32 %v3254, 4294901760
    %v3659 = vsub.f32 %v3254, %v3658
    %v3660 = vand.u32 %v3659, 4294901760
    %3661 = vmatpush1.msra.mxu0 %v3660
    %3662 = vmatprep.subr.mxu0 0.0
    %3663 = vmatpush1.msra.mxu0 0.0
    %3664 = vmatprep.subr.mxu0 0.0
    %3665 = vmatpush1.msra.mxu0 0.0
    %3666 = vmatprep.subr.mxu0 0.0
    %3667 = vmatpush1.msra.mxu0 0.0
    %3668 = vmatprep.subr.mxu0 0.0
    %3669 = vmatpush1.msra.mxu0 0.0
    %3670 = vmatprep.subr.mxu0 0.0
    %3671 = vmatpush1.msra.mxu0 0.0
    %3672 = vmatprep.subr.mxu0 0.0
    %3673 = vmatpush1.msra.mxu0 0.0
    %3674 = vmatprep.subr.mxu0 0.0
    %3675 = vmatpush1.msra.mxu0 0.0
    %3676 = vmatprep.subr.mxu0 0.0
    %3677 = vmatpush1.msra.mxu0 0.0
    %3678 = vmatprep.subr.mxu0 0.0
    %3679 = vmatpush1.msra.mxu0 0.0
    %3680 = vmatprep.subr.mxu0 0.0
    %3681 = vmatpush1.msra.mxu0 0.0
    %3682 = vmatprep.subr.mxu0 0.0
    %3683 = vmatpush1.msra.mxu0 0.0
    %3684 = vmatprep.subr.mxu0 0.0
    %3685 = vmatpush1.msra.mxu0 0.0
    %3686 = vmatprep.subr.mxu0 0.0
    %3687 = vmatpush1.msra.mxu0 0.0
    %3688 = vmatprep.subr.mxu0 0.0
    %3689 = vmatpush1.msra.mxu0 0.0
    %3690 = vmatprep.subr.mxu0 0.0
    %3691 = vmatpush1.msra.mxu0 0.0
    %3692 = vmatprep.subr.mxu0 0.0
    %3693 = vmatpush1.msra.mxu0 0.0
    %3694 = vmatprep.subr.mxu0 0.0
    %3695 = vmatpush1.msra.mxu0 0.0
    %3696 = vmatprep.subr.mxu0 0.0
    %3697 = vmatpush1.msra.mxu0 0.0
    %3698 = vmatprep.subr.mxu0 0.0
    %3699 = vmatpush1.msra.mxu0 0.0
    %3700 = vmatprep.subr.mxu0 0.0
    %3701 = vmatpush1.msra.mxu0 0.0
    %3702 = vmatprep.subr.mxu0 0.0
    %3703 = vmatpush1.msra.mxu0 0.0
    %3704 = vmatprep.subr.mxu0 0.0
    %3705 = vmatpush1.msra.mxu0 0.0
    %3706 = vmatprep.subr.mxu0 0.0
    %3707 = vmatpush1.msra.mxu0 0.0
    %3708 = vmatprep.subr.mxu0 0.0
    %3709 = vmatpush1.msra.mxu0 0.0
    %3710 = vmatprep.subr.mxu0 0.0
    %3711 = vmatpush1.msra.mxu0 0.0
    %3712 = vmatprep.subr.mxu0 0.0
    %3713 = vmatpush1.msra.mxu0 0.0
    %3714 = vmatprep.subr.mxu0 0.0
    %3715 = vmatpush1.msra.mxu0 0.0
    %3716 = vmatprep.subr.mxu0 0.0
    %3717 = vmatpush1.msra.mxu0 0.0
    %3718 = vmatprep.mubr.f32.mxu0 0.0
    %v3719 = vand.u32 %v3313, 4294901760
    %3720 = vmatmul.mubr.f32.gmra.mrb[0].mxu0 %v3719
    %v3721 = vpop.f32.mrb[0].mxu0
    %v3722 = vadd.f32 %v3639, %v3721
    %v3723 = vpop.f32.mrb[0].mxu0
    %3724 = vdwg.mxu0
    %3725 = vmatprep.subr.mxu0 0.0
    %v3726 = vand.u32 %v3251, 4294901760
    %3727 = vmatpush1.msra.mxu0 %v3726
    %3728 = vmatprep.subr.mxu0 0.0
    %v3729 = vand.u32 %v3252, 4294901760
    %3730 = vmatpush1.msra.mxu0 %v3729
    %3731 = vmatprep.subr.mxu0 0.0
    %v3732 = vand.u32 %v3253, 4294901760
    %3733 = vmatpush1.msra.mxu0 %v3732
    %3734 = vmatprep.subr.mxu0 0.0
    %v3735 = vand.u32 %v3254, 4294901760
    %3736 = vmatpush1.msra.mxu0 %v3735
    %3737 = vmatprep.subr.mxu0 0.0
    %3738 = vmatpush1.msra.mxu0 0.0
    %3739 = vmatprep.subr.mxu0 0.0
    %3740 = vmatpush1.msra.mxu0 0.0
    %3741 = vmatprep.subr.mxu0 0.0
    %3742 = vmatpush1.msra.mxu0 0.0
    %3743 = vmatprep.subr.mxu0 0.0
    %3744 = vmatpush1.msra.mxu0 0.0
    %3745 = vmatprep.subr.mxu0 0.0
    %3746 = vmatpush1.msra.mxu0 0.0
    %3747 = vmatprep.subr.mxu0 0.0
    %3748 = vmatpush1.msra.mxu0 0.0
    %3749 = vmatprep.subr.mxu0 0.0
    %3750 = vmatpush1.msra.mxu0 0.0
    %3751 = vmatprep.subr.mxu0 0.0
    %3752 = vmatpush1.msra.mxu0 0.0
    %3753 = vmatprep.subr.mxu0 0.0
    %3754 = vmatpush1.msra.mxu0 0.0
    %3755 = vmatprep.subr.mxu0 0.0
    %3756 = vmatpush1.msra.mxu0 0.0
    %3757 = vmatprep.subr.mxu0 0.0
    %3758 = vmatpush1.msra.mxu0 0.0
    %3759 = vmatprep.subr.mxu0 0.0
    %3760 = vmatpush1.msra.mxu0 0.0
    %3761 = vmatprep.subr.mxu0 0.0
    %3762 = vmatpush1.msra.mxu0 0.0
    %3763 = vmatprep.subr.mxu0 0.0
    %3764 = vmatpush1.msra.mxu0 0.0
    %3765 = vmatprep.subr.mxu0 0.0
    %3766 = vmatpush1.msra.mxu0 0.0
    %3767 = vmatprep.subr.mxu0 0.0
    %3768 = vmatpush1.msra.mxu0 0.0
    %3769 = vmatprep.subr.mxu0 0.0
    %3770 = vmatpush1.msra.mxu0 0.0
    %3771 = vmatprep.subr.mxu0 0.0
    %3772 = vmatpush1.msra.mxu0 0.0
    %3773 = vmatprep.subr.mxu0 0.0
    %3774 = vmatpush1.msra.mxu0 0.0
    %3775 = vmatprep.subr.mxu0 0.0
    %3776 = vmatpush1.msra.mxu0 0.0
    %3777 = vmatprep.subr.mxu0 0.0
    %3778 = vmatpush1.msra.mxu0 0.0
    %3779 = vmatprep.subr.mxu0 0.0
    %3780 = vmatpush1.msra.mxu0 0.0
    %3781 = vmatprep.subr.mxu0 0.0
    %3782 = vmatpush1.msra.mxu0 0.0
    %3783 = vmatprep.subr.mxu0 0.0
    %3784 = vmatpush1.msra.mxu0 0.0
    %3785 = vmatprep.subr.mxu0 0.0
    %3786 = vmatpush1.msra.mxu0 0.0
    %3787 = vmatprep.subr.mxu0 0.0
    %3788 = vmatpush1.msra.mxu0 0.0
    %3789 = vmatprep.subr.mxu0 0.0
    %3790 = vmatpush1.msra.mxu0 0.0
    %3791 = vmatprep.subr.mxu0 0.0
    %3792 = vmatpush1.msra.mxu0 0.0
    %3793 = vmatprep.mubr.f32.mxu0 0.0
    %v3794 = vand.u32 %v3313, 4294901760
    %3795 = vmatmul.mubr.f32.gmra.mrb[0].mxu0 %v3794
    %v3796 = vpop.f32.mrb[0].mxu0
    %v3797 = vadd.f32 %v3722, %v3796
    %v3798 = vpop.f32.mrb[0].mxu0
    %3799 = vdwg.mxu0
    %vm3800 = vcmask 517120
    %v3801 = vsel %vm3800, %v3797, 0.0
    %3802 = vadd.xlane.f32.xlu0 %v3801
    %v3803 = vpop.xlane.xlu0 %3802
    %v3804 = vrcp.pop 64.0
    %v3805 = vmul.f32 %v3803, %v3804
    %v3806 = vsub.f32 %v3797, %v3805
    %v3807 = vmul.f32 %v3806, %v3806
    %v3808 = vsel %vm3800, %v3807, 0.0
    %3809 = vadd.xlane.f32.xlu0 %v3808
    %v3810 = vpop.xlane.xlu0 %3809
    %v3811 = vmul.f32 %v3810, %v3804
    %v3812 = vadd.f32 %v3811, 1e-05
    %v3813 = vrsqrt.pop %v3812
    %v3814 = vmul.f32 %v3806, %v3813
    %v3815 = vlaneseq
    %v3816 = vshrl.u32 %v3815, 7
    %v3817 = vsub.s32 1, %v3816
    %v3818 = vrot.slane %v38, %v3817
    %v3819 = vmul.f32 %v3814, %v3818
    %v3820 = vlaneseq
    %v3821 = vshrl.u32 %v3820, 7
    %v3822 = vsub.s32 2, %v3821
    %v3823 = vrot.slane %v38, %v3822
    %v3824 = vadd.f32 %v3819, %v3823
    %v3825 = vmul.f32 %v3824, 0.5
    %v3826 = vmul.f32 %v3824, 0.70710677
    %v3827 = verf.f32.pop %v3826
    %v3828 = vadd.f32 %v3827, 1.0
    %v3829 = vmul.f32 %v3825, %v3828
    %v3830 = vld [vmem:[%s4] sm:$0xff]
    %v3831 = vld [vmem:[%s4 + $0x8] sm:$0xff]
    %v3832 = vld [vmem:[%s4 + $0x10] sm:$0xff]
    %v3833 = vld [vmem:[%s4 + $0x18] sm:$0xff]
    %v3834 = vld [vmem:[%s4 + $0x20] sm:$0xff]
    %v3835 = vld [vmem:[%s4 + $0x28] sm:$0xff]
    %v3836 = vld [vmem:[%s4 + $0x30] sm:$0xff]
    %v3837 = vld [vmem:[%s4 + $0x38] sm:$0xff]
    %v3838 = vlaneseq
    %v3839 = vshrl.u32 %v3838, 7
    %v3840 = vsub.s32 1, %v3839
    %v3841 = vrot.slane %v37, %v3840
    %vm3842 = vcmask 523264
    %v3844 = vsel %vm3842, %v3829, 0
    %3846 = vmatprep.subr.mxu0 0.0
    %v3847 = vand.u32 %v3830, 4294901760
    %3848 = vmatpush1.msra.mxu0 %v3847
    %3849 = vmatprep.subr.mxu0 0.0
    %v3850 = vand.u32 %v3831, 4294901760
    %3851 = vmatpush1.msra.mxu0 %v3850
    %3852 = vmatprep.subr.mxu0 0.0
    %v3853 = vand.u32 %v3832, 4294901760
    %3854 = vmatpush1.msra.mxu0 %v3853
    %3855 = vmatprep.subr.mxu0 0.0
    %v3856 = vand.u32 %v3833, 4294901760
    %3857 = vmatpush1.msra.mxu0 %v3856
    %3858 = vmatprep.subr.mxu0 0.0
    %v3859 = vand.u32 %v3834, 4294901760
    %3860 = vmatpush1.msra.mxu0 %v3859
    %3861 = vmatprep.subr.mxu0 0.0
    %v3862 = vand.u32 %v3835, 4294901760
    %3863 = vmatpush1.msra.mxu0 %v3862
    %3864 = vmatprep.subr.mxu0 0.0
    %v3865 = vand.u32 %v3836, 4294901760
    %3866 = vmatpush1.msra.mxu0 %v3865
    %3867 = vmatprep.subr.mxu0 0.0
    %v3868 = vand.u32 %v3837, 4294901760
    %3869 = vmatpush1.msra.mxu0 %v3868
    %3870 = vmatprep.subr.mxu0 0.0
    %3871 = vmatpush1.msra.mxu0 0.0
    %3872 = vmatprep.subr.mxu0 0.0
    %3873 = vmatpush1.msra.mxu0 0.0
    %3874 = vmatprep.subr.mxu0 0.0
    %3875 = vmatpush1.msra.mxu0 0.0
    %3876 = vmatprep.subr.mxu0 0.0
    %3877 = vmatpush1.msra.mxu0 0.0
    %3878 = vmatprep.subr.mxu0 0.0
    %3879 = vmatpush1.msra.mxu0 0.0
    %3880 = vmatprep.subr.mxu0 0.0
    %3881 = vmatpush1.msra.mxu0 0.0
    %3882 = vmatprep.subr.mxu0 0.0
    %3883 = vmatpush1.msra.mxu0 0.0
    %3884 = vmatprep.subr.mxu0 0.0
    %3885 = vmatpush1.msra.mxu0 0.0
    %3886 = vmatprep.subr.mxu0 0.0
    %3887 = vmatpush1.msra.mxu0 0.0
    %3888 = vmatprep.subr.mxu0 0.0
    %3889 = vmatpush1.msra.mxu0 0.0
    %3890 = vmatprep.subr.mxu0 0.0
    %3891 = vmatpush1.msra.mxu0 0.0
    %3892 = vmatprep.subr.mxu0 0.0
    %3893 = vmatpush1.msra.mxu0 0.0
    %3894 = vmatprep.subr.mxu0 0.0
    %3895 = vmatpush1.msra.mxu0 0.0
    %3896 = vmatprep.subr.mxu0 0.0
    %3897 = vmatpush1.msra.mxu0 0.0
    %3898 = vmatprep.subr.mxu0 0.0
    %3899 = vmatpush1.msra.mxu0 0.0
    %3900 = vmatprep.subr.mxu0 0.0
    %3901 = vmatpush1.msra.mxu0 0.0
    %3902 = vmatprep.subr.mxu0 0.0
    %3903 = vmatpush1.msra.mxu0 0.0
    %3904 = vmatprep.subr.mxu0 0.0
    %3905 = vmatpush1.msra.mxu0 0.0
    %3906 = vmatprep.subr.mxu0 0.0
    %3907 = vmatpush1.msra.mxu0 0.0
    %3908 = vmatprep.subr.mxu0 0.0
    %3909 = vmatpush1.msra.mxu0 0.0
    %3910 = vmatprep.subr.mxu0 0.0
    %3911 = vmatpush1.msra.mxu0 0.0
    %3912 = vmatprep.subr.mxu0 0.0
    %3913 = vmatpush1.msra.mxu0 0.0
    %3914 = vmatprep.subr.mxu0 0.0
    %3915 = vmatpush1.msra.mxu0 0.0
    %3916 = vmatprep.subr.mxu0 0.0
    %3917 = vmatpush1.msra.mxu0 0.0
    %3918 = vmatprep.mubr.f32.mxu0 0.0
    %v3919 = vand.u32 %v3844, 4294901760
    %v3920 = vsub.f32 %v3844, %v3919
    %v3921 = vand.u32 %v3920, 4294901760
    %v3922 = vsub.f32 %v3920, %v3921
    %v3923 = vand.u32 %v3922, 4294901760
    %3924 = vmatmul.mubr.f32.gmra.mrb[0].mxu0 %v3923
    %v3925 = vpop.f32.mrb[0].mxu0
    %v3926 = vadd.f32 %v3841, %v3925
    %v3927 = vpop.f32.mrb[0].mxu0
    %3928 = vdwg.mxu0
    %3929 = vmatprep.subr.mxu0 0.0
    %v3930 = vand.u32 %v3830, 4294901760
    %v3931 = vsub.f32 %v3830, %v3930
    %v3932 = vand.u32 %v3931, 4294901760
    %v3933 = vsub.f32 %v3931, %v3932
    %v3934 = vand.u32 %v3933, 4294901760
    %3935 = vmatpush1.msra.mxu0 %v3934
    %3936 = vmatprep.subr.mxu0 0.0
    %v3937 = vand.u32 %v3831, 4294901760
    %v3938 = vsub.f32 %v3831, %v3937
    %v3939 = vand.u32 %v3938, 4294901760
    %v3940 = vsub.f32 %v3938, %v3939
    %v3941 = vand.u32 %v3940, 4294901760
    %3942 = vmatpush1.msra.mxu0 %v3941
    %3943 = vmatprep.subr.mxu0 0.0
    %v3944 = vand.u32 %v3832, 4294901760
    %v3945 = vsub.f32 %v3832, %v3944
    %v3946 = vand.u32 %v3945, 4294901760
    %v3947 = vsub.f32 %v3945, %v3946
    %v3948 = vand.u32 %v3947, 4294901760
    %3949 = vmatpush1.msra.mxu0 %v3948
    %3950 = vmatprep.subr.mxu0 0.0
    %v3951 = vand.u32 %v3833, 4294901760
    %v3952 = vsub.f32 %v3833, %v3951
    %v3953 = vand.u32 %v3952, 4294901760
    %v3954 = vsub.f32 %v3952, %v3953
    %v3955 = vand.u32 %v3954, 4294901760
    %3956 = vmatpush1.msra.mxu0 %v3955
    %3957 = vmatprep.subr.mxu0 0.0
    %v3958 = vand.u32 %v3834, 4294901760
    %v3959 = vsub.f32 %v3834, %v3958
    %v3960 = vand.u32 %v3959, 4294901760
    %v3961 = vsub.f32 %v3959, %v3960
    %v3962 = vand.u32 %v3961, 4294901760
    %3963 = vmatpush1.msra.mxu0 %v3962
    %3964 = vmatprep.subr.mxu0 0.0
    %v3965 = vand.u32 %v3835, 4294901760
    %v3966 = vsub.f32 %v3835, %v3965
    %v3967 = vand.u32 %v3966, 4294901760
    %v3968 = vsub.f32 %v3966, %v3967
    %v3969 = vand.u32 %v3968, 4294901760
    %3970 = vmatpush1.msra.mxu0 %v3969
    %3971 = vmatprep.subr.mxu0 0.0
    %v3972 = vand.u32 %v3836, 4294901760
    %v3973 = vsub.f32 %v3836, %v3972
    %v3974 = vand.u32 %v3973, 4294901760
    %v3975 = vsub.f32 %v3973, %v3974
    %v3976 = vand.u32 %v3975, 4294901760
    %3977 = vmatpush1.msra.mxu0 %v3976
    %3978 = vmatprep.subr.mxu0 0.0
    %v3979 = vand.u32 %v3837, 4294901760
    %v3980 = vsub.f32 %v3837, %v3979
    %v3981 = vand.u32 %v3980, 4294901760
    %v3982 = vsub.f32 %v3980, %v3981
    %v3983 = vand.u32 %v3982, 4294901760
    %3984 = vmatpush1.msra.mxu0 %v3983
    %3985 = vmatprep.subr.mxu0 0.0
    %3986 = vmatpush1.msra.mxu0 0.0
    %3987 = vmatprep.subr.mxu0 0.0
    %3988 = vmatpush1.msra.mxu0 0.0
    %3989 = vmatprep.subr.mxu0 0.0
    %3990 = vmatpush1.msra.mxu0 0.0
    %3991 = vmatprep.subr.mxu0 0.0
    %3992 = vmatpush1.msra.mxu0 0.0
    %3993 = vmatprep.subr.mxu0 0.0
    %3994 = vmatpush1.msra.mxu0 0.0
    %3995 = vmatprep.subr.mxu0 0.0
    %3996 = vmatpush1.msra.mxu0 0.0
    %3997 = vmatprep.subr.mxu0 0.0
    %3998 = vmatpush1.msra.mxu0 0.0
    %3999 = vmatprep.subr.mxu0 0.0
    %4000 = vmatpush1.msra.mxu0 0.0
    %4001 = vmatprep.subr.mxu0 0.0
    %4002 = vmatpush1.msra.mxu0 0.0
    %4003 = vmatprep.subr.mxu0 0.0
    %4004 = vmatpush1.msra.mxu0 0.0
    %4005 = vmatprep.subr.mxu0 0.0
    %4006 = vmatpush1.msra.mxu0 0.0
    %4007 = vmatprep.subr.mxu0 0.0
    %4008 = vmatpush1.msra.mxu0 0.0
    %4009 = vmatprep.subr.mxu0 0.0
    %4010 = vmatpush1.msra.mxu0 0.0
    %4011 = vmatprep.subr.mxu0 0.0
    %4012 = vmatpush1.msra.mxu0 0.0
    %4013 = vmatprep.subr.mxu0 0.0
    %4014 = vmatpush1.msra.mxu0 0.0
    %4015 = vmatprep.subr.mxu0 0.0
    %4016 = vmatpush1.msra.mxu0 0.0
    %4017 = vmatprep.subr.mxu0 0.0
    %4018 = vmatpush1.msra.mxu0 0.0
    %4019 = vmatprep.subr.mxu0 0.0
    %4020 = vmatpush1.msra.mxu0 0.0
    %4021 = vmatprep.subr.mxu0 0.0
    %4022 = vmatpush1.msra.mxu0 0.0
    %4023 = vmatprep.subr.mxu0 0.0
    %4024 = vmatpush1.msra.mxu0 0.0
    %4025 = vmatprep.subr.mxu0 0.0
    %4026 = vmatpush1.msra.mxu0 0.0
    %4027 = vmatprep.subr.mxu0 0.0
    %4028 = vmatpush1.msra.mxu0 0.0
    %4029 = vmatprep.subr.mxu0 0.0
    %4030 = vmatpush1.msra.mxu0 0.0
    %4031 = vmatprep.subr.mxu0 0.0
    %4032 = vmatpush1.msra.mxu0 0.0
    %4033 = vmatprep.mubr.f32.mxu0 0.0
    %v4034 = vand.u32 %v3844, 4294901760
    %4035 = vmatmul.mubr.f32.gmra.mrb[0].mxu0 %v4034
    %v4036 = vpop.f32.mrb[0].mxu0
    %v4037 = vadd.f32 %v3926, %v4036
    %v4038 = vpop.f32.mrb[0].mxu0
    %4039 = vdwg.mxu0
    %4040 = vmatprep.subr.mxu0 0.0
    %v4041 = vand.u32 %v3830, 4294901760
    %v4042 = vsub.f32 %v3830, %v4041
    %4043 = vmatpush1.msra.mxu0 %v4042
    %4044 = vmatprep.subr.mxu0 0.0
    %v4045 = vand.u32 %v3831, 4294901760
    %v4046 = vsub.f32 %v3831, %v4045
    %4047 = vmatpush1.msra.mxu0 %v4046
    %4048 = vmatprep.subr.mxu0 0.0
    %v4049 = vand.u32 %v3832, 4294901760
    %v4050 = vsub.f32 %v3832, %v4049
    %4051 = vmatpush1.msra.mxu0 %v4050
    %4052 = vmatprep.subr.mxu0 0.0
    %v4053 = vand.u32 %v3833, 4294901760
    %v4054 = vsub.f32 %v3833, %v4053
    %4055 = vmatpush1.msra.mxu0 %v4054
    %4056 = vmatprep.subr.mxu0 0.0
    %v4057 = vand.u32 %v3834, 4294901760
    %v4058 = vsub.f32 %v3834, %v4057
    %4059 = vmatpush1.msra.mxu0 %v4058
    %4060 = vmatprep.subr.mxu0 0.0
    %v4061 = vand.u32 %v3835, 4294901760
    %v4062 = vsub.f32 %v3835, %v4061
    %4063 = vmatpush1.msra.mxu0 %v4062
    %4064 = vmatprep.subr.mxu0 0.0
    %v4065 = vand.u32 %v3836, 4294901760
    %v4066 = vsub.f32 %v3836, %v4065
    %4067 = vmatpush1.msra.mxu0 %v4066
    %4068 = vmatprep.subr.mxu0 0.0
    %v4069 = vand.u32 %v3837, 4294901760
    %v4070 = vsub.f32 %v3837, %v4069
    %4071 = vmatpush1.msra.mxu0 %v4070
    %4072 = vmatprep.subr.mxu0 0.0
    %4073 = vmatpush1.msra.mxu0 0.0
    %4074 = vmatprep.subr.mxu0 0.0
    %4075 = vmatpush1.msra.mxu0 0.0
    %4076 = vmatprep.subr.mxu0 0.0
    %4077 = vmatpush1.msra.mxu0 0.0
    %4078 = vmatprep.subr.mxu0 0.0
    %4079 = vmatpush1.msra.mxu0 0.0
    %4080 = vmatprep.subr.mxu0 0.0
    %4081 = vmatpush1.msra.mxu0 0.0
    %4082 = vmatprep.subr.mxu0 0.0
    %4083 = vmatpush1.msra.mxu0 0.0
    %4084 = vmatprep.subr.mxu0 0.0
    %4085 = vmatpush1.msra.mxu0 0.0
    %4086 = vmatprep.subr.mxu0 0.0
    %4087 = vmatpush1.msra.mxu0 0.0
    %4088 = vmatprep.subr.mxu0 0.0
    %4089 = vmatpush1.msra.mxu0 0.0
    %4090 = vmatprep.subr.mxu0 0.0
    %4091 = vmatpush1.msra.mxu0 0.0
    %4092 = vmatprep.subr.mxu0 0.0
    %4093 = vmatpush1.msra.mxu0 0.0
    %4094 = vmatprep.subr.mxu0 0.0
    %4095 = vmatpush1.msra.mxu0 0.0
    %4096 = vmatprep.subr.mxu0 0.0
    %4097 = vmatpush1.msra.mxu0 0.0
    %4098 = vmatprep.subr.mxu0 0.0
    %4099 = vmatpush1.msra.mxu0 0.0
    %4100 = vmatprep.subr.mxu0 0.0
    %4101 = vmatpush1.msra.mxu0 0.0
    %4102 = vmatprep.subr.mxu0 0.0
    %4103 = vmatpush1.msra.mxu0 0.0
    %4104 = vmatprep.subr.mxu0 0.0
    %4105 = vmatpush1.msra.mxu0 0.0
    %4106 = vmatprep.subr.mxu0 0.0
    %4107 = vmatpush1.msra.mxu0 0.0
    %4108 = vmatprep.subr.mxu0 0.0
    %4109 = vmatpush1.msra.mxu0 0.0
    %4110 = vmatprep.subr.mxu0 0.0
    %4111 = vmatpush1.msra.mxu0 0.0
    %4112 = vmatprep.subr.mxu0 0.0
    %4113 = vmatpush1.msra.mxu0 0.0
    %4114 = vmatprep.subr.mxu0 0.0
    %4115 = vmatpush1.msra.mxu0 0.0
    %4116 = vmatprep.subr.mxu0 0.0
    %4117 = vmatpush1.msra.mxu0 0.0
    %4118 = vmatprep.subr.mxu0 0.0
    %4119 = vmatpush1.msra.mxu0 0.0
    %4120 = vmatprep.mubr.f32.mxu0 0.0
    %v4121 = vand.u32 %v3844, 4294901760
    %v4122 = vsub.f32 %v3844, %v4121
    %4123 = vmatmul.mubr.f32.gmra.mrb[0].mxu0 %v4122
    %v4124 = vpop.f32.mrb[0].mxu0
    %v4125 = vadd.f32 %v4037, %v4124
    %v4126 = vpop.f32.mrb[0].mxu0
    %4127 = vdwg.mxu0
    %4128 = vmatprep.subr.mxu0 0.0
    %v4129 = vand.u32 %v3830, 4294901760
    %4130 = vmatpush1.msra.mxu0 %v4129
    %4131 = vmatprep.subr.mxu0 0.0
    %v4132 = vand.u32 %v3831, 4294901760
    %4133 = vmatpush1.msra.mxu0 %v4132
    %4134 = vmatprep.subr.mxu0 0.0
    %v4135 = vand.u32 %v3832, 4294901760
    %4136 = vmatpush1.msra.mxu0 %v4135
    %4137 = vmatprep.subr.mxu0 0.0
    %v4138 = vand.u32 %v3833, 4294901760
    %4139 = vmatpush1.msra.mxu0 %v4138
    %4140 = vmatprep.subr.mxu0 0.0
    %v4141 = vand.u32 %v3834, 4294901760
    %4142 = vmatpush1.msra.mxu0 %v4141
    %4143 = vmatprep.subr.mxu0 0.0
    %v4144 = vand.u32 %v3835, 4294901760
    %4145 = vmatpush1.msra.mxu0 %v4144
    %4146 = vmatprep.subr.mxu0 0.0
    %v4147 = vand.u32 %v3836, 4294901760
    %4148 = vmatpush1.msra.mxu0 %v4147
    %4149 = vmatprep.subr.mxu0 0.0
    %v4150 = vand.u32 %v3837, 4294901760
    %4151 = vmatpush1.msra.mxu0 %v4150
    %4152 = vmatprep.subr.mxu0 0.0
    %4153 = vmatpush1.msra.mxu0 0.0
    %4154 = vmatprep.subr.mxu0 0.0
    %4155 = vmatpush1.msra.mxu0 0.0
    %4156 = vmatprep.subr.mxu0 0.0
    %4157 = vmatpush1.msra.mxu0 0.0
    %4158 = vmatprep.subr.mxu0 0.0
    %4159 = vmatpush1.msra.mxu0 0.0
    %4160 = vmatprep.subr.mxu0 0.0
    %4161 = vmatpush1.msra.mxu0 0.0
    %4162 = vmatprep.subr.mxu0 0.0
    %4163 = vmatpush1.msra.mxu0 0.0
    %4164 = vmatprep.subr.mxu0 0.0
    %4165 = vmatpush1.msra.mxu0 0.0
    %4166 = vmatprep.subr.mxu0 0.0
    %4167 = vmatpush1.msra.mxu0 0.0
    %4168 = vmatprep.subr.mxu0 0.0
    %4169 = vmatpush1.msra.mxu0 0.0
    %4170 = vmatprep.subr.mxu0 0.0
    %4171 = vmatpush1.msra.mxu0 0.0
    %4172 = vmatprep.subr.mxu0 0.0
    %4173 = vmatpush1.msra.mxu0 0.0
    %4174 = vmatprep.subr.mxu0 0.0
    %4175 = vmatpush1.msra.mxu0 0.0
    %4176 = vmatprep.subr.mxu0 0.0
    %4177 = vmatpush1.msra.mxu0 0.0
    %4178 = vmatprep.subr.mxu0 0.0
    %4179 = vmatpush1.msra.mxu0 0.0
    %4180 = vmatprep.subr.mxu0 0.0
    %4181 = vmatpush1.msra.mxu0 0.0
    %4182 = vmatprep.subr.mxu0 0.0
    %4183 = vmatpush1.msra.mxu0 0.0
    %4184 = vmatprep.subr.mxu0 0.0
    %4185 = vmatpush1.msra.mxu0 0.0
    %4186 = vmatprep.subr.mxu0 0.0
    %4187 = vmatpush1.msra.mxu0 0.0
    %4188 = vmatprep.subr.mxu0 0.0
    %4189 = vmatpush1.msra.mxu0 0.0
    %4190 = vmatprep.subr.mxu0 0.0
    %4191 = vmatpush1.msra.mxu0 0.0
    %4192 = vmatprep.subr.mxu0 0.0
    %4193 = vmatpush1.msra.mxu0 0.0
    %4194 = vmatprep.subr.mxu0 0.0
    %4195 = vmatpush1.msra.mxu0 0.0
    %4196 = vmatprep.subr.mxu0 0.0
    %4197 = vmatpush1.msra.mxu0 0.0
    %4198 = vmatprep.subr.mxu0 0.0
    %4199 = vmatpush1.msra.mxu0 0.0
    %4200 = vmatprep.mubr.f32.mxu0 0.0
    %v4201 = vand.u32 %v3844, 4294901760
    %v4202 = vsub.f32 %v3844, %v4201
    %v4203 = vand.u32 %v4202, 4294901760
    %4204 = vmatmul.mubr.f32.gmra.mrb[0].mxu0 %v4203
    %v4205 = vpop.f32.mrb[0].mxu0
    %v4206 = vadd.f32 %v4125, %v4205
    %v4207 = vpop.f32.mrb[0].mxu0
    %4208 = vdwg.mxu0
    %4209 = vmatprep.subr.mxu0 0.0
    %v4210 = vand.u32 %v3830, 4294901760
    %v4211 = vsub.f32 %v3830, %v4210
    %v4212 = vand.u32 %v4211, 4294901760
    %4213 = vmatpush1.msra.mxu0 %v4212
    %4214 = vmatprep.subr.mxu0 0.0
    %v4215 = vand.u32 %v3831, 4294901760
    %v4216 = vsub.f32 %v3831, %v4215
    %v4217 = vand.u32 %v4216, 4294901760
    %4218 = vmatpush1.msra.mxu0 %v4217
    %4219 = vmatprep.subr.mxu0 0.0
    %v4220 = vand.u32 %v3832, 4294901760
    %v4221 = vsub.f32 %v3832, %v4220
    %v4222 = vand.u32 %v4221, 4294901760
    %4223 = vmatpush1.msra.mxu0 %v4222
    %4224 = vmatprep.subr.mxu0 0.0
    %v4225 = vand.u32 %v3833, 4294901760
    %v4226 = vsub.f32 %v3833, %v4225
    %v4227 = vand.u32 %v4226, 4294901760
    %4228 = vmatpush1.msra.mxu0 %v4227
    %4229 = vmatprep.subr.mxu0 0.0
    %v4230 = vand.u32 %v3834, 4294901760
    %v4231 = vsub.f32 %v3834, %v4230
    %v4232 = vand.u32 %v4231, 4294901760
    %4233 = vmatpush1.msra.mxu0 %v4232
    %4234 = vmatprep.subr.mxu0 0.0
    %v4235 = vand.u32 %v3835, 4294901760
    %v4236 = vsub.f32 %v3835, %v4235
    %v4237 = vand.u32 %v4236, 4294901760
    %4238 = vmatpush1.msra.mxu0 %v4237
    %4239 = vmatprep.subr.mxu0 0.0
    %v4240 = vand.u32 %v3836, 4294901760
    %v4241 = vsub.f32 %v3836, %v4240
    %v4242 = vand.u32 %v4241, 4294901760
    %4243 = vmatpush1.msra.mxu0 %v4242
    %4244 = vmatprep.subr.mxu0 0.0
    %v4245 = vand.u32 %v3837, 4294901760
    %v4246 = vsub.f32 %v3837, %v4245
    %v4247 = vand.u32 %v4246, 4294901760
    %4248 = vmatpush1.msra.mxu0 %v4247
    %4249 = vmatprep.subr.mxu0 0.0
    %4250 = vmatpush1.msra.mxu0 0.0
    %4251 = vmatprep.subr.mxu0 0.0
    %4252 = vmatpush1.msra.mxu0 0.0
    %4253 = vmatprep.subr.mxu0 0.0
    %4254 = vmatpush1.msra.mxu0 0.0
    %4255 = vmatprep.subr.mxu0 0.0
    %4256 = vmatpush1.msra.mxu0 0.0
    %4257 = vmatprep.subr.mxu0 0.0
    %4258 = vmatpush1.msra.mxu0 0.0
    %4259 = vmatprep.subr.mxu0 0.0
    %4260 = vmatpush1.msra.mxu0 0.0
    %4261 = vmatprep.subr.mxu0 0.0
    %4262 = vmatpush1.msra.mxu0 0.0
    %4263 = vmatprep.subr.mxu0 0.0
    %4264 = vmatpush1.msra.mxu0 0.0
    %4265 = vmatprep.subr.mxu0 0.0
    %4266 = vmatpush1.msra.mxu0 0.0
    %4267 = vmatprep.subr.mxu0 0.0
    %4268 = vmatpush1.msra.mxu0 0.0
    %4269 = vmatprep.subr.mxu0 0.0
    %4270 = vmatpush1.msra.mxu0 0.0
    %4271 = vmatprep.subr.mxu0 0.0
    %4272 = vmatpush1.msra.mxu0 0.0
    %4273 = vmatprep.subr.mxu0 0.0
    %4274 = vmatpush1.msra.mxu0 0.0
    %4275 = vmatprep.subr.mxu0 0.0
    %4276 = vmatpush1.msra.mxu0 0.0
    %4277 = vmatprep.subr.mxu0 0.0
    %4278 = vmatpush1.msra.mxu0 0.0
    %4279 = vmatprep.subr.mxu0 0.0
    %4280 = vmatpush1.msra.mxu0 0.0
    %4281 = vmatprep.subr.mxu0 0.0
    %4282 = vmatpush1.msra.mxu0 0.0
    %4283 = vmatprep.subr.mxu0 0.0
    %4284 = vmatpush1.msra.mxu0 0.0
    %4285 = vmatprep.subr.mxu0 0.0
    %4286 = vmatpush1.msra.mxu0 0.0
    %4287 = vmatprep.subr.mxu0 0.0
    %4288 = vmatpush1.msra.mxu0 0.0
    %4289 = vmatprep.subr.mxu0 0.0
    %4290 = vmatpush1.msra.mxu0 0.0
    %4291 = vmatprep.subr.mxu0 0.0
    %4292 = vmatpush1.msra.mxu0 0.0
    %4293 = vmatprep.subr.mxu0 0.0
    %4294 = vmatpush1.msra.mxu0 0.0
    %4295 = vmatprep.subr.mxu0 0.0
    %4296 = vmatpush1.msra.mxu0 0.0
    %4297 = vmatprep.mubr.f32.mxu0 0.0
    %v4298 = vand.u32 %v3844, 4294901760
    %4299 = vmatmul.mubr.f32.gmra.mrb[0].mxu0 %v4298
    %v4300 = vpop.f32.mrb[0].mxu0
    %v4301 = vadd.f32 %v4206, %v4300
    %v4302 = vpop.f32.mrb[0].mxu0
    %4303 = vdwg.mxu0
    %4304 = vmatprep.subr.mxu0 0.0
    %v4305 = vand.u32 %v3830, 4294901760
    %4306 = vmatpush1.msra.mxu0 %v4305
    %4307 = vmatprep.subr.mxu0 0.0
    %v4308 = vand.u32 %v3831, 4294901760
    %4309 = vmatpush1.msra.mxu0 %v4308
    %4310 = vmatprep.subr.mxu0 0.0
    %v4311 = vand.u32 %v3832, 4294901760
    %4312 = vmatpush1.msra.mxu0 %v4311
    %4313 = vmatprep.subr.mxu0 0.0
    %v4314 = vand.u32 %v3833, 4294901760
    %4315 = vmatpush1.msra.mxu0 %v4314
    %4316 = vmatprep.subr.mxu0 0.0
    %v4317 = vand.u32 %v3834, 4294901760
    %4318 = vmatpush1.msra.mxu0 %v4317
    %4319 = vmatprep.subr.mxu0 0.0
    %v4320 = vand.u32 %v3835, 4294901760
    %4321 = vmatpush1.msra.mxu0 %v4320
    %4322 = vmatprep.subr.mxu0 0.0
    %v4323 = vand.u32 %v3836, 4294901760
    %4324 = vmatpush1.msra.mxu0 %v4323
    %4325 = vmatprep.subr.mxu0 0.0
    %v4326 = vand.u32 %v3837, 4294901760
    %4327 = vmatpush1.msra.mxu0 %v4326
    %4328 = vmatprep.subr.mxu0 0.0
    %4329 = vmatpush1.msra.mxu0 0.0
    %4330 = vmatprep.subr.mxu0 0.0
    %4331 = vmatpush1.msra.mxu0 0.0
    %4332 = vmatprep.subr.mxu0 0.0
    %4333 = vmatpush1.msra.mxu0 0.0
    %4334 = vmatprep.subr.mxu0 0.0
    %4335 = vmatpush1.msra.mxu0 0.0
    %4336 = vmatprep.subr.mxu0 0.0
    %4337 = vmatpush1.msra.mxu0 0.0
    %4338 = vmatprep.subr.mxu0 0.0
    %4339 = vmatpush1.msra.mxu0 0.0
    %4340 = vmatprep.subr.mxu0 0.0
    %4341 = vmatpush1.msra.mxu0 0.0
    %4342 = vmatprep.subr.mxu0 0.0
    %4343 = vmatpush1.msra.mxu0 0.0
    %4344 = vmatprep.subr.mxu0 0.0
    %4345 = vmatpush1.msra.mxu0 0.0
    %4346 = vmatprep.subr.mxu0 0.0
    %4347 = vmatpush1.msra.mxu0 0.0
    %4348 = vmatprep.subr.mxu0 0.0
    %4349 = vmatpush1.msra.mxu0 0.0
    %4350 = vmatprep.subr.mxu0 0.0
    %4351 = vmatpush1.msra.mxu0 0.0
    %4352 = vmatprep.subr.mxu0 0.0
    %4353 = vmatpush1.msra.mxu0 0.0
    %4354 = vmatprep.subr.mxu0 0.0
    %4355 = vmatpush1.msra.mxu0 0.0
    %4356 = vmatprep.subr.mxu0 0.0
    %4357 = vmatpush1.msra.mxu0 0.0
    %4358 = vmatprep.subr.mxu0 0.0
    %4359 = vmatpush1.msra.mxu0 0.0
    %4360 = vmatprep.subr.mxu0 0.0
    %4361 = vmatpush1.msra.mxu0 0.0
    %4362 = vmatprep.subr.mxu0 0.0
    %4363 = vmatpush1.msra.mxu0 0.0
    %4364 = vmatprep.subr.mxu0 0.0
    %4365 = vmatpush1.msra.mxu0 0.0
    %4366 = vmatprep.subr.mxu0 0.0
    %4367 = vmatpush1.msra.mxu0 0.0
    %4368 = vmatprep.subr.mxu0 0.0
    %4369 = vmatpush1.msra.mxu0 0.0
    %4370 = vmatprep.subr.mxu0 0.0
    %4371 = vmatpush1.msra.mxu0 0.0
    %4372 = vmatprep.subr.mxu0 0.0
    %4373 = vmatpush1.msra.mxu0 0.0
    %4374 = vmatprep.subr.mxu0 0.0
    %4375 = vmatpush1.msra.mxu0 0.0
    %4376 = vmatprep.mubr.f32.mxu0 0.0
    %v4377 = vand.u32 %v3844, 4294901760
    %4378 = vmatmul.mubr.f32.gmra.mrb[0].mxu0 %v4377
    %v4379 = vpop.f32.mrb[0].mxu0
    %v4380 = vadd.f32 %v4301, %v4379
    %v4381 = vpop.f32.mrb[0].mxu0
    %4382 = vdwg.mxu0
    %v4383 = vmul.f32 %v4380, 1.0545718e-34
    %v4384 = vmul.f32 %v37, 2.9979245e+08
    %v4385 = vlaneseq
    %v4386 = vshrl.u32 %v4385, 7
    %v4387 = vsub.s32 0, %v4386
    %v4388 = vrot.slane %v4384, %v4387
    %v4389 = vmul.f32 %v4383, %v4388
    %v4390 = vlaneseq
    %v4391 = vshrl.u32 %v4390, 7
    %v4392 = vsub.s32 0, %v4391
    %v4393 = vrot.slane %v4389, %v4392
    %4395 = vbcast.lane.b32.xlu0 %v4393, 256
    %v4396 = vpop.permute.xlu0 %4395
    %s4398 = sor.u32 256, 8
    %4399 = vbcast.lane.b32.xlu0 %v4393, %s4398
    %v4400 = vpop.permute.xlu0 %4399
    %s4402 = sor.u32 256, 16
    %4403 = vbcast.lane.b32.xlu0 %v4393, %s4402
    %v4404 = vpop.permute.xlu0 %4403
    %s4406 = sor.u32 256, 24
    %4407 = vbcast.lane.b32.xlu0 %v4393, %s4406
    %v4408 = vpop.permute.xlu0 %4407
    %v4409 = vlaneseq
    %v4410 = vshrl.u32 %v4409, 7
    %v4411 = vsub.s32 1, %v4410
    %v4412 = vrot.slane %v4389, %v4411
    %4414 = vbcast.lane.b32.xlu0 %v4412, 256
    %v4415 = vpop.permute.xlu0 %4414
    %s4417 = sor.u32 256, 8
    %4418 = vbcast.lane.b32.xlu0 %v4412, %s4417
    %v4419 = vpop.permute.xlu0 %4418
    %s4421 = sor.u32 256, 16
    %4422 = vbcast.lane.b32.xlu0 %v4412, %s4421
    %v4423 = vpop.permute.xlu0 %4422
    %s4425 = sor.u32 256, 24
    %4426 = vbcast.lane.b32.xlu0 %v4412, %s4425
    %v4427 = vpop.permute.xlu0 %4426
    %v4428 = vadd.f32 %v3211, %v4396
    %v4429 = vadd.f32 %v3212, %v4400
    %v4430 = vadd.f32 %v3213, %v4404
    %v4431 = vadd.f32 %v3214, %v4408
    %v4432 = vadd.f32 %v3215, %v4415
    %v4433 = vadd.f32 %v3216, %v4419
    %v4434 = vadd.f32 %v3217, %v4423
    %v4435 = vadd.f32 %v3218, %v4427
    %4436 = vst.msk [vmem:[#allocation2] sm:$0xff] %vm724, %v4428
    %4437 = vst.msk [vmem:[#allocation2 + $0x8] sm:$0xff] %vm724, %v4429
    %4438 = vst.msk [vmem:[#allocation2 + $0x10] sm:$0xff] %vm724, %v4430
    %4439 = vst.msk [vmem:[#allocation2 + $0x18] sm:$0xff] %vm724, %v4431
    %4440 = vst.msk [vmem:[#allocation2 + $0x20] sm:$0xff] %vm724, %v4432
    %4441 = vst.msk [vmem:[#allocation2 + $0x28] sm:$0xff] %vm724, %v4433
    %4442 = vst.msk [vmem:[#allocation2 + $0x30] sm:$0xff] %vm724, %v4434
    %4443 = vst.msk [vmem:[#allocation2 + $0x38] sm:$0xff] %vm724, %v4435
    // Predicated region
    $region38: #{spacetime_curvature_forward.1} parent=1 // pred_check
      _
    $region39: #{spacetime_curvature_forward.1} parent=1 // pred_check_branch
      %4445 = sbr.rel (0) target = $region41
    $region40: #{spacetime_curvature_forward.1} parent=1 // pred_region
      %s4447 = ssub.s32 1024, 1024
      %4448 = vsyncadd [#allocation3], %s4447
      %s4449 = sshll.u32 [#allocation2], 4
      %s4450 = int_to_ptr.vmem [resolvable:$true] %s4449
      %4455 = dma.vmem_to_hbm [thread:$0]  %s4450, 1024, %s9, [#allocation3], 128, 128, 8
    $region41: #{spacetime_curvature_forward.1} parent=1 // pred_fallthru
      _
    // Predicated region
    $region42: #{spacetime_curvature_forward.1} parent=1 // pred_check
      _
    $region43: #{spacetime_curvature_forward.1} parent=1 // pred_check_branch
      %4457 = sbr.rel (0) target = $region45
    $region44: #{spacetime_curvature_forward.1} parent=1 // pred_region
      %4458 = dma.done [#allocation3], 1024
    $region45: #{spacetime_curvature_forward.1} parent=1 // pred_fallthru
      _
    %4459 = vsyncpa [#allocation3], 1

</llo_original>
